<compile_context>
chip_gen: v6e
topology: v6e:2x2x1
jax: 0.10.0
libtpu: 0.0.40
codegen_flags: <defaults>
</compile_context>

<pallas_src>
import math

import jax
import jax.numpy as jnp
from jax.experimental import pallas as pl
from jax.experimental.pallas import tpu as pltpu

# ---- scaled-down DistilBERT config (real model: 768 / 12 heads / 6 layers) ----
VOCAB = 128
MAX_POS = 32
HIDDEN = 128                 # lane-dense toy hidden size (real: 768 = 6*128)
HEADS = 4                    # real: 12
DHEAD = HIDDEN // HEADS
FFN = 4 * HIDDEN             # real: 3072
LAYERS = 2                   # real: 6
NUM_CLASSES = 5
EPS = 1e-12
NEG_BIAS = -1e9              # additive mask bias (0 keep / -1e9 pad)


# ------------------------------ kernel helpers ------------------------------

def _ln(x, g, b):
    # Single-pass LayerNorm: var = E[x^2] - mu^2 (independent reductions).
    mu = jnp.mean(x, axis=-1, keepdims=True)
    ms = jnp.mean(x * x, axis=-1, keepdims=True)
    var = ms - mu * mu
    return (x - mu) * jax.lax.rsqrt(var + EPS) * g + b


# ------------------------------ fused encoder kernel ------------------------------

def _encoder_kernel(we_ref, pe_ref, eg_ref, eb_ref, bias_ref,
                    qkvw_ref, qkvb_ref, ow_ref, ob_ref,
                    l1g_ref, l1b_ref, f1w_ref, f1b_ref,
                    f2w_ref, f2b_ref, l2g_ref, l2b_ref,
                    cls_ref, h_ref):
    """Grid axis 0 = transformer layer (sequential / 'arbitrary').

    h_ref:   (rows, D) f32 VMEM scratch, persistent across grid steps.
    cls_ref: (LAYERS+1, 2B, D) resident output block (constant index_map).
    """
    l = pl.program_id(0)
    b2, s = bias_ref.shape
    rows, d = h_ref.shape

    # --- grid step 0: embedding add + LayerNorm, CLS of the embedding state ---
    @pl.when(l == 0)
    def _():
        x0 = we_ref[...].reshape(b2, s, d) + pe_ref[...][None, :, :]
        h0 = _ln(x0.reshape(rows, d), eg_ref[...], eb_ref[...])
        h_ref[...] = h0
        cls_ref[pl.ds(0, 1), :, :] = h0.reshape(b2, s, d)[:, 0, :][None, :, :]

    # --- transformer layer l (weights for this l were DMA'd by the pipeline) ---
    x = h_ref[...]                                        # (rows, D) f32
    xb = x.astype(jnp.bfloat16)

    # Fused QKV projection: one lane-dense (D, 3D) MXU matmul, f32 accumulate.
    qkv = jnp.dot(xb, qkvw_ref[0],
                  preferred_element_type=jnp.float32) + qkvb_ref[0]
    qkv3 = qkv.reshape(b2, s, 3 * d).astype(jnp.bfloat16)
    bias = bias_ref[...][:, None, :]                      # (B, 1, S) additive

    wo = ow_ref[0]                                        # (D, D) bf16
    scale = 1.0 / math.sqrt(DHEAD)
    attn = jnp.zeros((rows, d), jnp.float32)
    for hd in range(HEADS):                               # static unroll, H=4
        q = qkv3[:, :, hd * DHEAD:(hd + 1) * DHEAD]
        k = qkv3[:, :, d + hd * DHEAD:d + (hd + 1) * DHEAD]
        v = qkv3[:, :, 2 * d + hd * DHEAD:2 * d + (hd + 1) * DHEAD]
        sc = jnp.einsum('bqd,bkd->bqk', q, k,
                        preferred_element_type=jnp.float32)
        sc = sc * scale + bias
        sc = sc - jnp.max(sc, axis=-1, keepdims=True)
        p = jnp.exp(sc)
        p = p * pl.reciprocal(jnp.sum(p, axis=-1, keepdims=True), approx=True)
        ctx = jnp.einsum('bqk,bkd->bqd', p.astype(jnp.bfloat16), v,
                         preferred_element_type=jnp.float32)
        # Distribute the output projection over heads: ctx_h @ Wo[h-slice],
        # accumulated in f32 -- no lane-dim concatenate of head contexts.
        attn = attn + jnp.dot(
            ctx.reshape(rows, DHEAD).astype(jnp.bfloat16),
            wo[hd * DHEAD:(hd + 1) * DHEAD, :],
            preferred_element_type=jnp.float32)
    attn = attn + ob_ref[0]

    # Residual + LN1 (fused, hidden slab never leaves VMEM).
    h1 = _ln(x + attn, l1g_ref[0], l1b_ref[0])

    # FFN + residual + LN2.
    ff = jnp.dot(h1.astype(jnp.bfloat16), f1w_ref[0],
                 preferred_element_type=jnp.float32) + f1b_ref[0]
    # TODO(synk): HF DistilBERT uses exact erf GELU; tanh approximation here.
    ff = jax.nn.gelu(ff, approximate=True)
    ff = jnp.dot(ff.astype(jnp.bfloat16), f2w_ref[0],
                 preferred_element_type=jnp.float32) + f2b_ref[0]
    h2 = _ln(h1 + ff, l2g_ref[0], l2b_ref[0])

    h_ref[...] = h2
    cls_ref[pl.ds(l + 1, 1), :, :] = h2.reshape(b2, s, d)[:, 0, :][None, :, :]


# ------------------------------ kernel wrapper ------------------------------

def fused_encoder(we2d, pe, bias, params):
    """Runs embeddings-LN + all transformer layers in one pallas_call.

    Returns (LAYERS+1, 2B, D) f32: CLS vector of every hidden state.
    """
    rows, d = we2d.shape
    b2, s = bias.shape
    L = LAYERS

    c2 = lambda l: (0, 0)          # constant blocks (loaded once, stay resident)
    c3 = lambda l: (0, 0, 0)
    pw = lambda l: (l, 0, 0)       # per-layer weight blocks (pipelined over l)

    in_specs = [
        pl.BlockSpec((rows, d), c2),           # gathered word embeddings
        pl.BlockSpec((s, d), c2),              # position embeddings
        pl.BlockSpec((1, d), c2),              # emb LN gamma
        pl.BlockSpec((1, d), c2),              # emb LN beta
        pl.BlockSpec((b2, s), c2),             # additive attention bias
        pl.BlockSpec((1, d, 3 * d), pw),       # qkv_w
        pl.BlockSpec((1, 1, 3 * d), pw),       # qkv_b
        pl.BlockSpec((1, d, d), pw),           # o_w
        pl.BlockSpec((1, 1, d), pw),           # o_b
        pl.BlockSpec((1, 1, d), pw),           # ln1_g
        pl.BlockSpec((1, 1, d), pw),           # ln1_b
        pl.BlockSpec((1, d, FFN), pw),         # ff1_w
        pl.BlockSpec((1, 1, FFN), pw),         # ff1_b
        pl.BlockSpec((1, FFN, d), pw),         # ff2_w
        pl.BlockSpec((1, 1, d), pw),           # ff2_b
        pl.BlockSpec((1, 1, d), pw),           # ln2_g
        pl.BlockSpec((1, 1, d), pw),           # ln2_b
    ]
    out_specs = pl.BlockSpec((L + 1, b2, d), c3)   # resident across all layers

    # Advisory cost estimate for XLA scheduling around the custom call.
    flops_layer = (2 * rows * d * 3 * d                      # QKV proj
                   + 2 * b2 * HEADS * s * s * DHEAD * 2      # QK^T + PV
                   + 2 * rows * d * d                        # output proj
                   + 2 * rows * d * FFN * 2)                 # FFN
    flops = L * flops_layer + 8 * rows * d
    transcendentals = L * (b2 * HEADS * s * s + rows * FFN) + rows * d
    w_bytes_layer = ((3 * d * d + d * d + 2 * d * FFN) * 2   # bf16 weights
                     + (3 * d + d + FFN + d + 4 * d) * 4)    # f32 biases/LN
    bytes_accessed = (L * w_bytes_layer
                      + (rows * d + s * d + 2 * d + b2 * s) * 4
                      + (L + 1) * b2 * d * 4)

    return pl.pallas_call(
        _encoder_kernel,
        out_shape=jax.ShapeDtypeStruct((L + 1, b2, d), jnp.float32),
        grid_spec=pltpu.PrefetchScalarGridSpec(
            num_scalar_prefetch=0,
            grid=(L,),
            in_specs=in_specs,
            out_specs=out_specs,
            scratch_shapes=[pltpu.VMEM((rows, d), jnp.float32)],
        ),
        compiler_params=pltpu.CompilerParams(
            dimension_semantics=("arbitrary",),      # layer axis is sequential
            vmem_limit_bytes=32 * 1024 * 1024,
        ),
        cost_estimate=pl.CostEstimate(
            flops=int(flops),
            transcendentals=int(transcendentals),
            bytes_accessed=int(bytes_accessed),
        ),
    )(we2d, pe, params['emb_ln_g'], params['emb_ln_b'], bias,
      params['qkv_w'], params['qkv_b'], params['o_w'], params['o_b'],
      params['ln1_g'], params['ln1_b'], params['ff1_w'], params['ff1_b'],
      params['ff2_w'], params['ff2_b'], params['ln2_g'], params['ln2_b'])


# ------------------------------ model (JAX glue) ------------------------------

def distilbert_cls_states(ids, mask, params):
    """Returns (LAYERS+1, rows_batch, D): CLS of every hidden state."""
    b2, s = ids.shape
    # TODO(synk): at 30522x768 vocab, move this gather into the Pallas pipeline
    # (PrefetchScalarGridSpec scalar-prefetched ids + pl.Element / DMA gather).
    we = jnp.take(params['word_emb'], ids.reshape(-1), axis=0)   # (b2*s, D)
    pe = params['pos_emb'][:s]
    # Additive attention bias, built once per forward: 0 keep / -1e9 pad.
    bias = jnp.where(mask > 0, 0.0, NEG_BIAS).astype(jnp.float32)
    return fused_encoder(we, pe, bias, params)


def forward(params, title_ids, title_mask, body_ids, body_mask):
    b = title_ids.shape[0]
    # Batch title + body into a single encoder pass (2B rows).
    ids = jnp.concatenate([title_ids, body_ids], axis=0)
    mask = jnp.concatenate([title_mask, body_mask], axis=0)
    cls = distilbert_cls_states(ids, mask, params)       # (L+1, 2B, D)
    cls_mean = jnp.mean(cls, axis=0)                     # (2B, D)
    t_cls, b_cls = cls_mean[:b], cls_mean[b:]
    full = jnp.concatenate([t_cls, b_cls], axis=1)       # (B, 2D)
    # torch.nn.Dropout is identity at inference; N=5 head stays in XLA.
    logits = full @ params['feed_w'] + params['feed_b']
    return logits


# ------------------------------ parameter init ------------------------------

def init_params(key):
    keys = iter(jax.random.split(key, 40))

    def nrm(shape, dtype=jnp.float32, scale=0.02):
        return (scale * jax.random.normal(next(keys), shape, jnp.float32)
                ).astype(dtype)

    L, D = LAYERS, HIDDEN
    return {
        'word_emb': nrm((VOCAB, D)),
        'pos_emb': nrm((MAX_POS, D)),
        'emb_ln_g': jnp.ones((1, D), jnp.float32),
        'emb_ln_b': jnp.zeros((1, D), jnp.float32),
        # Per-layer weights stacked with leading L dim; MXU weights in bf16,
        # QKV columns laid out as [Q | K | V].
        'qkv_w': nrm((L, D, 3 * D), jnp.bfloat16),
        'qkv_b': jnp.zeros((L, 1, 3 * D), jnp.float32),
        'o_w': nrm((L, D, D), jnp.bfloat16),
        'o_b': jnp.zeros((L, 1, D), jnp.float32),
        'ln1_g': jnp.ones((L, 1, D), jnp.float32),
        'ln1_b': jnp.zeros((L, 1, D), jnp.float32),
        'ff1_w': nrm((L, D, FFN), jnp.bfloat16),
        'ff1_b': jnp.zeros((L, 1, FFN), jnp.float32),
        'ff2_w': nrm((L, FFN, D), jnp.bfloat16),
        'ff2_b': jnp.zeros((L, 1, D), jnp.float32),
        'ln2_g': jnp.ones((L, 1, D), jnp.float32),
        'ln2_b': jnp.zeros((L, 1, D), jnp.float32),
        'feed_w': nrm((2 * D, NUM_CLASSES)),
        'feed_b': jnp.zeros((NUM_CLASSES,), jnp.float32),
    }


# ------------------------------ main ------------------------------

if __name__ == "__main__":
    key = jax.random.PRNGKey(0)
    pkey, ikey = jax.random.split(key)
    params = init_params(pkey)

    B, S = 2, 8
    k1, k2 = jax.random.split(ikey)
    title_ids = jax.random.randint(k1, (B, S), 0, VOCAB, dtype=jnp.int32)
    body_ids = jax.random.randint(k2, (B, S), 0, VOCAB, dtype=jnp.int32)
    title_mask = jnp.ones((B, S), jnp.int32).at[:, 6:].set(0)  # last 2 tokens padded
    body_mask = jnp.ones((B, S), jnp.int32)

    logits = jax.jit(forward)(params, title_ids, title_mask, body_ids, body_mask)
    jax.block_until_ready(logits)
    assert logits.shape == (B, NUM_CLASSES)
    assert bool(jnp.all(jnp.isfinite(logits)))
    print("KERNEL_OK")
</pallas_src>

<mosaic_0001>
module attributes {stable_mosaic.version = 11 : i64} {
  func.func @_encoder_kernel(%arg0: i32, %arg1: memref<32x128xf32, #tpu.memory_space<vmem>>, %arg2: memref<8x128xf32, #tpu.memory_space<vmem>>, %arg3: memref<1x128xf32, #tpu.memory_space<vmem>>, %arg4: memref<1x128xf32, #tpu.memory_space<vmem>>, %arg5: memref<4x8xf32, #tpu.memory_space<vmem>>, %arg6: memref<1x128x384xbf16, #tpu.memory_space<vmem>>, %arg7: memref<1x1x384xf32, #tpu.memory_space<vmem>>, %arg8: memref<1x128x128xbf16, #tpu.memory_space<vmem>>, %arg9: memref<1x1x128xf32, #tpu.memory_space<vmem>>, %arg10: memref<1x1x128xf32, #tpu.memory_space<vmem>>, %arg11: memref<1x1x128xf32, #tpu.memory_space<vmem>>, %arg12: memref<1x128x512xbf16, #tpu.memory_space<vmem>>, %arg13: memref<1x1x512xf32, #tpu.memory_space<vmem>>, %arg14: memref<1x512x128xbf16, #tpu.memory_space<vmem>>, %arg15: memref<1x1x128xf32, #tpu.memory_space<vmem>>, %arg16: memref<1x1x128xf32, #tpu.memory_space<vmem>>, %arg17: memref<1x1x128xf32, #tpu.memory_space<vmem>>, %arg18: memref<3x4x128xf32, #tpu.memory_space<vmem>>, %arg19: memref<32x128xf32, #tpu.memory_space<vmem>>) attributes {dimension_semantics = [#tpu.dimension_semantics<arbitrary>], iteration_bounds = array<i64: 2>, scalar_prefetch = 0 : i64, scratch_operands = 1 : i64, tpu.core_type = #tpu.core_type<tc>, window_params = [{pipeline_mode = #tpu.pipeline_mode<synchronous>, transform_indices = @transform_0, window_bounds = array<i64: 32, 128>}, {pipeline_mode = #tpu.pipeline_mode<synchronous>, transform_indices = @transform_1, window_bounds = array<i64: 8, 128>}, {pipeline_mode = #tpu.pipeline_mode<synchronous>, transform_indices = @transform_2, window_bounds = array<i64: 1, 128>}, {pipeline_mode = #tpu.pipeline_mode<synchronous>, transform_indices = @transform_3, window_bounds = array<i64: 1, 128>}, {pipeline_mode = #tpu.pipeline_mode<synchronous>, transform_indices = @transform_4, window_bounds = array<i64: 4, 8>}, {transform_indices = @transform_5, window_bounds = array<i64: 1, 128, 384>}, {transform_indices = @transform_6, window_bounds = array<i64: 1, 1, 384>}, {transform_indices = @transform_7, window_bounds = array<i64: 1, 128, 128>}, {transform_indices = @transform_8, window_bounds = array<i64: 1, 1, 128>}, {transform_indices = @transform_9, window_bounds = array<i64: 1, 1, 128>}, {transform_indices = @transform_10, window_bounds = array<i64: 1, 1, 128>}, {transform_indices = @transform_11, window_bounds = array<i64: 1, 128, 512>}, {transform_indices = @transform_12, window_bounds = array<i64: 1, 1, 512>}, {transform_indices = @transform_13, window_bounds = array<i64: 1, 512, 128>}, {transform_indices = @transform_14, window_bounds = array<i64: 1, 1, 128>}, {transform_indices = @transform_15, window_bounds = array<i64: 1, 1, 128>}, {transform_indices = @transform_16, window_bounds = array<i64: 1, 1, 128>}, {pipeline_mode = #tpu.pipeline_mode<synchronous>, transform_indices = @transform_17, window_bounds = array<i64: 3, 4, 128>}]} {
    %c0_i32 = arith.constant 0 : i32
    %0 = arith.cmpi eq, %arg0, %c0_i32 : i32
    %1 = arith.extui %0 : i1 to i32
    %c0_i32_0 = arith.constant 0 : i32
    %2 = arith.cmpi ne, %1, %c0_i32_0 : i32
    scf.if %2 {
      %c0_85 = arith.constant 0 : index
      %c0_86 = arith.constant 0 : index
      %214 = vector.load %arg1[%c0_85, %c0_86] : memref<32x128xf32, #tpu.memory_space<vmem>>, vector<32x128xf32>
      %215 = vector.shape_cast %214 : vector<32x128xf32> to vector<4x8x128xf32>
      %c0_87 = arith.constant 0 : index
      %c0_88 = arith.constant 0 : index
      %216 = vector.load %arg2[%c0_87, %c0_88] : memref<8x128xf32, #tpu.memory_space<vmem>>, vector<8x128xf32>
      %217 = vector.shape_cast %216 : vector<8x128xf32> to vector<1x8x128xf32>
      %218 = vector.broadcast %217 : vector<1x8x128xf32> to vector<4x8x128xf32>
      %219 = arith.addf %215, %218 : vector<4x8x128xf32>
      %220 = vector.shape_cast %219 : vector<4x8x128xf32> to vector<32x128xf32>
      %c0_89 = arith.constant 0 : index
      %c0_90 = arith.constant 0 : index
      %221 = vector.load %arg3[%c0_89, %c0_90] : memref<1x128xf32, #tpu.memory_space<vmem>>, vector<1x128xf32>
      %c0_91 = arith.constant 0 : index
      %c0_92 = arith.constant 0 : index
      %222 = vector.load %arg4[%c0_91, %c0_92] : memref<1x128xf32, #tpu.memory_space<vmem>>, vector<1x128xf32>
      %cst_93 = arith.constant dense<0.000000e+00> : vector<32xf32>
      %223 = vector.multi_reduction <add>, %220, %cst_93 [1] : vector<32x128xf32> to vector<32xf32>
      %224 = vector.shape_cast %223 : vector<32xf32> to vector<32x1xf32>
      %cst_94 = arith.constant 1.280000e+02 : f32
      %225 = vector.broadcast %cst_94 : f32 to vector<32x1xf32>
      %226 = arith.divf %224, %225 : vector<32x1xf32>
      %227 = arith.mulf %220, %220 : vector<32x128xf32>
      %cst_95 = arith.constant dense<0.000000e+00> : vector<32xf32>
      %228 = vector.multi_reduction <add>, %227, %cst_95 [1] : vector<32x128xf32> to vector<32xf32>
      %229 = vector.shape_cast %228 : vector<32xf32> to vector<32x1xf32>
      %cst_96 = arith.constant 1.280000e+02 : f32
      %230 = vector.broadcast %cst_96 : f32 to vector<32x1xf32>
      %231 = arith.divf %229, %230 : vector<32x1xf32>
      %232 = arith.mulf %226, %226 : vector<32x1xf32>
      %233 = arith.subf %231, %232 : vector<32x1xf32>
      %234 = vector.broadcast %226 : vector<32x1xf32> to vector<32x128xf32>
      %235 = arith.subf %220, %234 : vector<32x128xf32>
      %cst_97 = arith.constant 9.99999996E-13 : f32
      %236 = vector.broadcast %cst_97 : f32 to vector<32x1xf32>
      %237 = arith.addf %233, %236 : vector<32x1xf32>
      %238 = math.rsqrt %237 : vector<32x1xf32>
      %239 = vector.broadcast %238 : vector<32x1xf32> to vector<32x128xf32>
      %240 = arith.mulf %235, %239 : vector<32x128xf32>
      %241 = vector.broadcast %221 : vector<1x128xf32> to vector<32x128xf32>
      %242 = arith.mulf %240, %241 : vector<32x128xf32>
      %243 = vector.broadcast %222 : vector<1x128xf32> to vector<32x128xf32>
      %244 = arith.addf %242, %243 : vector<32x128xf32>
      %c0_98 = arith.constant 0 : index
      %c0_99 = arith.constant 0 : index
      %245 = vector.load %arg19[%c0_98, %c0_99] : memref<32x128xf32, #tpu.memory_space<vmem>>, vector<32x128xf32>
      tpu.vector_store %arg19[%c0_98, %c0_99], %244 {strides = array<i32>} : memref<32x128xf32, #tpu.memory_space<vmem>>, vector<32x128xf32>,
      %246 = vector.shape_cast %244 : vector<32x128xf32> to vector<4x8x128xf32>
      %247 = vector.extract_strided_slice %246 {offsets = [0, 0, 0], sizes = [4, 1, 128], strides = [1, 1, 1]} : vector<4x8x128xf32> to vector<4x1x128xf32>
      %248 = vector.shape_cast %247 : vector<4x1x128xf32> to vector<4x128xf32>
      %249 = vector.shape_cast %248 : vector<4x128xf32> to vector<1x4x128xf32>
      %c0_100 = arith.constant 0 : index
      %c0_101 = arith.constant 0 : index
      %c0_102 = arith.constant 0 : index
      %250 = vector.load %arg18[%c0_100, %c0_101, %c0_102] : memref<3x4x128xf32, #tpu.memory_space<vmem>>, vector<1x4x128xf32>
      tpu.vector_store %arg18[%c0_100, %c0_101, %c0_102], %249 {strides = array<i32>} : memref<3x4x128xf32, #tpu.memory_space<vmem>>, vector<1x4x128xf32>,
    } else {
    }
    %c0 = arith.constant 0 : index
    %c0_1 = arith.constant 0 : index
    %3 = vector.load %arg19[%c0, %c0_1] : memref<32x128xf32, #tpu.memory_space<vmem>>, vector<32x128xf32>
    %4 = arith.truncf %3 : vector<32x128xf32> to vector<32x128xbf16>
    %c0_2 = arith.constant 0 : index
    %c0_3 = arith.constant 0 : index
    %c0_4 = arith.constant 0 : index
    %5 = vector.load %arg6[%c0_2, %c0_3, %c0_4] : memref<1x128x384xbf16, #tpu.memory_space<vmem>>, vector<1x128x384xbf16>
    %6 = vector.shape_cast %5 : vector<1x128x384xbf16> to vector<128x384xbf16>
    %cst = arith.constant dense<0.000000e+00> : vector<32x384xf32>
    %7 = tpu.matmul %4, %6, %cst {dimension_numbers = #tpu.dot_dimension_numbers<[1], [0], [0], [1], [0, 0, 1, 1], [], []>} : vector<32x128xbf16>, vector<128x384xbf16>, vector<32x384xf32> -> vector<32x384xf32>
    %c0_5 = arith.constant 0 : index
    %c0_6 = arith.constant 0 : index
    %c0_7 = arith.constant 0 : index
    %8 = vector.load %arg7[%c0_5, %c0_6, %c0_7] : memref<1x1x384xf32, #tpu.memory_space<vmem>>, vector<1x1x384xf32>
    %9 = vector.shape_cast %8 : vector<1x1x384xf32> to vector<1x384xf32>
    %10 = vector.broadcast %9 : vector<1x384xf32> to vector<32x384xf32>
    %11 = arith.addf %7, %10 : vector<32x384xf32>
    %12 = vector.shape_cast %11 : vector<32x384xf32> to vector<4x8x384xf32>
    %13 = arith.truncf %12 : vector<4x8x384xf32> to vector<4x8x384xbf16>
    %c0_8 = arith.constant 0 : index
    %c0_9 = arith.constant 0 : index
    %14 = vector.load %arg5[%c0_8, %c0_9] : memref<4x8xf32, #tpu.memory_space<vmem>>, vector<4x8xf32>
    %15 = vector.shape_cast %14 : vector<4x8xf32> to vector<4x1x8xf32>
    %c0_10 = arith.constant 0 : index
    %c0_11 = arith.constant 0 : index
    %c0_12 = arith.constant 0 : index
    %16 = vector.load %arg8[%c0_10, %c0_11, %c0_12] : memref<1x128x128xbf16, #tpu.memory_space<vmem>>, vector<1x128x128xbf16>
    %17 = vector.shape_cast %16 : vector<1x128x128xbf16> to vector<128x128xbf16>
    %cst_13 = arith.constant 0.000000e+00 : f32
    %18 = vector.broadcast %cst_13 : f32 to vector<32x128xf32>
    %19 = vector.extract_strided_slice %13 {offsets = [0, 0, 0], sizes = [4, 8, 32], strides = [1, 1, 1]} : vector<4x8x384xbf16> to vector<4x8x32xbf16>
    %20 = vector.extract_strided_slice %13 {offsets = [0, 0, 128], sizes = [4, 8, 32], strides = [1, 1, 1]} : vector<4x8x384xbf16> to vector<4x8x32xbf16>
    %21 = vector.extract_strided_slice %13 {offsets = [0, 0, 256], sizes = [4, 8, 32], strides = [1, 1, 1]} : vector<4x8x384xbf16> to vector<4x8x32xbf16>
    "tpu.trace_start"() <{level = 10 : i32, message = "bqd,bkd->bqk"}> : () -> ()
    %cst_14 = arith.constant dense<0.000000e+00> : vector<4x8x8xf32>
    %22 = tpu.matmul %19, %20, %cst_14 {dimension_numbers = #tpu.dot_dimension_numbers<[2], [2], [1], [1], [0, 0, 0, 1, 1, 1], [0], [0]>} : vector<4x8x32xbf16>, vector<4x8x32xbf16>, vector<4x8x8xf32> -> vector<4x8x8xf32>
    "tpu.trace_stop"() : () -> ()
    %cst_15 = arith.constant 0.176776692 : f32
    %23 = vector.broadcast %cst_15 : f32 to vector<4x8x8xf32>
    %24 = arith.mulf %22, %23 : vector<4x8x8xf32>
    %25 = vector.broadcast %15 : vector<4x1x8xf32> to vector<4x8x8xf32>
    %26 = arith.addf %24, %25 : vector<4x8x8xf32>
    %cst_16 = arith.constant dense<0xFF800000> : vector<4x8xf32>
    %27 = vector.multi_reduction <maximumf>, %26, %cst_16 [2] : vector<4x8x8xf32> to vector<4x8xf32>
    %28 = vector.shape_cast %27 : vector<4x8xf32> to vector<4x8x1xf32>
    %29 = vector.broadcast %28 : vector<4x8x1xf32> to vector<4x8x8xf32>
    %30 = arith.subf %26, %29 : vector<4x8x8xf32>
    %31 = math.exp %30 : vector<4x8x8xf32>
    %cst_17 = arith.constant dense<0.000000e+00> : vector<4x8xf32>
    %32 = vector.multi_reduction <add>, %31, %cst_17 [2] : vector<4x8x8xf32> to vector<4x8xf32>
    %33 = vector.shape_cast %32 : vector<4x8xf32> to vector<4x8x1xf32>
    %34 = tpu.reciprocal %33 {approx = true} : vector<4x8x1xf32> -> vector<4x8x1xf32>
    %35 = vector.broadcast %34 : vector<4x8x1xf32> to vector<4x8x8xf32>
    %36 = arith.mulf %31, %35 : vector<4x8x8xf32>
    %37 = arith.truncf %36 : vector<4x8x8xf32> to vector<4x8x8xbf16>
    "tpu.trace_start"() <{level = 10 : i32, message = "bqk,bkd->bqd"}> : () -> ()
    %cst_18 = arith.constant dense<0.000000e+00> : vector<4x8x32xf32>
    %38 = tpu.matmul %37, %21, %cst_18 {dimension_numbers = #tpu.dot_dimension_numbers<[2], [1], [1], [2], [0, 0, 0, 1, 1, 2], [0], [0]>} : vector<4x8x8xbf16>, vector<4x8x32xbf16>, vector<4x8x32xf32> -> vector<4x8x32xf32>
    "tpu.trace_stop"() : () -> ()
    %39 = vector.shape_cast %38 : vector<4x8x32xf32> to vector<32x32xf32>
    %40 = arith.truncf %39 : vector<32x32xf32> to vector<32x32xbf16>
    %41 = vector.extract_strided_slice %17 {offsets = [0, 0], sizes = [32, 128], strides = [1, 1]} : vector<128x128xbf16> to vector<32x128xbf16>
    %cst_19 = arith.constant dense<0.000000e+00> : vector<32x128xf32>
    %42 = tpu.matmul %40, %41, %cst_19 {dimension_numbers = #tpu.dot_dimension_numbers<[1], [0], [0], [1], [0, 0, 1, 1], [], []>} : vector<32x32xbf16>, vector<32x128xbf16>, vector<32x128xf32> -> vector<32x128xf32>
    %43 = arith.addf %18, %42 : vector<32x128xf32>
    %44 = vector.extract_strided_slice %13 {offsets = [0, 0, 32], sizes = [4, 8, 32], strides = [1, 1, 1]} : vector<4x8x384xbf16> to vector<4x8x32xbf16>
    %45 = vector.extract_strided_slice %13 {offsets = [0, 0, 160], sizes = [4, 8, 32], strides = [1, 1, 1]} : vector<4x8x384xbf16> to vector<4x8x32xbf16>
    %46 = vector.extract_strided_slice %13 {offsets = [0, 0, 288], sizes = [4, 8, 32], strides = [1, 1, 1]} : vector<4x8x384xbf16> to vector<4x8x32xbf16>
    "tpu.trace_start"() <{level = 10 : i32, message = "bqd,bkd->bqk"}> : () -> ()
    %cst_20 = arith.constant dense<0.000000e+00> : vector<4x8x8xf32>
    %47 = tpu.matmul %44, %45, %cst_20 {dimension_numbers = #tpu.dot_dimension_numbers<[2], [2], [1], [1], [0, 0, 0, 1, 1, 1], [0], [0]>} : vector<4x8x32xbf16>, vector<4x8x32xbf16>, vector<4x8x8xf32> -> vector<4x8x8xf32>
    "tpu.trace_stop"() : () -> ()
    %cst_21 = arith.constant 0.176776692 : f32
    %48 = vector.broadcast %cst_21 : f32 to vector<4x8x8xf32>
    %49 = arith.mulf %47, %48 : vector<4x8x8xf32>
    %50 = vector.broadcast %15 : vector<4x1x8xf32> to vector<4x8x8xf32>
    %51 = arith.addf %49, %50 : vector<4x8x8xf32>
    %cst_22 = arith.constant dense<0xFF800000> : vector<4x8xf32>
    %52 = vector.multi_reduction <maximumf>, %51, %cst_22 [2] : vector<4x8x8xf32> to vector<4x8xf32>
    %53 = vector.shape_cast %52 : vector<4x8xf32> to vector<4x8x1xf32>
    %54 = vector.broadcast %53 : vector<4x8x1xf32> to vector<4x8x8xf32>
    %55 = arith.subf %51, %54 : vector<4x8x8xf32>
    %56 = math.exp %55 : vector<4x8x8xf32>
    %cst_23 = arith.constant dense<0.000000e+00> : vector<4x8xf32>
    %57 = vector.multi_reduction <add>, %56, %cst_23 [2] : vector<4x8x8xf32> to vector<4x8xf32>
    %58 = vector.shape_cast %57 : vector<4x8xf32> to vector<4x8x1xf32>
    %59 = tpu.reciprocal %58 {approx = true} : vector<4x8x1xf32> -> vector<4x8x1xf32>
    %60 = vector.broadcast %59 : vector<4x8x1xf32> to vector<4x8x8xf32>
    %61 = arith.mulf %56, %60 : vector<4x8x8xf32>
    %62 = arith.truncf %61 : vector<4x8x8xf32> to vector<4x8x8xbf16>
    "tpu.trace_start"() <{level = 10 : i32, message = "bqk,bkd->bqd"}> : () -> ()
    %cst_24 = arith.constant dense<0.000000e+00> : vector<4x8x32xf32>
    %63 = tpu.matmul %62, %46, %cst_24 {dimension_numbers = #tpu.dot_dimension_numbers<[2], [1], [1], [2], [0, 0, 0, 1, 1, 2], [0], [0]>} : vector<4x8x8xbf16>, vector<4x8x32xbf16>, vector<4x8x32xf32> -> vector<4x8x32xf32>
    "tpu.trace_stop"() : () -> ()
    %64 = vector.shape_cast %63 : vector<4x8x32xf32> to vector<32x32xf32>
    %65 = arith.truncf %64 : vector<32x32xf32> to vector<32x32xbf16>
    %66 = vector.extract_strided_slice %17 {offsets = [32, 0], sizes = [32, 128], strides = [1, 1]} : vector<128x128xbf16> to vector<32x128xbf16>
    %cst_25 = arith.constant dense<0.000000e+00> : vector<32x128xf32>
    %67 = tpu.matmul %65, %66, %cst_25 {dimension_numbers = #tpu.dot_dimension_numbers<[1], [0], [0], [1], [0, 0, 1, 1], [], []>} : vector<32x32xbf16>, vector<32x128xbf16>, vector<32x128xf32> -> vector<32x128xf32>
    %68 = arith.addf %43, %67 : vector<32x128xf32>
    %69 = vector.extract_strided_slice %13 {offsets = [0, 0, 64], sizes = [4, 8, 32], strides = [1, 1, 1]} : vector<4x8x384xbf16> to vector<4x8x32xbf16>
    %70 = vector.extract_strided_slice %13 {offsets = [0, 0, 192], sizes = [4, 8, 32], strides = [1, 1, 1]} : vector<4x8x384xbf16> to vector<4x8x32xbf16>
    %71 = vector.extract_strided_slice %13 {offsets = [0, 0, 320], sizes = [4, 8, 32], strides = [1, 1, 1]} : vector<4x8x384xbf16> to vector<4x8x32xbf16>
    "tpu.trace_start"() <{level = 10 : i32, message = "bqd,bkd->bqk"}> : () -> ()
    %cst_26 = arith.constant dense<0.000000e+00> : vector<4x8x8xf32>
    %72 = tpu.matmul %69, %70, %cst_26 {dimension_numbers = #tpu.dot_dimension_numbers<[2], [2], [1], [1], [0, 0, 0, 1, 1, 1], [0], [0]>} : vector<4x8x32xbf16>, vector<4x8x32xbf16>, vector<4x8x8xf32> -> vector<4x8x8xf32>
    "tpu.trace_stop"() : () -> ()
    %cst_27 = arith.constant 0.176776692 : f32
    %73 = vector.broadcast %cst_27 : f32 to vector<4x8x8xf32>
    %74 = arith.mulf %72, %73 : vector<4x8x8xf32>
    %75 = vector.broadcast %15 : vector<4x1x8xf32> to vector<4x8x8xf32>
    %76 = arith.addf %74, %75 : vector<4x8x8xf32>
    %cst_28 = arith.constant dense<0xFF800000> : vector<4x8xf32>
    %77 = vector.multi_reduction <maximumf>, %76, %cst_28 [2] : vector<4x8x8xf32> to vector<4x8xf32>
    %78 = vector.shape_cast %77 : vector<4x8xf32> to vector<4x8x1xf32>
    %79 = vector.broadcast %78 : vector<4x8x1xf32> to vector<4x8x8xf32>
    %80 = arith.subf %76, %79 : vector<4x8x8xf32>
    %81 = math.exp %80 : vector<4x8x8xf32>
    %cst_29 = arith.constant dense<0.000000e+00> : vector<4x8xf32>
    %82 = vector.multi_reduction <add>, %81, %cst_29 [2] : vector<4x8x8xf32> to vector<4x8xf32>
    %83 = vector.shape_cast %82 : vector<4x8xf32> to vector<4x8x1xf32>
    %84 = tpu.reciprocal %83 {approx = true} : vector<4x8x1xf32> -> vector<4x8x1xf32>
    %85 = vector.broadcast %84 : vector<4x8x1xf32> to vector<4x8x8xf32>
    %86 = arith.mulf %81, %85 : vector<4x8x8xf32>
    %87 = arith.truncf %86 : vector<4x8x8xf32> to vector<4x8x8xbf16>
    "tpu.trace_start"() <{level = 10 : i32, message = "bqk,bkd->bqd"}> : () -> ()
    %cst_30 = arith.constant dense<0.000000e+00> : vector<4x8x32xf32>
    %88 = tpu.matmul %87, %71, %cst_30 {dimension_numbers = #tpu.dot_dimension_numbers<[2], [1], [1], [2], [0, 0, 0, 1, 1, 2], [0], [0]>} : vector<4x8x8xbf16>, vector<4x8x32xbf16>, vector<4x8x32xf32> -> vector<4x8x32xf32>
    "tpu.trace_stop"() : () -> ()
    %89 = vector.shape_cast %88 : vector<4x8x32xf32> to vector<32x32xf32>
    %90 = arith.truncf %89 : vector<32x32xf32> to vector<32x32xbf16>
    %91 = vector.extract_strided_slice %17 {offsets = [64, 0], sizes = [32, 128], strides = [1, 1]} : vector<128x128xbf16> to vector<32x128xbf16>
    %cst_31 = arith.constant dense<0.000000e+00> : vector<32x128xf32>
    %92 = tpu.matmul %90, %91, %cst_31 {dimension_numbers = #tpu.dot_dimension_numbers<[1], [0], [0], [1], [0, 0, 1, 1], [], []>} : vector<32x32xbf16>, vector<32x128xbf16>, vector<32x128xf32> -> vector<32x128xf32>
    %93 = arith.addf %68, %92 : vector<32x128xf32>
    %94 = vector.extract_strided_slice %13 {offsets = [0, 0, 96], sizes = [4, 8, 32], strides = [1, 1, 1]} : vector<4x8x384xbf16> to vector<4x8x32xbf16>
    %95 = vector.extract_strided_slice %13 {offsets = [0, 0, 224], sizes = [4, 8, 32], strides = [1, 1, 1]} : vector<4x8x384xbf16> to vector<4x8x32xbf16>
    %96 = vector.extract_strided_slice %13 {offsets = [0, 0, 352], sizes = [4, 8, 32], strides = [1, 1, 1]} : vector<4x8x384xbf16> to vector<4x8x32xbf16>
    "tpu.trace_start"() <{level = 10 : i32, message = "bqd,bkd->bqk"}> : () -> ()
    %cst_32 = arith.constant dense<0.000000e+00> : vector<4x8x8xf32>
    %97 = tpu.matmul %94, %95, %cst_32 {dimension_numbers = #tpu.dot_dimension_numbers<[2], [2], [1], [1], [0, 0, 0, 1, 1, 1], [0], [0]>} : vector<4x8x32xbf16>, vector<4x8x32xbf16>, vector<4x8x8xf32> -> vector<4x8x8xf32>
    "tpu.trace_stop"() : () -> ()
    %cst_33 = arith.constant 0.176776692 : f32
    %98 = vector.broadcast %cst_33 : f32 to vector<4x8x8xf32>
    %99 = arith.mulf %97, %98 : vector<4x8x8xf32>
    %100 = vector.broadcast %15 : vector<4x1x8xf32> to vector<4x8x8xf32>
    %101 = arith.addf %99, %100 : vector<4x8x8xf32>
    %cst_34 = arith.constant dense<0xFF800000> : vector<4x8xf32>
    %102 = vector.multi_reduction <maximumf>, %101, %cst_34 [2] : vector<4x8x8xf32> to vector<4x8xf32>
    %103 = vector.shape_cast %102 : vector<4x8xf32> to vector<4x8x1xf32>
    %104 = vector.broadcast %103 : vector<4x8x1xf32> to vector<4x8x8xf32>
    %105 = arith.subf %101, %104 : vector<4x8x8xf32>
    %106 = math.exp %105 : vector<4x8x8xf32>
    %cst_35 = arith.constant dense<0.000000e+00> : vector<4x8xf32>
    %107 = vector.multi_reduction <add>, %106, %cst_35 [2] : vector<4x8x8xf32> to vector<4x8xf32>
    %108 = vector.shape_cast %107 : vector<4x8xf32> to vector<4x8x1xf32>
    %109 = tpu.reciprocal %108 {approx = true} : vector<4x8x1xf32> -> vector<4x8x1xf32>
    %110 = vector.broadcast %109 : vector<4x8x1xf32> to vector<4x8x8xf32>
    %111 = arith.mulf %106, %110 : vector<4x8x8xf32>
    %112 = arith.truncf %111 : vector<4x8x8xf32> to vector<4x8x8xbf16>
    "tpu.trace_start"() <{level = 10 : i32, message = "bqk,bkd->bqd"}> : () -> ()
    %cst_36 = arith.constant dense<0.000000e+00> : vector<4x8x32xf32>
    %113 = tpu.matmul %112, %96, %cst_36 {dimension_numbers = #tpu.dot_dimension_numbers<[2], [1], [1], [2], [0, 0, 0, 1, 1, 2], [0], [0]>} : vector<4x8x8xbf16>, vector<4x8x32xbf16>, vector<4x8x32xf32> -> vector<4x8x32xf32>
    "tpu.trace_stop"() : () -> ()
    %114 = vector.shape_cast %113 : vector<4x8x32xf32> to vector<32x32xf32>
    %115 = arith.truncf %114 : vector<32x32xf32> to vector<32x32xbf16>
    %116 = vector.extract_strided_slice %17 {offsets = [96, 0], sizes = [32, 128], strides = [1, 1]} : vector<128x128xbf16> to vector<32x128xbf16>
    %cst_37 = arith.constant dense<0.000000e+00> : vector<32x128xf32>
    %117 = tpu.matmul %115, %116, %cst_37 {dimension_numbers = #tpu.dot_dimension_numbers<[1], [0], [0], [1], [0, 0, 1, 1], [], []>} : vector<32x32xbf16>, vector<32x128xbf16>, vector<32x128xf32> -> vector<32x128xf32>
    %118 = arith.addf %93, %117 : vector<32x128xf32>
    %c0_38 = arith.constant 0 : index
    %c0_39 = arith.constant 0 : index
    %c0_40 = arith.constant 0 : index
    %119 = vector.load %arg9[%c0_38, %c0_39, %c0_40] : memref<1x1x128xf32, #tpu.memory_space<vmem>>, vector<1x1x128xf32>
    %120 = vector.shape_cast %119 : vector<1x1x128xf32> to vector<1x128xf32>
    %121 = vector.broadcast %120 : vector<1x128xf32> to vector<32x128xf32>
    %122 = arith.addf %118, %121 : vector<32x128xf32>
    %123 = arith.addf %3, %122 : vector<32x128xf32>
    %c0_41 = arith.constant 0 : index
    %c0_42 = arith.constant 0 : index
    %c0_43 = arith.constant 0 : index
    %124 = vector.load %arg10[%c0_41, %c0_42, %c0_43] : memref<1x1x128xf32, #tpu.memory_space<vmem>>, vector<1x1x128xf32>
    %125 = vector.shape_cast %124 : vector<1x1x128xf32> to vector<1x128xf32>
    %c0_44 = arith.constant 0 : index
    %c0_45 = arith.constant 0 : index
    %c0_46 = arith.constant 0 : index
    %126 = vector.load %arg11[%c0_44, %c0_45, %c0_46] : memref<1x1x128xf32, #tpu.memory_space<vmem>>, vector<1x1x128xf32>
    %127 = vector.shape_cast %126 : vector<1x1x128xf32> to vector<1x128xf32>
    %cst_47 = arith.constant dense<0.000000e+00> : vector<32xf32>
    %128 = vector.multi_reduction <add>, %123, %cst_47 [1] : vector<32x128xf32> to vector<32xf32>
    %129 = vector.shape_cast %128 : vector<32xf32> to vector<32x1xf32>
    %cst_48 = arith.constant 1.280000e+02 : f32
    %130 = vector.broadcast %cst_48 : f32 to vector<32x1xf32>
    %131 = arith.divf %129, %130 : vector<32x1xf32>
    %132 = arith.mulf %123, %123 : vector<32x128xf32>
    %cst_49 = arith.constant dense<0.000000e+00> : vector<32xf32>
    %133 = vector.multi_reduction <add>, %132, %cst_49 [1] : vector<32x128xf32> to vector<32xf32>
    %134 = vector.shape_cast %133 : vector<32xf32> to vector<32x1xf32>
    %cst_50 = arith.constant 1.280000e+02 : f32
    %135 = vector.broadcast %cst_50 : f32 to vector<32x1xf32>
    %136 = arith.divf %134, %135 : vector<32x1xf32>
    %137 = arith.mulf %131, %131 : vector<32x1xf32>
    %138 = arith.subf %136, %137 : vector<32x1xf32>
    %139 = vector.broadcast %131 : vector<32x1xf32> to vector<32x128xf32>
    %140 = arith.subf %123, %139 : vector<32x128xf32>
    %cst_51 = arith.constant 9.99999996E-13 : f32
    %141 = vector.broadcast %cst_51 : f32 to vector<32x1xf32>
    %142 = arith.addf %138, %141 : vector<32x1xf32>
    %143 = math.rsqrt %142 : vector<32x1xf32>
    %144 = vector.broadcast %143 : vector<32x1xf32> to vector<32x128xf32>
    %145 = arith.mulf %140, %144 : vector<32x128xf32>
    %146 = vector.broadcast %125 : vector<1x128xf32> to vector<32x128xf32>
    %147 = arith.mulf %145, %146 : vector<32x128xf32>
    %148 = vector.broadcast %127 : vector<1x128xf32> to vector<32x128xf32>
    %149 = arith.addf %147, %148 : vector<32x128xf32>
    %150 = arith.truncf %149 : vector<32x128xf32> to vector<32x128xbf16>
    %c0_52 = arith.constant 0 : index
    %c0_53 = arith.constant 0 : index
    %c0_54 = arith.constant 0 : index
    %151 = vector.load %arg12[%c0_52, %c0_53, %c0_54] : memref<1x128x512xbf16, #tpu.memory_space<vmem>>, vector<1x128x512xbf16>
    %152 = vector.shape_cast %151 : vector<1x128x512xbf16> to vector<128x512xbf16>
    %cst_55 = arith.constant dense<0.000000e+00> : vector<32x512xf32>
    %153 = tpu.matmul %150, %152, %cst_55 {dimension_numbers = #tpu.dot_dimension_numbers<[1], [0], [0], [1], [0, 0, 1, 1], [], []>} : vector<32x128xbf16>, vector<128x512xbf16>, vector<32x512xf32> -> vector<32x512xf32>
    %c0_56 = arith.constant 0 : index
    %c0_57 = arith.constant 0 : index
    %c0_58 = arith.constant 0 : index
    %154 = vector.load %arg13[%c0_56, %c0_57, %c0_58] : memref<1x1x512xf32, #tpu.memory_space<vmem>>, vector<1x1x512xf32>
    %155 = vector.shape_cast %154 : vector<1x1x512xf32> to vector<1x512xf32>
    %156 = vector.broadcast %155 : vector<1x512xf32> to vector<32x512xf32>
    %157 = arith.addf %153, %156 : vector<32x512xf32>
    %158 = arith.mulf %157, %157 : vector<32x512xf32>
    %159 = arith.mulf %157, %158 : vector<32x512xf32>
    %cst_59 = arith.constant 4.471500e-02 : f32
    %160 = vector.broadcast %cst_59 : f32 to vector<32x512xf32>
    %161 = arith.mulf %160, %159 : vector<32x512xf32>
    %162 = arith.addf %157, %161 : vector<32x512xf32>
    %cst_60 = arith.constant 0.797884583 : f32
    %163 = vector.broadcast %cst_60 : f32 to vector<32x512xf32>
    %164 = arith.mulf %163, %162 : vector<32x512xf32>
    %165 = math.tanh %164 : vector<32x512xf32>
    %cst_61 = arith.constant 1.000000e+00 : f32
    %166 = vector.broadcast %cst_61 : f32 to vector<32x512xf32>
    %167 = arith.addf %166, %165 : vector<32x512xf32>
    %cst_62 = arith.constant 5.000000e-01 : f32
    %168 = vector.broadcast %cst_62 : f32 to vector<32x512xf32>
    %169 = arith.mulf %168, %167 : vector<32x512xf32>
    %170 = arith.mulf %157, %169 : vector<32x512xf32>
    %171 = arith.truncf %170 : vector<32x512xf32> to vector<32x512xbf16>
    %c0_63 = arith.constant 0 : index
    %c0_64 = arith.constant 0 : index
    %c0_65 = arith.constant 0 : index
    %172 = vector.load %arg14[%c0_63, %c0_64, %c0_65] : memref<1x512x128xbf16, #tpu.memory_space<vmem>>, vector<1x512x128xbf16>
    %173 = vector.shape_cast %172 : vector<1x512x128xbf16> to vector<512x128xbf16>
    %cst_66 = arith.constant dense<0.000000e+00> : vector<32x128xf32>
    %174 = tpu.matmul %171, %173, %cst_66 {dimension_numbers = #tpu.dot_dimension_numbers<[1], [0], [0], [1], [0, 0, 1, 1], [], []>} : vector<32x512xbf16>, vector<512x128xbf16>, vector<32x128xf32> -> vector<32x128xf32>
    %c0_67 = arith.constant 0 : index
    %c0_68 = arith.constant 0 : index
    %c0_69 = arith.constant 0 : index
    %175 = vector.load %arg15[%c0_67, %c0_68, %c0_69] : memref<1x1x128xf32, #tpu.memory_space<vmem>>, vector<1x1x128xf32>
    %176 = vector.shape_cast %175 : vector<1x1x128xf32> to vector<1x128xf32>
    %177 = vector.broadcast %176 : vector<1x128xf32> to vector<32x128xf32>
    %178 = arith.addf %174, %177 : vector<32x128xf32>
    %179 = arith.addf %149, %178 : vector<32x128xf32>
    %c0_70 = arith.constant 0 : index
    %c0_71 = arith.constant 0 : index
    %c0_72 = arith.constant 0 : index
    %180 = vector.load %arg16[%c0_70, %c0_71, %c0_72] : memref<1x1x128xf32, #tpu.memory_space<vmem>>, vector<1x1x128xf32>
    %181 = vector.shape_cast %180 : vector<1x1x128xf32> to vector<1x128xf32>
    %c0_73 = arith.constant 0 : index
    %c0_74 = arith.constant 0 : index
    %c0_75 = arith.constant 0 : index
    %182 = vector.load %arg17[%c0_73, %c0_74, %c0_75] : memref<1x1x128xf32, #tpu.memory_space<vmem>>, vector<1x1x128xf32>
    %183 = vector.shape_cast %182 : vector<1x1x128xf32> to vector<1x128xf32>
    %cst_76 = arith.constant dense<0.000000e+00> : vector<32xf32>
    %184 = vector.multi_reduction <add>, %179, %cst_76 [1] : vector<32x128xf32> to vector<32xf32>
    %185 = vector.shape_cast %184 : vector<32xf32> to vector<32x1xf32>
    %cst_77 = arith.constant 1.280000e+02 : f32
    %186 = vector.broadcast %cst_77 : f32 to vector<32x1xf32>
    %187 = arith.divf %185, %186 : vector<32x1xf32>
    %188 = arith.mulf %179, %179 : vector<32x128xf32>
    %cst_78 = arith.constant dense<0.000000e+00> : vector<32xf32>
    %189 = vector.multi_reduction <add>, %188, %cst_78 [1] : vector<32x128xf32> to vector<32xf32>
    %190 = vector.shape_cast %189 : vector<32xf32> to vector<32x1xf32>
    %cst_79 = arith.constant 1.280000e+02 : f32
    %191 = vector.broadcast %cst_79 : f32 to vector<32x1xf32>
    %192 = arith.divf %190, %191 : vector<32x1xf32>
    %193 = arith.mulf %187, %187 : vector<32x1xf32>
    %194 = arith.subf %192, %193 : vector<32x1xf32>
    %195 = vector.broadcast %187 : vector<32x1xf32> to vector<32x128xf32>
    %196 = arith.subf %179, %195 : vector<32x128xf32>
    %cst_80 = arith.constant 9.99999996E-13 : f32
    %197 = vector.broadcast %cst_80 : f32 to vector<32x1xf32>
    %198 = arith.addf %194, %197 : vector<32x1xf32>
    %199 = math.rsqrt %198 : vector<32x1xf32>
    %200 = vector.broadcast %199 : vector<32x1xf32> to vector<32x128xf32>
    %201 = arith.mulf %196, %200 : vector<32x128xf32>
    %202 = vector.broadcast %181 : vector<1x128xf32> to vector<32x128xf32>
    %203 = arith.mulf %201, %202 : vector<32x128xf32>
    %204 = vector.broadcast %183 : vector<1x128xf32> to vector<32x128xf32>
    %205 = arith.addf %203, %204 : vector<32x128xf32>
    %c0_81 = arith.constant 0 : index
    %c0_82 = arith.constant 0 : index
    %206 = vector.load %arg19[%c0_81, %c0_82] : memref<32x128xf32, #tpu.memory_space<vmem>>, vector<32x128xf32>
    tpu.vector_store %arg19[%c0_81, %c0_82], %205 {strides = array<i32>} : memref<32x128xf32, #tpu.memory_space<vmem>>, vector<32x128xf32>,
    %207 = vector.shape_cast %205 : vector<32x128xf32> to vector<4x8x128xf32>
    %208 = vector.extract_strided_slice %207 {offsets = [0, 0, 0], sizes = [4, 1, 128], strides = [1, 1, 1]} : vector<4x8x128xf32> to vector<4x1x128xf32>
    %209 = vector.shape_cast %208 : vector<4x1x128xf32> to vector<4x128xf32>
    %210 = vector.shape_cast %209 : vector<4x128xf32> to vector<1x4x128xf32>
    %c1_i32 = arith.constant 1 : i32
    %211 = arith.addi %arg0, %c1_i32 : i32
    %212 = arith.index_cast %211 : i32 to index
    %c0_83 = arith.constant 0 : index
    %c0_84 = arith.constant 0 : index
    %213 = vector.load %arg18[%212, %c0_83, %c0_84] : memref<3x4x128xf32, #tpu.memory_space<vmem>>, vector<1x4x128xf32>
    tpu.vector_store %arg18[%212, %c0_83, %c0_84], %210 {strides = array<i32>} : memref<3x4x128xf32, #tpu.memory_space<vmem>>, vector<1x4x128xf32>,
    return
  }
  func.func @transform_0(%arg0: i32) -> (i32, i32) {
    %c0_i32 = arith.constant 0 : i32
    %c0_i32_0 = arith.constant 0 : i32
    %c0_i32_1 = arith.constant 0 : i32
    return %c0_i32, %c0_i32_0 : i32, i32
  }
  func.func @transform_1(%arg0: i32) -> (i32, i32) {
    %c0_i32 = arith.constant 0 : i32
    %c0_i32_0 = arith.constant 0 : i32
    %c0_i32_1 = arith.constant 0 : i32
    return %c0_i32, %c0_i32_0 : i32, i32
  }
  func.func @transform_2(%arg0: i32) -> (i32, i32) {
    %c0_i32 = arith.constant 0 : i32
    %c0_i32_0 = arith.constant 0 : i32
    %c0_i32_1 = arith.constant 0 : i32
    return %c0_i32, %c0_i32_0 : i32, i32
  }
  func.func @transform_3(%arg0: i32) -> (i32, i32) {
    %c0_i32 = arith.constant 0 : i32
    %c0_i32_0 = arith.constant 0 : i32
    %c0_i32_1 = arith.constant 0 : i32
    return %c0_i32, %c0_i32_0 : i32, i32
  }
  func.func @transform_4(%arg0: i32) -> (i32, i32) {
    %c0_i32 = arith.constant 0 : i32
    %c0_i32_0 = arith.constant 0 : i32
    %c0_i32_1 = arith.constant 0 : i32
    return %c0_i32, %c0_i32_0 : i32, i32
  }
  func.func @transform_5(%arg0: i32) -> (i32, i32, i32) {
    %c0_i32 = arith.constant 0 : i32
    %c0_i32_0 = arith.constant 0 : i32
    %c0_i32_1 = arith.constant 0 : i32
    return %arg0, %c0_i32, %c0_i32_0 : i32, i32, i32
  }
  func.func @transform_6(%arg0: i32) -> (i32, i32, i32) {
    %c0_i32 = arith.constant 0 : i32
    %c0_i32_0 = arith.constant 0 : i32
    %c0_i32_1 = arith.constant 0 : i32
    return %arg0, %c0_i32, %c0_i32_0 : i32, i32, i32
  }
  func.func @transform_7(%arg0: i32) -> (i32, i32, i32) {
    %c0_i32 = arith.constant 0 : i32
    %c0_i32_0 = arith.constant 0 : i32
    %c0_i32_1 = arith.constant 0 : i32
    return %arg0, %c0_i32, %c0_i32_0 : i32, i32, i32
  }
  func.func @transform_8(%arg0: i32) -> (i32, i32, i32) {
    %c0_i32 = arith.constant 0 : i32
    %c0_i32_0 = arith.constant 0 : i32
    %c0_i32_1 = arith.constant 0 : i32
    return %arg0, %c0_i32, %c0_i32_0 : i32, i32, i32
  }
  func.func @transform_9(%arg0: i32) -> (i32, i32, i32) {
    %c0_i32 = arith.constant 0 : i32
    %c0_i32_0 = arith.constant 0 : i32
    %c0_i32_1 = arith.constant 0 : i32
    return %arg0, %c0_i32, %c0_i32_0 : i32, i32, i32
  }
  func.func @transform_10(%arg0: i32) -> (i32, i32, i32) {
    %c0_i32 = arith.constant 0 : i32
    %c0_i32_0 = arith.constant 0 : i32
    %c0_i32_1 = arith.constant 0 : i32
    return %arg0, %c0_i32, %c0_i32_0 : i32, i32, i32
  }
  func.func @transform_11(%arg0: i32) -> (i32, i32, i32) {
    %c0_i32 = arith.constant 0 : i32
    %c0_i32_0 = arith.constant 0 : i32
    %c0_i32_1 = arith.constant 0 : i32
    return %arg0, %c0_i32, %c0_i32_0 : i32, i32, i32
  }
  func.func @transform_12(%arg0: i32) -> (i32, i32, i32) {
    %c0_i32 = arith.constant 0 : i32
    %c0_i32_0 = arith.constant 0 : i32
    %c0_i32_1 = arith.constant 0 : i32
    return %arg0, %c0_i32, %c0_i32_0 : i32, i32, i32
  }
  func.func @transform_13(%arg0: i32) -> (i32, i32, i32) {
    %c0_i32 = arith.constant 0 : i32
    %c0_i32_0 = arith.constant 0 : i32
    %c0_i32_1 = arith.constant 0 : i32
    return %arg0, %c0_i32, %c0_i32_0 : i32, i32, i32
  }
  func.func @transform_14(%arg0: i32) -> (i32, i32, i32) {
    %c0_i32 = arith.constant 0 : i32
    %c0_i32_0 = arith.constant 0 : i32
    %c0_i32_1 = arith.constant 0 : i32
    return %arg0, %c0_i32, %c0_i32_0 : i32, i32, i32
  }
  func.func @transform_15(%arg0: i32) -> (i32, i32, i32) {
    %c0_i32 = arith.constant 0 : i32
    %c0_i32_0 = arith.constant 0 : i32
    %c0_i32_1 = arith.constant 0 : i32
    return %arg0, %c0_i32, %c0_i32_0 : i32, i32, i32
  }
  func.func @transform_16(%arg0: i32) -> (i32, i32, i32) {
    %c0_i32 = arith.constant 0 : i32
    %c0_i32_0 = arith.constant 0 : i32
    %c0_i32_1 = arith.constant 0 : i32
    return %arg0, %c0_i32, %c0_i32_0 : i32, i32, i32
  }
  func.func @transform_17(%arg0: i32) -> (i32, i32, i32) {
    %c0_i32 = arith.constant 0 : i32
    %c0_i32_0 = arith.constant 0 : i32
    %c0_i32_1 = arith.constant 0 : i32
    %c0_i32_2 = arith.constant 0 : i32
    return %c0_i32, %c0_i32_0, %c0_i32_1 : i32, i32, i32
  }
}

</mosaic_0001>

<llo_original>
// kernel: forward.1
$region0: #{forward.1}
  #allocation0 [shape = 'u32[]', space=smem, size = 0x4, offset = 0x4, fixed_abs, tag = 'smem constant byte address 0x4 - core index']
  #allocation1 [shape = 'u32[144,128]{1,0:T(1,128)}', space=vmem, size = 0x12000, scoped, tag = 'internal scratch']
  #allocation2 [shape = 'f32[32,128]{1,0:T(8,128)}', space=vmem, size = 0x4000, scoped, tag = 'scratch operand']
  %s0 = inlined_call_operand.vmem [shape: f32[32,128], index: 0, kind: input, shape index: {}]
  %s1 = inlined_call_operand.vmem [shape: f32[8,128], index: 1, kind: input, shape index: {}]
  %s2 = inlined_call_operand.vmem [shape: f32[1,128], index: 2, kind: input, shape index: {}]
  %s3 = inlined_call_operand.vmem [shape: f32[1,128], index: 3, kind: input, shape index: {}]
  %s4 = inlined_call_operand.vmem [shape: f32[4,8], index: 4, kind: input, shape index: {}]
  %s5 = inlined_call_operand.vmem [shape: bf16[2,128,384], index: 5, kind: input, shape index: {}]
  %s6 = inlined_call_operand.vmem [shape: f32[2,1,384], index: 6, kind: input, shape index: {}]
  %s7 = inlined_call_operand.hbm [shape: bf16[2,128,128], index: 7, kind: input, shape index: {}]
  %s8 = inlined_call_operand.vmem [shape: f32[2,1,128], index: 8, kind: input, shape index: {}]
  %s9 = inlined_call_operand.vmem [shape: f32[2,1,128], index: 9, kind: input, shape index: {}]
  %s10 = inlined_call_operand.vmem [shape: f32[2,1,128], index: 10, kind: input, shape index: {}]
  %s11 = inlined_call_operand.hbm [shape: bf16[2,128,512], index: 11, kind: input, shape index: {}]
  %s12 = inlined_call_operand.vmem [shape: f32[2,1,512], index: 12, kind: input, shape index: {}]
  %s13 = inlined_call_operand.hbm [shape: bf16[2,512,128], index: 13, kind: input, shape index: {}]
  %s14 = inlined_call_operand.vmem [shape: f32[2,1,128], index: 14, kind: input, shape index: {}]
  %s15 = inlined_call_operand.vmem [shape: f32[2,1,128], index: 15, kind: input, shape index: {}]
  %s16 = inlined_call_operand.vmem [shape: f32[2,1,128], index: 16, kind: input, shape index: {}]
  %s17 = inlined_call_operand.vmem [shape: f32[3,4,128], index: 17, kind: output, shape index: {}]
  %s18 = sld [smem:[#allocation0]]
  $region117: #{forward.1} parent=0
    _
  %s20 = ssub.s32 1, %s18
  %s21 = scalar_select 0, %s20, %s18
  $region1: #{forward.1} parent=0
    #allocation3 [shape = 'u8[65536]{0}', space=vmem, size = 0x10000, scoped, tag = 'input window, operand 7']
    #allocation4 [shape = 's32[2]{0}', space=sflag, size = 0x8, scoped, tag = 'scoped memory for forward.1']
    #allocation5 [shape = 'u8[262144]{0}', space=vmem, size = 0x40000, scoped, tag = 'input window, operand 11']
    #allocation6 [shape = 's32[2]{0}', space=sflag, size = 0x8, scoped, tag = 'scoped memory for forward.1']
    #allocation7 [shape = 'u8[262144]{0}', space=vmem, size = 0x40000, scoped, tag = 'input window, operand 13']
    %22 = vsyncpa [#allocation4], 0
    %s23 = scalar_lea.sflag [#allocation4], 1
    %24 = vsyncpa %s23, 0
    %25 = vsyncpa [#allocation6], 0
    %s26 = scalar_lea.sflag [#allocation6], 1
    %27 = vsyncpa %s26, 0
    loop: start=0, step=1, limit=4
    $region2: #{forward.1} parent=1 // loop_pre_header
      _
    $region3: #{forward.1} parent=1 // loop_header
      %s29 = sphi 0, %s33
      %p30 = scmp.ge.s32.totalorder %s29, 4
      %s37 = sphi 0, %s37
      %s39 = sphi 0, %s37
      %s40 = sphi 0, %s39
      %s54 = sphi 0, %s40
      %s58 = sphi 0, %s58
      %s60 = sphi 0, %s58
      %s61 = sphi 0, %s60
      %s75 = sphi 0, %s61
      %s79 = sphi 0, %s79
      %s81 = sphi 0, %s79
      %s82 = sphi 0, %s81
      %s96 = sphi 0, %s82
      %s100 = sphi 0, %s100
      %s102 = sphi 0, %s100
      %s103 = sphi 0, %s102
      %s117 = sphi 0, %s103
      %s121 = sphi 0, %s121
      %s123 = sphi 0, %s121
      %s124 = sphi 0, %s123
      %s138 = sphi 0, %s124
      %s144 = sphi 0, %s146
      %s147 = sphi 0, %s144
      %s148 = sphi 0, %s147
      %s164 = sphi 0, %s148
      %s170 = sphi 0, %s172
      %s173 = sphi 0, %s170
      %s174 = sphi 0, %s173
      %s190 = sphi 0, %s174
      %s196 = sphi 0, %s198
      %s199 = sphi 0, %s196
      %s200 = sphi 0, %s199
      %s216 = sphi 0, %s200
      %s222 = sphi 0, %s224
      %s225 = sphi 0, %s222
      %s226 = sphi 0, %s225
      %s242 = sphi 0, %s226
      %s248 = sphi 0, %s250
      %s251 = sphi 0, %s248
      %s252 = sphi 0, %s251
      %s268 = sphi 0, %s252
      %s274 = sphi 0, %s276
      %s277 = sphi 0, %s274
      %s278 = sphi 0, %s277
      %s294 = sphi 0, %s278
      %s300 = sphi 0, %s302
      %s303 = sphi 0, %s300
      %s304 = sphi 0, %s303
      %s320 = sphi 0, %s304
      %s326 = sphi 0, %s328
      %s329 = sphi 0, %s326
      %s330 = sphi 0, %s329
      %s346 = sphi 0, %s330
      %s352 = sphi 0, %s354
      %s355 = sphi 0, %s352
      %s356 = sphi 0, %s355
      %s372 = sphi 0, %s356
      %s378 = sphi 0, %s380
      %s381 = sphi 0, %s378
      %s382 = sphi 0, %s381
      %s398 = sphi 0, %s382
      %s404 = sphi 0, %s406
      %s407 = sphi 0, %s404
      %s408 = sphi 0, %s407
      %s424 = sphi 0, %s408
      %s430 = sphi 0, %s432
      %s433 = sphi 0, %s430
      %s434 = sphi 0, %s433
      %s450 = sphi 0, %s434
      %s454 = sphi 0, %s454
      %s456 = sphi 0, %s454
      %s457 = sphi 0, %s456
      %s471 = sphi 0, %s457
    $region4: #{forward.1} parent=1 // loop_header_branch
      %32 = sbr.rel (%p30) target = $region8
    $region5: #{forward.1} parent=1 // loop_body
      %s34 = ssub.s32 %s29, 1
      %s35 = ssub.s32 %s29, 2
      %s36 = sadd.s32 %s29, 1
      %s38 = sadd.s32 %s37, 1
      %p41 = scmp.eq.s32.totalorder %s29, 1
      %p42 = scmp.ne.s32.totalorder %s37, %s39
      %p43 = scmp.eq.s32.totalorder %s29, 0
      %p44 = por %p42, %p43
      %p45 = scmp.ne.s32.totalorder %s37, %s39
      %p46 = scmp.eq.s32.totalorder %s34, 1
      %p47 = por %p45, %p46
      %p48 = scmp.ne.s32.totalorder %s39, %s40
      %p49 = scmp.eq.s32.totalorder %s34, 0
      %p50 = por %p48, %p49
      %p51 = scmp.ne.s32.totalorder %s39, %s40
      %p52 = scmp.eq.s32.totalorder %s35, 1
      %p53 = por %p51, %p52
      %p55 = scmp.ne.s32.totalorder %s40, %s54
      %p56 = scmp.eq.s32.totalorder %s35, 0
      %p57 = por %p55, %p56
      %s59 = sadd.s32 %s58, 1
      %p62 = scmp.eq.s32.totalorder %s29, 1
      %p63 = scmp.ne.s32.totalorder %s58, %s60
      %p64 = scmp.eq.s32.totalorder %s29, 0
      %p65 = por %p63, %p64
      %p66 = scmp.ne.s32.totalorder %s58, %s60
      %p67 = scmp.eq.s32.totalorder %s34, 1
      %p68 = por %p66, %p67
      %p69 = scmp.ne.s32.totalorder %s60, %s61
      %p70 = scmp.eq.s32.totalorder %s34, 0
      %p71 = por %p69, %p70
      %p72 = scmp.ne.s32.totalorder %s60, %s61
      %p73 = scmp.eq.s32.totalorder %s35, 1
      %p74 = por %p72, %p73
      %p76 = scmp.ne.s32.totalorder %s61, %s75
      %p77 = scmp.eq.s32.totalorder %s35, 0
      %p78 = por %p76, %p77
      %s80 = sadd.s32 %s79, 1
      %p83 = scmp.eq.s32.totalorder %s29, 1
      %p84 = scmp.ne.s32.totalorder %s79, %s81
      %p85 = scmp.eq.s32.totalorder %s29, 0
      %p86 = por %p84, %p85
      %p87 = scmp.ne.s32.totalorder %s79, %s81
      %p88 = scmp.eq.s32.totalorder %s34, 1
      %p89 = por %p87, %p88
      %p90 = scmp.ne.s32.totalorder %s81, %s82
      %p91 = scmp.eq.s32.totalorder %s34, 0
      %p92 = por %p90, %p91
      %p93 = scmp.ne.s32.totalorder %s81, %s82
      %p94 = scmp.eq.s32.totalorder %s35, 1
      %p95 = por %p93, %p94
      %p97 = scmp.ne.s32.totalorder %s82, %s96
      %p98 = scmp.eq.s32.totalorder %s35, 0
      %p99 = por %p97, %p98
      %s101 = sadd.s32 %s100, 1
      %p104 = scmp.eq.s32.totalorder %s29, 1
      %p105 = scmp.ne.s32.totalorder %s100, %s102
      %p106 = scmp.eq.s32.totalorder %s29, 0
      %p107 = por %p105, %p106
      %p108 = scmp.ne.s32.totalorder %s100, %s102
      %p109 = scmp.eq.s32.totalorder %s34, 1
      %p110 = por %p108, %p109
      %p111 = scmp.ne.s32.totalorder %s102, %s103
      %p112 = scmp.eq.s32.totalorder %s34, 0
      %p113 = por %p111, %p112
      %p114 = scmp.ne.s32.totalorder %s102, %s103
      %p115 = scmp.eq.s32.totalorder %s35, 1
      %p116 = por %p114, %p115
      %p118 = scmp.ne.s32.totalorder %s103, %s117
      %p119 = scmp.eq.s32.totalorder %s35, 0
      %p120 = por %p118, %p119
      %s122 = sadd.s32 %s121, 1
      %p125 = scmp.eq.s32.totalorder %s29, 1
      %p126 = scmp.ne.s32.totalorder %s121, %s123
      %p127 = scmp.eq.s32.totalorder %s29, 0
      %p128 = por %p126, %p127
      %p129 = scmp.ne.s32.totalorder %s121, %s123
      %p130 = scmp.eq.s32.totalorder %s34, 1
      %p131 = por %p129, %p130
      %p132 = scmp.ne.s32.totalorder %s123, %s124
      %p133 = scmp.eq.s32.totalorder %s34, 0
      %p134 = por %p132, %p133
      %p135 = scmp.ne.s32.totalorder %s123, %s124
      %p136 = scmp.eq.s32.totalorder %s35, 1
      %p137 = por %p135, %p136
      %p139 = scmp.ne.s32.totalorder %s124, %s138
      %p140 = scmp.eq.s32.totalorder %s35, 0
      %p141 = por %p139, %p140
      %s142 = ssub.s32 %s29, %s36
      %p143 = scmp.eq.s32.totalorder %s142, 0
      %s145 = sadd.s32 %s144, 1
      %s146 = scalar_select %p143, %s144, %s145
      %p149 = pneg %p143
      %p150 = scmp.eq.s32.totalorder %s29, 1
      %p151 = por %p149, %p150
      %p152 = scmp.ne.s32.totalorder %s144, %s147
      %p153 = scmp.eq.s32.totalorder %s29, 0
      %p154 = por %p152, %p153
      %p155 = scmp.ne.s32.totalorder %s144, %s147
      %p156 = scmp.eq.s32.totalorder %s34, 1
      %p157 = por %p155, %p156
      %p158 = scmp.ne.s32.totalorder %s147, %s148
      %p159 = scmp.eq.s32.totalorder %s34, 0
      %p160 = por %p158, %p159
      %p161 = scmp.ne.s32.totalorder %s147, %s148
      %p162 = scmp.eq.s32.totalorder %s35, 1
      %p163 = por %p161, %p162
      %p165 = scmp.ne.s32.totalorder %s148, %s164
      %p166 = scmp.eq.s32.totalorder %s35, 0
      %p167 = por %p165, %p166
      %s168 = ssub.s32 %s29, %s36
      %p169 = scmp.eq.s32.totalorder %s168, 0
      %s171 = sadd.s32 %s170, 1
      %s172 = scalar_select %p169, %s170, %s171
      %p175 = pneg %p169
      %p176 = scmp.eq.s32.totalorder %s29, 1
      %p177 = por %p175, %p176
      %p178 = scmp.ne.s32.totalorder %s170, %s173
      %p179 = scmp.eq.s32.totalorder %s29, 0
      %p180 = por %p178, %p179
      %p181 = scmp.ne.s32.totalorder %s170, %s173
      %p182 = scmp.eq.s32.totalorder %s34, 1
      %p183 = por %p181, %p182
      %p184 = scmp.ne.s32.totalorder %s173, %s174
      %p185 = scmp.eq.s32.totalorder %s34, 0
      %p186 = por %p184, %p185
      %p187 = scmp.ne.s32.totalorder %s173, %s174
      %p188 = scmp.eq.s32.totalorder %s35, 1
      %p189 = por %p187, %p188
      %p191 = scmp.ne.s32.totalorder %s174, %s190
      %p192 = scmp.eq.s32.totalorder %s35, 0
      %p193 = por %p191, %p192
      %s194 = ssub.s32 %s29, %s36
      %p195 = scmp.eq.s32.totalorder %s194, 0
      %s197 = sadd.s32 %s196, 1
      %s198 = scalar_select %p195, %s196, %s197
      %p201 = pneg %p195
      %p202 = scmp.eq.s32.totalorder %s29, 1
      %p203 = por %p201, %p202
      %p204 = scmp.ne.s32.totalorder %s196, %s199
      %p205 = scmp.eq.s32.totalorder %s29, 0
      %p206 = por %p204, %p205
      %p207 = scmp.ne.s32.totalorder %s196, %s199
      %p208 = scmp.eq.s32.totalorder %s34, 1
      %p209 = por %p207, %p208
      %p210 = scmp.ne.s32.totalorder %s199, %s200
      %p211 = scmp.eq.s32.totalorder %s34, 0
      %p212 = por %p210, %p211
      %p213 = scmp.ne.s32.totalorder %s199, %s200
      %p214 = scmp.eq.s32.totalorder %s35, 1
      %p215 = por %p213, %p214
      %p217 = scmp.ne.s32.totalorder %s200, %s216
      %p218 = scmp.eq.s32.totalorder %s35, 0
      %p219 = por %p217, %p218
      %s220 = ssub.s32 %s29, %s36
      %p221 = scmp.eq.s32.totalorder %s220, 0
      %s223 = sadd.s32 %s222, 1
      %s224 = scalar_select %p221, %s222, %s223
      %p227 = pneg %p221
      %p228 = scmp.eq.s32.totalorder %s29, 1
      %p229 = por %p227, %p228
      %p230 = scmp.ne.s32.totalorder %s222, %s225
      %p231 = scmp.eq.s32.totalorder %s29, 0
      %p232 = por %p230, %p231
      %p233 = scmp.ne.s32.totalorder %s222, %s225
      %p234 = scmp.eq.s32.totalorder %s34, 1
      %p235 = por %p233, %p234
      %p236 = scmp.ne.s32.totalorder %s225, %s226
      %p237 = scmp.eq.s32.totalorder %s34, 0
      %p238 = por %p236, %p237
      %p239 = scmp.ne.s32.totalorder %s225, %s226
      %p240 = scmp.eq.s32.totalorder %s35, 1
      %p241 = por %p239, %p240
      %p243 = scmp.ne.s32.totalorder %s226, %s242
      %p244 = scmp.eq.s32.totalorder %s35, 0
      %p245 = por %p243, %p244
      %s246 = ssub.s32 %s29, %s36
      %p247 = scmp.eq.s32.totalorder %s246, 0
      %s249 = sadd.s32 %s248, 1
      %s250 = scalar_select %p247, %s248, %s249
      %p253 = pneg %p247
      %p254 = scmp.eq.s32.totalorder %s29, 1
      %p255 = por %p253, %p254
      %p256 = scmp.ne.s32.totalorder %s248, %s251
      %p257 = scmp.eq.s32.totalorder %s29, 0
      %p258 = por %p256, %p257
      %p259 = scmp.ne.s32.totalorder %s248, %s251
      %p260 = scmp.eq.s32.totalorder %s34, 1
      %p261 = por %p259, %p260
      %p262 = scmp.ne.s32.totalorder %s251, %s252
      %p263 = scmp.eq.s32.totalorder %s34, 0
      %p264 = por %p262, %p263
      %p265 = scmp.ne.s32.totalorder %s251, %s252
      %p266 = scmp.eq.s32.totalorder %s35, 1
      %p267 = por %p265, %p266
      %p269 = scmp.ne.s32.totalorder %s252, %s268
      %p270 = scmp.eq.s32.totalorder %s35, 0
      %p271 = por %p269, %p270
      %s272 = ssub.s32 %s29, %s36
      %p273 = scmp.eq.s32.totalorder %s272, 0
      %s275 = sadd.s32 %s274, 1
      %s276 = scalar_select %p273, %s274, %s275
      %p279 = pneg %p273
      %p280 = scmp.eq.s32.totalorder %s29, 1
      %p281 = por %p279, %p280
      %p282 = scmp.ne.s32.totalorder %s274, %s277
      %p283 = scmp.eq.s32.totalorder %s29, 0
      %p284 = por %p282, %p283
      %p285 = scmp.ne.s32.totalorder %s274, %s277
      %p286 = scmp.eq.s32.totalorder %s34, 1
      %p287 = por %p285, %p286
      %p288 = scmp.ne.s32.totalorder %s277, %s278
      %p289 = scmp.eq.s32.totalorder %s34, 0
      %p290 = por %p288, %p289
      %p291 = scmp.ne.s32.totalorder %s277, %s278
      %p292 = scmp.eq.s32.totalorder %s35, 1
      %p293 = por %p291, %p292
      %p295 = scmp.ne.s32.totalorder %s278, %s294
      %p296 = scmp.eq.s32.totalorder %s35, 0
      %p297 = por %p295, %p296
      %s298 = ssub.s32 %s29, %s36
      %p299 = scmp.eq.s32.totalorder %s298, 0
      %s301 = sadd.s32 %s300, 1
      %s302 = scalar_select %p299, %s300, %s301
      %p305 = pneg %p299
      %p306 = scmp.eq.s32.totalorder %s29, 1
      %p307 = por %p305, %p306
      %p308 = scmp.ne.s32.totalorder %s300, %s303
      %p309 = scmp.eq.s32.totalorder %s29, 0
      %p310 = por %p308, %p309
      %p311 = scmp.ne.s32.totalorder %s300, %s303
      %p312 = scmp.eq.s32.totalorder %s34, 1
      %p313 = por %p311, %p312
      %p314 = scmp.ne.s32.totalorder %s303, %s304
      %p315 = scmp.eq.s32.totalorder %s34, 0
      %p316 = por %p314, %p315
      %p317 = scmp.ne.s32.totalorder %s303, %s304
      %p318 = scmp.eq.s32.totalorder %s35, 1
      %p319 = por %p317, %p318
      %p321 = scmp.ne.s32.totalorder %s304, %s320
      %p322 = scmp.eq.s32.totalorder %s35, 0
      %p323 = por %p321, %p322
      %s324 = ssub.s32 %s29, %s36
      %p325 = scmp.eq.s32.totalorder %s324, 0
      %s327 = sadd.s32 %s326, 1
      %s328 = scalar_select %p325, %s326, %s327
      %p331 = pneg %p325
      %p332 = scmp.eq.s32.totalorder %s29, 1
      %p333 = por %p331, %p332
      %p334 = scmp.ne.s32.totalorder %s326, %s329
      %p335 = scmp.eq.s32.totalorder %s29, 0
      %p336 = por %p334, %p335
      %p337 = scmp.ne.s32.totalorder %s326, %s329
      %p338 = scmp.eq.s32.totalorder %s34, 1
      %p339 = por %p337, %p338
      %p340 = scmp.ne.s32.totalorder %s329, %s330
      %p341 = scmp.eq.s32.totalorder %s34, 0
      %p342 = por %p340, %p341
      %p343 = scmp.ne.s32.totalorder %s329, %s330
      %p344 = scmp.eq.s32.totalorder %s35, 1
      %p345 = por %p343, %p344
      %p347 = scmp.ne.s32.totalorder %s330, %s346
      %p348 = scmp.eq.s32.totalorder %s35, 0
      %p349 = por %p347, %p348
      %s350 = ssub.s32 %s29, %s36
      %p351 = scmp.eq.s32.totalorder %s350, 0
      %s353 = sadd.s32 %s352, 1
      %s354 = scalar_select %p351, %s352, %s353
      %p357 = pneg %p351
      %p358 = scmp.eq.s32.totalorder %s29, 1
      %p359 = por %p357, %p358
      %p360 = scmp.ne.s32.totalorder %s352, %s355
      %p361 = scmp.eq.s32.totalorder %s29, 0
      %p362 = por %p360, %p361
      %p363 = scmp.ne.s32.totalorder %s352, %s355
      %p364 = scmp.eq.s32.totalorder %s34, 1
      %p365 = por %p363, %p364
      %p366 = scmp.ne.s32.totalorder %s355, %s356
      %p367 = scmp.eq.s32.totalorder %s34, 0
      %p368 = por %p366, %p367
      %p369 = scmp.ne.s32.totalorder %s355, %s356
      %p370 = scmp.eq.s32.totalorder %s35, 1
      %p371 = por %p369, %p370
      %p373 = scmp.ne.s32.totalorder %s356, %s372
      %p374 = scmp.eq.s32.totalorder %s35, 0
      %p375 = por %p373, %p374
      %s376 = ssub.s32 %s29, %s36
      %p377 = scmp.eq.s32.totalorder %s376, 0
      %s379 = sadd.s32 %s378, 1
      %s380 = scalar_select %p377, %s378, %s379
      %p383 = pneg %p377
      %p384 = scmp.eq.s32.totalorder %s29, 1
      %p385 = por %p383, %p384
      %p386 = scmp.ne.s32.totalorder %s378, %s381
      %p387 = scmp.eq.s32.totalorder %s29, 0
      %p388 = por %p386, %p387
      %p389 = scmp.ne.s32.totalorder %s378, %s381
      %p390 = scmp.eq.s32.totalorder %s34, 1
      %p391 = por %p389, %p390
      %p392 = scmp.ne.s32.totalorder %s381, %s382
      %p393 = scmp.eq.s32.totalorder %s34, 0
      %p394 = por %p392, %p393
      %p395 = scmp.ne.s32.totalorder %s381, %s382
      %p396 = scmp.eq.s32.totalorder %s35, 1
      %p397 = por %p395, %p396
      %p399 = scmp.ne.s32.totalorder %s382, %s398
      %p400 = scmp.eq.s32.totalorder %s35, 0
      %p401 = por %p399, %p400
      %s402 = ssub.s32 %s29, %s36
      %p403 = scmp.eq.s32.totalorder %s402, 0
      %s405 = sadd.s32 %s404, 1
      %s406 = scalar_select %p403, %s404, %s405
      %p409 = pneg %p403
      %p410 = scmp.eq.s32.totalorder %s29, 1
      %p411 = por %p409, %p410
      %p412 = scmp.ne.s32.totalorder %s404, %s407
      %p413 = scmp.eq.s32.totalorder %s29, 0
      %p414 = por %p412, %p413
      %p415 = scmp.ne.s32.totalorder %s404, %s407
      %p416 = scmp.eq.s32.totalorder %s34, 1
      %p417 = por %p415, %p416
      %p418 = scmp.ne.s32.totalorder %s407, %s408
      %p419 = scmp.eq.s32.totalorder %s34, 0
      %p420 = por %p418, %p419
      %p421 = scmp.ne.s32.totalorder %s407, %s408
      %p422 = scmp.eq.s32.totalorder %s35, 1
      %p423 = por %p421, %p422
      %p425 = scmp.ne.s32.totalorder %s408, %s424
      %p426 = scmp.eq.s32.totalorder %s35, 0
      %p427 = por %p425, %p426
      %s428 = ssub.s32 %s29, %s36
      %p429 = scmp.eq.s32.totalorder %s428, 0
      %s431 = sadd.s32 %s430, 1
      %s432 = scalar_select %p429, %s430, %s431
      %p435 = pneg %p429
      %p436 = scmp.eq.s32.totalorder %s29, 1
      %p437 = por %p435, %p436
      %p438 = scmp.ne.s32.totalorder %s430, %s433
      %p439 = scmp.eq.s32.totalorder %s29, 0
      %p440 = por %p438, %p439
      %p441 = scmp.ne.s32.totalorder %s430, %s433
      %p442 = scmp.eq.s32.totalorder %s34, 1
      %p443 = por %p441, %p442
      %p444 = scmp.ne.s32.totalorder %s433, %s434
      %p445 = scmp.eq.s32.totalorder %s34, 0
      %p446 = por %p444, %p445
      %p447 = scmp.ne.s32.totalorder %s433, %s434
      %p448 = scmp.eq.s32.totalorder %s35, 1
      %p449 = por %p447, %p448
      %p451 = scmp.ne.s32.totalorder %s434, %s450
      %p452 = scmp.eq.s32.totalorder %s35, 0
      %p453 = por %p451, %p452
      %s455 = sadd.s32 %s454, 1
      %p458 = scmp.eq.s32.totalorder %s29, 1
      %p459 = scmp.ne.s32.totalorder %s454, %s456
      %p460 = scmp.eq.s32.totalorder %s29, 0
      %p461 = por %p459, %p460
      %p462 = scmp.ne.s32.totalorder %s454, %s456
      %p463 = scmp.eq.s32.totalorder %s34, 1
      %p464 = por %p462, %p463
      %p465 = scmp.ne.s32.totalorder %s456, %s457
      %p466 = scmp.eq.s32.totalorder %s34, 0
      %p467 = por %p465, %p466
      %p468 = scmp.ne.s32.totalorder %s456, %s457
      %p469 = scmp.eq.s32.totalorder %s35, 1
      %p470 = por %p468, %p469
      %p472 = scmp.ne.s32.totalorder %s457, %s471
      %p473 = scmp.eq.s32.totalorder %s35, 0
      %p474 = por %p472, %p473
      %p475 = scmp.le.s32.totalorder 1, %s29
      %p476 = scmp.lt.s32.totalorder %s29, 3
      %p477 = pnand %p475, %p476
      %p478 = pneg %p477
      // Predicated region
      $region9: #{forward.1} parent=5 // pred_check
        _
      $region10: #{forward.1} parent=5 // pred_check_branch
        %480 = sbr.rel (%p477) target = $region12
      $region11: #{forward.1} parent=5 // pred_region
        %s481 = ssub.s32 %s29, 1
        // Predicated region
        $region13: #{forward.1} parent=11 // pred_check
          %p482 = pneg %p50
        $region14: #{forward.1} parent=11 // pred_check_branch
          %484 = sbr.rel (%p482) target = $region16
        $region15: #{forward.1} parent=11 // pred_region
          _
        $region16: #{forward.1} parent=11 // pred_fallthru
          _
        // Predicated region
        $region17: #{forward.1} parent=11 // pred_check
          %p485 = pneg %p71
        $region18: #{forward.1} parent=11 // pred_check_branch
          %487 = sbr.rel (%p485) target = $region20
        $region19: #{forward.1} parent=11 // pred_region
          _
        $region20: #{forward.1} parent=11 // pred_fallthru
          _
        // Predicated region
        $region21: #{forward.1} parent=11 // pred_check
          %p488 = pneg %p92
        $region22: #{forward.1} parent=11 // pred_check_branch
          %490 = sbr.rel (%p488) target = $region24
        $region23: #{forward.1} parent=11 // pred_region
          _
        $region24: #{forward.1} parent=11 // pred_fallthru
          _
        // Predicated region
        $region25: #{forward.1} parent=11 // pred_check
          %p491 = pneg %p113
        $region26: #{forward.1} parent=11 // pred_check_branch
          %493 = sbr.rel (%p491) target = $region28
        $region27: #{forward.1} parent=11 // pred_region
          _
        $region28: #{forward.1} parent=11 // pred_fallthru
          _
        // Predicated region
        $region29: #{forward.1} parent=11 // pred_check
          %p494 = pneg %p134
        $region30: #{forward.1} parent=11 // pred_check_branch
          %496 = sbr.rel (%p494) target = $region32
        $region31: #{forward.1} parent=11 // pred_region
          _
        $region32: #{forward.1} parent=11 // pred_fallthru
          _
      $region12: #{forward.1} parent=5 // pred_fallthru
        _
      %p497 = scmp.lt.s32.totalorder %s29, 2
      // Predicated region
      $region33: #{forward.1} parent=5 // pred_check
        %p498 = pneg %p497
      $region34: #{forward.1} parent=5 // pred_check_branch
        %500 = sbr.rel (%p498) target = $region36
      $region35: #{forward.1} parent=5 // pred_region
        // Predicated region
        $region37: #{forward.1} parent=35 // pred_check
          %p501 = pneg %p154
        $region38: #{forward.1} parent=35 // pred_check_branch
          %503 = sbr.rel (%p501) target = $region40
        $region39: #{forward.1} parent=35 // pred_region
          %p504 = scmp.lt.s32.totalorder %s29, 1
          %s505 = scalar_select %p504, %s29, 1
          %s506 = smul.addr %s505, 48
          %s507 = smul.addr %s506, 4
          %s508 = scalar_lea.vmem %s5, %s507
        $region40: #{forward.1} parent=35 // pred_fallthru
          _
        // Predicated region
        $region41: #{forward.1} parent=35 // pred_check
          %p509 = pneg %p180
        $region42: #{forward.1} parent=35 // pred_check_branch
          %511 = sbr.rel (%p509) target = $region44
        $region43: #{forward.1} parent=35 // pred_region
          %p512 = scmp.lt.s32.totalorder %s29, 1
          %s513 = scalar_select %p512, %s29, 1
          %s514 = smul.addr %s513, 3
          %s515 = scalar_lea.vmem %s6, %s514
        $region44: #{forward.1} parent=35 // pred_fallthru
          _
        // Predicated region
        $region45: #{forward.1} parent=35 // pred_check
          %p516 = pneg %p206
        $region46: #{forward.1} parent=35 // pred_check_branch
          %518 = sbr.rel (%p516) target = $region48
        $region47: #{forward.1} parent=35 // pred_region
          %s519 = sand.u32 %s196, 1
          %s520 = scalar_lea.sflag [#allocation4], %s519
          %s521 = sand.u32 %s196, 1
          %s522 = smul.addr %s521, 64
          %s523 = scalar_lea.vmem [#allocation3], %s522
          %s525 = ssub.s32 1024, 1024
          %526 = vsyncadd %s520, %s525
          %s527 = smul.addr %s29, 16
          %s528 = smul.addr %s527, 64
          %s529 = scalar_lea.hbm %s7, %s528
          %s530 = sshll.u32 %s523, 4
          %s531 = int_to_ptr.vmem [resolvable:$true] %s530
          %536 = dma.hbm_to_vmem [thread:$0]  %s529, 1024, %s531, %s520, 64, 64, 4
        $region48: #{forward.1} parent=35 // pred_fallthru
          _
        // Predicated region
        $region49: #{forward.1} parent=35 // pred_check
          %p537 = pneg %p232
        $region50: #{forward.1} parent=35 // pred_check_branch
          %539 = sbr.rel (%p537) target = $region52
        $region51: #{forward.1} parent=35 // pred_region
          %p540 = scmp.lt.s32.totalorder %s29, 1
          %s541 = scalar_select %p540, %s29, 1
          %s542 = scalar_lea.vmem %s8, %s541
        $region52: #{forward.1} parent=35 // pred_fallthru
          _
        // Predicated region
        $region53: #{forward.1} parent=35 // pred_check
          %p543 = pneg %p258
        $region54: #{forward.1} parent=35 // pred_check_branch
          %545 = sbr.rel (%p543) target = $region56
        $region55: #{forward.1} parent=35 // pred_region
          %p546 = scmp.lt.s32.totalorder %s29, 1
          %s547 = scalar_select %p546, %s29, 1
          %s548 = scalar_lea.vmem %s9, %s547
        $region56: #{forward.1} parent=35 // pred_fallthru
          _
        // Predicated region
        $region57: #{forward.1} parent=35 // pred_check
          %p549 = pneg %p284
        $region58: #{forward.1} parent=35 // pred_check_branch
          %551 = sbr.rel (%p549) target = $region60
        $region59: #{forward.1} parent=35 // pred_region
          %p552 = scmp.lt.s32.totalorder %s29, 1
          %s553 = scalar_select %p552, %s29, 1
          %s554 = scalar_lea.vmem %s10, %s553
        $region60: #{forward.1} parent=35 // pred_fallthru
          _
        // Predicated region
        $region61: #{forward.1} parent=35 // pred_check
          %p555 = pneg %p310
        $region62: #{forward.1} parent=35 // pred_check_branch
          %557 = sbr.rel (%p555) target = $region64
        $region63: #{forward.1} parent=35 // pred_region
          %s558 = sand.u32 %s29, 1
          %s559 = scalar_lea.sflag [#allocation6], %s558
          %s560 = sand.u32 %s300, 1
          %s561 = smul.addr %s560, 256
          %s562 = scalar_lea.vmem [#allocation5], %s561
          %s564 = ssub.s32 4096, 4096
          %565 = vsyncadd %s559, %s564
          %s566 = smul.addr %s29, 64
          %s567 = smul.addr %s566, 64
          %s568 = scalar_lea.hbm %s11, %s567
          %s569 = sshll.u32 %s562, 4
          %s570 = int_to_ptr.vmem [resolvable:$true] %s569
          %575 = dma.hbm_to_vmem [thread:$0]  %s568, 4096, %s570, %s559, 256, 256, 16
        $region64: #{forward.1} parent=35 // pred_fallthru
          _
        // Predicated region
        $region65: #{forward.1} parent=35 // pred_check
          %p576 = pneg %p336
        $region66: #{forward.1} parent=35 // pred_check_branch
          %578 = sbr.rel (%p576) target = $region68
        $region67: #{forward.1} parent=35 // pred_region
          %p579 = scmp.lt.s32.totalorder %s29, 1
          %s580 = scalar_select %p579, %s29, 1
          %s581 = smul.addr %s580, 4
          %s582 = scalar_lea.vmem %s12, %s581
        $region68: #{forward.1} parent=35 // pred_fallthru
          _
        // Predicated region
        $region69: #{forward.1} parent=35 // pred_check
          %p583 = pneg %p362
        $region70: #{forward.1} parent=35 // pred_check_branch
          %585 = sbr.rel (%p583) target = $region72
        $region71: #{forward.1} parent=35 // pred_region
          %s586 = sand.u32 %s29, 1
          %s587 = scalar_lea.sflag [#allocation6], %s586
          %s588 = sand.u32 %s352, 1
          %s589 = smul.addr %s588, 256
          %s590 = scalar_lea.vmem [#allocation7], %s589
          %s592 = ssub.s32 4096, 4096
          %593 = vsyncadd %s587, %s592
          %s594 = smul.addr %s29, 64
          %s595 = smul.addr %s594, 64
          %s596 = scalar_lea.hbm %s13, %s595
          %s597 = sshll.u32 %s590, 4
          %s598 = int_to_ptr.vmem [resolvable:$true] %s597
          %603 = dma.hbm_to_vmem [thread:$0]  %s596, 4096, %s598, %s587, 64, 64, 4
        $region72: #{forward.1} parent=35 // pred_fallthru
          _
        // Predicated region
        $region73: #{forward.1} parent=35 // pred_check
          %p604 = pneg %p388
        $region74: #{forward.1} parent=35 // pred_check_branch
          %606 = sbr.rel (%p604) target = $region76
        $region75: #{forward.1} parent=35 // pred_region
          %p607 = scmp.lt.s32.totalorder %s29, 1
          %s608 = scalar_select %p607, %s29, 1
          %s609 = scalar_lea.vmem %s14, %s608
        $region76: #{forward.1} parent=35 // pred_fallthru
          _
        // Predicated region
        $region77: #{forward.1} parent=35 // pred_check
          %p610 = pneg %p414
        $region78: #{forward.1} parent=35 // pred_check_branch
          %612 = sbr.rel (%p610) target = $region80
        $region79: #{forward.1} parent=35 // pred_region
          %p613 = scmp.lt.s32.totalorder %s29, 1
          %s614 = scalar_select %p613, %s29, 1
          %s615 = scalar_lea.vmem %s15, %s614
        $region80: #{forward.1} parent=35 // pred_fallthru
          _
        // Predicated region
        $region81: #{forward.1} parent=35 // pred_check
          %p616 = pneg %p440
        $region82: #{forward.1} parent=35 // pred_check_branch
          %618 = sbr.rel (%p616) target = $region84
        $region83: #{forward.1} parent=35 // pred_region
          %p619 = scmp.lt.s32.totalorder %s29, 1
          %s620 = scalar_select %p619, %s29, 1
          %s621 = scalar_lea.vmem %s16, %s620
        $region84: #{forward.1} parent=35 // pred_fallthru
          _
      $region36: #{forward.1} parent=5 // pred_fallthru
        _
      %p622 = scmp.le.s32.totalorder 1, %s29
      %p623 = scmp.lt.s32.totalorder %s29, 3
      %p624 = pnand %p622, %p623
      %p625 = pneg %p624
      // Predicated region
      $region85: #{forward.1} parent=5 // pred_check
        _
      $region86: #{forward.1} parent=5 // pred_check_branch
        %627 = sbr.rel (%p624) target = $region88
      $region87: #{forward.1} parent=5 // pred_region
        %s628 = ssub.s32 %s29, 1
        %s629 = sand.u32 %s199, 1
        %s630 = scalar_lea.sflag [#allocation4], %s629
        %s631 = sand.u32 %s199, 1
        %s632 = smul.addr %s631, 64
        %s633 = scalar_lea.vmem [#allocation3], %s632
        // Predicated region
        $region89: #{forward.1} parent=87 // pred_check
          %p634 = pneg %p212
        $region90: #{forward.1} parent=87 // pred_check_branch
          %636 = sbr.rel (%p634) target = $region92
        $region91: #{forward.1} parent=87 // pred_region
          %637 = dma.done %s630, 1024
        $region92: #{forward.1} parent=87 // pred_fallthru
          _
        %s638 = sand.u32 %s34, 1
        %s639 = scalar_lea.sflag [#allocation6], %s638
        %s640 = sand.u32 %s303, 1
        %s641 = smul.addr %s640, 256
        %s642 = scalar_lea.vmem [#allocation5], %s641
        // Predicated region
        $region93: #{forward.1} parent=87 // pred_check
          %p643 = pneg %p316
        $region94: #{forward.1} parent=87 // pred_check_branch
          %645 = sbr.rel (%p643) target = $region96
        $region95: #{forward.1} parent=87 // pred_region
          %646 = dma.done %s639, 4096
        $region96: #{forward.1} parent=87 // pred_fallthru
          _
        %s647 = sand.u32 %s34, 1
        %s648 = scalar_lea.sflag [#allocation6], %s647
        %s649 = sand.u32 %s355, 1
        %s650 = smul.addr %s649, 256
        %s651 = scalar_lea.vmem [#allocation7], %s650
        // Predicated region
        $region97: #{forward.1} parent=87 // pred_check
          %p652 = pneg %p368
        $region98: #{forward.1} parent=87 // pred_check_branch
          %654 = sbr.rel (%p652) target = $region100
        $region99: #{forward.1} parent=87 // pred_region
          %655 = dma.done %s648, 4096
        $region100: #{forward.1} parent=87 // pred_fallthru
          _
        %p656 = pneg %p50
        %p657 = pneg %p47
        %p658 = pneg %p71
        %p659 = pneg %p68
        %p660 = pneg %p92
        %p661 = pneg %p89
        %p662 = pneg %p113
        %p663 = pneg %p110
        %p664 = pneg %p134
        %p665 = pneg %p131
        %p666 = scmp.lt.s32.totalorder %s34, 1
        %s667 = scalar_select %p666, %s34, 1
        %s668 = smul.addr %s667, 48
        %s669 = smul.addr %s668, 4
        %s670 = scalar_lea.vmem %s5, %s669
        %p671 = pneg %p160
        %p672 = pneg %p157
        %p673 = scmp.lt.s32.totalorder %s34, 1
        %s674 = scalar_select %p673, %s34, 1
        %s675 = smul.addr %s674, 3
        %s676 = scalar_lea.vmem %s6, %s675
        %p677 = pneg %p186
        %p678 = pneg %p183
        %s679 = sand.u32 %s199, 1
        %s680 = scalar_lea.sflag [#allocation4], %s679
        %s681 = sand.u32 %s199, 1
        %s682 = smul.addr %s681, 64
        %s683 = scalar_lea.vmem [#allocation3], %s682
        %p684 = pneg %p212
        %p685 = pneg %p209
        %p686 = scmp.lt.s32.totalorder %s34, 1
        %s687 = scalar_select %p686, %s34, 1
        %s688 = scalar_lea.vmem %s8, %s687
        %p689 = pneg %p238
        %p690 = pneg %p235
        %p691 = scmp.lt.s32.totalorder %s34, 1
        %s692 = scalar_select %p691, %s34, 1
        %s693 = scalar_lea.vmem %s9, %s692
        %p694 = pneg %p264
        %p695 = pneg %p261
        %p696 = scmp.lt.s32.totalorder %s34, 1
        %s697 = scalar_select %p696, %s34, 1
        %s698 = scalar_lea.vmem %s10, %s697
        %p699 = pneg %p290
        %p700 = pneg %p287
        %s701 = sand.u32 %s34, 1
        %s702 = scalar_lea.sflag [#allocation6], %s701
        %s703 = sand.u32 %s303, 1
        %s704 = smul.addr %s703, 256
        %s705 = scalar_lea.vmem [#allocation5], %s704
        %p706 = pneg %p316
        %p707 = pneg %p313
        %p708 = scmp.lt.s32.totalorder %s34, 1
        %s709 = scalar_select %p708, %s34, 1
        %s710 = smul.addr %s709, 4
        %s711 = scalar_lea.vmem %s12, %s710
        %p712 = pneg %p342
        %p713 = pneg %p339
        %s714 = sand.u32 %s34, 1
        %s715 = scalar_lea.sflag [#allocation6], %s714
        %s716 = sand.u32 %s355, 1
        %s717 = smul.addr %s716, 256
        %s718 = scalar_lea.vmem [#allocation7], %s717
        %p719 = pneg %p368
        %p720 = pneg %p365
        %p721 = scmp.lt.s32.totalorder %s34, 1
        %s722 = scalar_select %p721, %s34, 1
        %s723 = scalar_lea.vmem %s14, %s722
        %p724 = pneg %p394
        %p725 = pneg %p391
        %p726 = scmp.lt.s32.totalorder %s34, 1
        %s727 = scalar_select %p726, %s34, 1
        %s728 = scalar_lea.vmem %s15, %s727
        %p729 = pneg %p420
        %p730 = pneg %p417
        %p731 = scmp.lt.s32.totalorder %s34, 1
        %s732 = scalar_select %p731, %s34, 1
        %s733 = scalar_lea.vmem %s16, %s732
        %p734 = pneg %p446
        %p735 = pneg %p443
        %p736 = pneg %p467
        %p737 = pneg %p464
        %p738 = scmp.lt.s32.totalorder %s34, 1
        %s739 = scalar_select %p738, %s34, 1
        %s740 = smul.addr %s739, 48
        %s741 = smul.addr %s740, 4
        %s742 = scalar_lea.vmem %s5, %s741
        %p743 = scmp.lt.s32.totalorder %s34, 1
        %s744 = scalar_select %p743, %s34, 1
        %s745 = smul.addr %s744, 3
        %s746 = scalar_lea.vmem %s6, %s745
        %p747 = scmp.lt.s32.totalorder %s34, 1
        %s748 = scalar_select %p747, %s34, 1
        %s749 = scalar_lea.vmem %s8, %s748
        %p750 = scmp.lt.s32.totalorder %s34, 1
        %s751 = scalar_select %p750, %s34, 1
        %s752 = scalar_lea.vmem %s9, %s751
        %p753 = scmp.lt.s32.totalorder %s34, 1
        %s754 = scalar_select %p753, %s34, 1
        %s755 = scalar_lea.vmem %s10, %s754
        %p756 = scmp.lt.s32.totalorder %s34, 1
        %s757 = scalar_select %p756, %s34, 1
        %s758 = smul.addr %s757, 4
        %s759 = scalar_lea.vmem %s12, %s758
        %p760 = scmp.lt.s32.totalorder %s34, 1
        %s761 = scalar_select %p760, %s34, 1
        %s762 = scalar_lea.vmem %s14, %s761
        %p763 = scmp.lt.s32.totalorder %s34, 1
        %s764 = scalar_select %p763, %s34, 1
        %s765 = scalar_lea.vmem %s15, %s764
        %p766 = scmp.lt.s32.totalorder %s34, 1
        %s767 = scalar_select %p766, %s34, 1
        %s768 = scalar_lea.vmem %s16, %s767
        %p770 = scmp.eq.s32.totalorder %s34, 0
        // Predicated region
        $region101: #{forward.1} parent=87 // pred_check
          %p771 = pneg %p770
        $region102: #{forward.1} parent=87 // pred_check_branch
          %773 = sbr.rel (%p771) target = $region104
        $region103: #{forward.1} parent=87 // pred_region
          %v774 = vld [vmem:[%s0] sm:$0xff]
          %v775 = vld [vmem:[%s0 + $0x8] sm:$0xff]
          %v776 = vld [vmem:[%s0 + $0x10] sm:$0xff]
          %v777 = vld [vmem:[%s0 + $0x18] sm:$0xff]
          %v778 = vld [vmem:[%s1] sm:$0xff]
          %v779 = vadd.f32 %v774, %v778
          %v780 = vadd.f32 %v775, %v778
          %v781 = vadd.f32 %v776, %v778
          %v782 = vadd.f32 %v777, %v778
          %v783 = vld [vmem:[%s2] sm:$0x1]
          %v784 = vld [vmem:[%s3] sm:$0x1]
          %785 = vadd.xlane.f32.xlu0 %v779
          %v786 = vpop.xlane.xlu0 %785
          %787 = vadd.xlane.f32.xlu0 %v780
          %v788 = vpop.xlane.xlu0 %787
          %789 = vadd.xlane.f32.xlu0 %v781
          %v790 = vpop.xlane.xlu0 %789
          %791 = vadd.xlane.f32.xlu0 %v782
          %v792 = vpop.xlane.xlu0 %791
          %v793 = vrcp.pop 128.0
          %v794 = vmul.f32 %v786, %v793
          %v795 = vmul.f32 %v788, %v793
          %v796 = vmul.f32 %v790, %v793
          %v797 = vmul.f32 %v792, %v793
          %v798 = vmul.f32 %v779, %v779
          %v799 = vmul.f32 %v780, %v780
          %v800 = vmul.f32 %v781, %v781
          %v801 = vmul.f32 %v782, %v782
          %802 = vadd.xlane.f32.xlu0 %v798
          %v803 = vpop.xlane.xlu0 %802
          %804 = vadd.xlane.f32.xlu0 %v799
          %v805 = vpop.xlane.xlu0 %804
          %806 = vadd.xlane.f32.xlu0 %v800
          %v807 = vpop.xlane.xlu0 %806
          %808 = vadd.xlane.f32.xlu0 %v801
          %v809 = vpop.xlane.xlu0 %808
          %v810 = vmul.f32 %v803, %v793
          %v811 = vmul.f32 %v805, %v793
          %v812 = vmul.f32 %v807, %v793
          %v813 = vmul.f32 %v809, %v793
          %v814 = vmul.f32 %v794, %v794
          %v815 = vmul.f32 %v795, %v795
          %v816 = vmul.f32 %v796, %v796
          %v817 = vmul.f32 %v797, %v797
          %v818 = vsub.f32 %v810, %v814
          %v819 = vsub.f32 %v811, %v815
          %v820 = vsub.f32 %v812, %v816
          %v821 = vsub.f32 %v813, %v817
          %v822 = vsub.f32 %v779, %v794
          %v823 = vsub.f32 %v780, %v795
          %v824 = vsub.f32 %v781, %v796
          %v825 = vsub.f32 %v782, %v797
          %v826 = vadd.f32 %v818, 1e-12
          %v827 = vadd.f32 %v819, 1e-12
          %v828 = vadd.f32 %v820, 1e-12
          %v829 = vadd.f32 %v821, 1e-12
          %v830 = vrsqrt.pop %v826
          %v831 = vrsqrt.pop %v827
          %v832 = vrsqrt.pop %v828
          %v833 = vrsqrt.pop %v829
          %v834 = vmul.f32 %v822, %v830
          %v835 = vmul.f32 %v823, %v831
          %v836 = vmul.f32 %v824, %v832
          %v837 = vmul.f32 %v825, %v833
          %v839 = vlaneseq
          %v840 = vshrl.u32 %v839, 7
          %v841 = vsub.s32 0, %v840
          %v842 = vrot.slane %v783, %v841
          %v844 = vmul.f32 %v834, %v842
          %v845 = vmul.f32 %v835, %v842
          %v846 = vmul.f32 %v836, %v842
          %v847 = vmul.f32 %v837, %v842
          %v849 = vlaneseq
          %v850 = vshrl.u32 %v849, 7
          %v851 = vsub.s32 0, %v850
          %v852 = vrot.slane %v784, %v851
          %v854 = vadd.f32 %v844, %v852
          %v855 = vadd.f32 %v845, %v852
          %v856 = vadd.f32 %v846, %v852
          %v857 = vadd.f32 %v847, %v852
          %858 = vst [vmem:[#allocation2] sm:$0xff] %v854
          %859 = vst [vmem:[#allocation2 + $0x8] sm:$0xff] %v855
          %860 = vst [vmem:[#allocation2 + $0x10] sm:$0xff] %v856
          %861 = vst [vmem:[#allocation2 + $0x18] sm:$0xff] %v857
          %v866 = vrot.slane %v855, 7
          %vm867 = vcmask 1041409
          %v868 = vsel %vm867, %v866, %v854
          %v869 = vrot.slane %v856, 6
          %vm870 = vcmask 1042434
          %v871 = vsel %vm870, %v869, %v868
          %v872 = vrot.slane %v857, 5
          %vm873 = vcmask 1043459
          %v874 = vsel %vm873, %v872, %v871
          %876 = vst [vmem:[%s17] sm:$0xf] %v874
        $region104: #{forward.1} parent=87 // pred_fallthru
          _
        %v877 = vld [vmem:[#allocation2] sm:$0xff]
        %v878 = vld [vmem:[#allocation2 + $0x8] sm:$0xff]
        %v879 = vld [vmem:[#allocation2 + $0x10] sm:$0xff]
        %v880 = vld [vmem:[#allocation2 + $0x18] sm:$0xff]
        %v881 = vpack.c.bf16 %v878, %v877
        %v882 = vpack.c.bf16 %v880, %v879
        %v883 = vld [vmem:[%s742] sm:$0xff]
        %v884 = vld [vmem:[%s742 + $0x8] sm:$0xf]
        %v885 = vld [vmem:[%s742 + $0xc] sm:$0xff]
        %v886 = vld [vmem:[%s742 + $0x14] sm:$0xf]
        %v887 = vld [vmem:[%s742 + $0x18] sm:$0xff]
        %v888 = vld [vmem:[%s742 + $0x20] sm:$0xf]
        %v889 = vld [vmem:[%s742 + $0x24] sm:$0xff]
        %v890 = vld [vmem:[%s742 + $0x2c] sm:$0xf]
        %v891 = vld [vmem:[%s742 + $0x30] sm:$0xff]
        %v892 = vld [vmem:[%s742 + $0x38] sm:$0xf]
        %v893 = vld [vmem:[%s742 + $0x3c] sm:$0xff]
        %v894 = vld [vmem:[%s742 + $0x44] sm:$0xf]
        %v895 = vld [vmem:[%s742 + $0x48] sm:$0xff]
        %v896 = vld [vmem:[%s742 + $0x50] sm:$0xf]
        %v897 = vld [vmem:[%s742 + $0x54] sm:$0xff]
        %v898 = vld [vmem:[%s742 + $0x5c] sm:$0xf]
        %v899 = vld [vmem:[%s742 + $0x60] sm:$0xff]
        %v900 = vld [vmem:[%s742 + $0x68] sm:$0xf]
        %v901 = vld [vmem:[%s742 + $0x6c] sm:$0xff]
        %v902 = vld [vmem:[%s742 + $0x74] sm:$0xf]
        %v903 = vld [vmem:[%s742 + $0x78] sm:$0xff]
        %v904 = vld [vmem:[%s742 + $0x80] sm:$0xf]
        %v905 = vld [vmem:[%s742 + $0x84] sm:$0xff]
        %v906 = vld [vmem:[%s742 + $0x8c] sm:$0xf]
        %v907 = vld [vmem:[%s742 + $0x90] sm:$0xff]
        %v908 = vld [vmem:[%s742 + $0x98] sm:$0xf]
        %v909 = vld [vmem:[%s742 + $0x9c] sm:$0xff]
        %v910 = vld [vmem:[%s742 + $0xa4] sm:$0xf]
        %v911 = vld [vmem:[%s742 + $0xa8] sm:$0xff]
        %v912 = vld [vmem:[%s742 + $0xb0] sm:$0xf]
        %v913 = vld [vmem:[%s742 + $0xb4] sm:$0xff]
        %v914 = vld [vmem:[%s742 + $0xbc] sm:$0xf]
        %v915 = vld [vmem:[%s746] sm:$0x7]
        %v917 = vlaneseq
        %v918 = vshrl.u32 %v917, 7
        %v919 = vsub.s32 0, %v918
        %v920 = vrot.slane %v915, %v919
        %v921 = vlaneseq
        %v922 = vshrl.u32 %v921, 7
        %v923 = vsub.s32 1, %v922
        %v924 = vrot.slane %v915, %v923
        %v925 = vlaneseq
        %v926 = vshrl.u32 %v925, 7
        %v927 = vsub.s32 2, %v926
        %v928 = vrot.slane %v915, %v927
        %v964 = vunpack.c.l.b16 %v883
        %v965 = vunpack.c.h.b16 %v883
        %v966 = vunpack.c.l.b16 %v884
        %v967 = vunpack.c.l.b16 %v885
        %v968 = vunpack.c.h.b16 %v885
        %v969 = vunpack.c.l.b16 %v886
        %v970 = vunpack.c.l.b16 %v887
        %v971 = vunpack.c.h.b16 %v887
        %v972 = vunpack.c.l.b16 %v888
        %v973 = vunpack.c.l.b16 %v889
        %v974 = vunpack.c.h.b16 %v889
        %v975 = vunpack.c.l.b16 %v890
        %v976 = vunpack.c.l.b16 %v891
        %v977 = vunpack.c.h.b16 %v891
        %v978 = vunpack.c.l.b16 %v892
        %v979 = vunpack.c.l.b16 %v893
        %v980 = vunpack.c.h.b16 %v893
        %v981 = vunpack.c.l.b16 %v894
        %v982 = vunpack.c.l.b16 %v895
        %v983 = vunpack.c.h.b16 %v895
        %v984 = vunpack.c.l.b16 %v896
        %v985 = vunpack.c.l.b16 %v897
        %v986 = vunpack.c.h.b16 %v897
        %v987 = vunpack.c.l.b16 %v898
        %v988 = vunpack.c.l.b16 %v899
        %v989 = vunpack.c.h.b16 %v899
        %v990 = vunpack.c.l.b16 %v900
        %v991 = vunpack.c.l.b16 %v901
        %v992 = vunpack.c.h.b16 %v901
        %v993 = vunpack.c.l.b16 %v902
        %v994 = vunpack.c.l.b16 %v903
        %v995 = vunpack.c.h.b16 %v903
        %v996 = vunpack.c.l.b16 %v904
        %v997 = vunpack.c.l.b16 %v905
        %v998 = vunpack.c.h.b16 %v905
        %v999 = vunpack.c.l.b16 %v906
        %v1000 = vunpack.c.l.b16 %v907
        %v1001 = vunpack.c.h.b16 %v907
        %v1002 = vunpack.c.l.b16 %v908
        %v1003 = vunpack.c.l.b16 %v909
        %v1004 = vunpack.c.h.b16 %v909
        %v1005 = vunpack.c.l.b16 %v910
        %v1006 = vunpack.c.l.b16 %v911
        %v1007 = vunpack.c.h.b16 %v911
        %v1008 = vunpack.c.l.b16 %v912
        %v1009 = vunpack.c.l.b16 %v913
        %v1010 = vunpack.c.h.b16 %v913
        %v1011 = vunpack.c.l.b16 %v914
        %v1012 = vpack.c.b16 %v967, %v964
        %v1013 = vpack.c.b16 %v968, %v965
        %v1014 = vpack.c.b16 %v969, %v966
        %v1015 = vpack.c.b16 %v973, %v970
        %v1016 = vpack.c.b16 %v974, %v971
        %v1017 = vpack.c.b16 %v975, %v972
        %v1018 = vpack.c.b16 %v979, %v976
        %v1019 = vpack.c.b16 %v980, %v977
        %v1020 = vpack.c.b16 %v981, %v978
        %v1021 = vpack.c.b16 %v985, %v982
        %v1022 = vpack.c.b16 %v986, %v983
        %v1023 = vpack.c.b16 %v987, %v984
        %v1024 = vpack.c.b16 %v991, %v988
        %v1025 = vpack.c.b16 %v992, %v989
        %v1026 = vpack.c.b16 %v993, %v990
        %v1027 = vpack.c.b16 %v997, %v994
        %v1028 = vpack.c.b16 %v998, %v995
        %v1029 = vpack.c.b16 %v999, %v996
        %v1030 = vpack.c.b16 %v1003, %v1000
        %v1031 = vpack.c.b16 %v1004, %v1001
        %v1032 = vpack.c.b16 %v1005, %v1002
        %v1033 = vpack.c.b16 %v1009, %v1006
        %v1034 = vpack.c.b16 %v1010, %v1007
        %v1035 = vpack.c.b16 %v1011, %v1008
        %1060 = vmatprep.subr.bf16.mxu0 %v1034
        %1061 = vmatpush1.bf16.msra.mxu0 %v1033
        %1062 = vmatprep.subr.bf16.mxu0 %v1031
        %1063 = vmatpush1.bf16.msra.mxu0 %v1030
        %1064 = vmatprep.subr.bf16.mxu0 %v1028
        %1065 = vmatpush1.bf16.msra.mxu0 %v1027
        %1066 = vmatprep.subr.bf16.mxu0 %v1025
        %1067 = vmatpush1.bf16.msra.mxu0 %v1024
        %1068 = vmatprep.subr.bf16.mxu0 %v1022
        %1069 = vmatpush1.bf16.msra.mxu0 %v1021
        %1070 = vmatprep.subr.bf16.mxu0 %v1019
        %1071 = vmatpush1.bf16.msra.mxu0 %v1018
        %1072 = vmatprep.subr.bf16.mxu0 %v1016
        %1073 = vmatpush1.bf16.msra.mxu0 %v1015
        %1074 = vmatprep.subr.bf16.mxu0 %v1013
        %1075 = vmatpush1.bf16.msra.mxu0 %v1012
        %1076 = vmatprep.subr.bf16.mxu0 0
        %1077 = vmatpush2.bf16.msra.mxu0 0
        %1078 = vmatprep.subr.bf16.mxu0 0
        %1079 = vmatpush2.bf16.msra.mxu0 0
        %1080 = vmatprep.subr.bf16.mxu0 0
        %1081 = vmatpush2.bf16.msra.mxu0 0
        %1082 = vmatprep.subr.bf16.mxu0 0
        %1083 = vmatpush2.bf16.msra.mxu0 0
        %1084 = vmatprep.subr.bf16.mxu0 0
        %1085 = vmatpush2.bf16.msra.mxu0 0
        %1086 = vmatprep.subr.bf16.mxu0 0
        %1087 = vmatpush2.bf16.msra.mxu0 0
        %1088 = vmatprep.subr.bf16.mxu0 0
        %1089 = vmatpush2.bf16.msra.mxu0 0
        %1090 = vmatprep.subr.bf16.mxu0 0
        %1091 = vmatpush2.bf16.msra.mxu0 0
        %1092 = vmatprep.mubr.bf16.mxu0 0
        %1093 = vmatmul.mubr.bf16.gmra.mxu0 %v881
        %v1094 = vpop.f32.mrf.mxu0
        %v1095 = vadd.f32 %v920, %v1094
        %v1096 = vpop.f32.mrf.mxu0
        %v1097 = vadd.f32 %v924, %v1096
        %v1098 = vpop.f32.mrf.mxu0
        %v1099 = vadd.f32 %v920, %v1098
        %v1100 = vpop.f32.mrf.mxu0
        %v1101 = vadd.f32 %v924, %v1100
        %1102 = vmatprep.mubr.bf16.mxu0 0
        %1103 = vmatmul.mubr.bf16.gmra.mxu0 %v882
        %v1104 = vpop.f32.mrf.mxu0
        %v1105 = vadd.f32 %v920, %v1104
        %v1106 = vpop.f32.mrf.mxu0
        %v1107 = vadd.f32 %v924, %v1106
        %v1108 = vpop.f32.mrf.mxu0
        %v1109 = vadd.f32 %v920, %v1108
        %v1110 = vpop.f32.mrf.mxu0
        %v1111 = vadd.f32 %v924, %v1110
        %1112 = vdwg.mxu0
        %1113 = vmatprep.subr.bf16.mxu0 0
        %1114 = vmatpush1.bf16.msra.mxu0 %v1035
        %1115 = vmatprep.subr.bf16.mxu0 0
        %1116 = vmatpush1.bf16.msra.mxu0 %v1032
        %1117 = vmatprep.subr.bf16.mxu0 0
        %1118 = vmatpush1.bf16.msra.mxu0 %v1029
        %1119 = vmatprep.subr.bf16.mxu0 0
        %1120 = vmatpush1.bf16.msra.mxu0 %v1026
        %1121 = vmatprep.subr.bf16.mxu0 0
        %1122 = vmatpush1.bf16.msra.mxu0 %v1023
        %1123 = vmatprep.subr.bf16.mxu0 0
        %1124 = vmatpush1.bf16.msra.mxu0 %v1020
        %1125 = vmatprep.subr.bf16.mxu0 0
        %1126 = vmatpush1.bf16.msra.mxu0 %v1017
        %1127 = vmatprep.subr.bf16.mxu0 0
        %1128 = vmatpush1.bf16.msra.mxu0 %v1014
        %1129 = vmatprep.subr.bf16.mxu0 0
        %1130 = vmatpush2.bf16.msra.mxu0 0
        %1131 = vmatprep.subr.bf16.mxu0 0
        %1132 = vmatpush2.bf16.msra.mxu0 0
        %1133 = vmatprep.subr.bf16.mxu0 0
        %1134 = vmatpush2.bf16.msra.mxu0 0
        %1135 = vmatprep.subr.bf16.mxu0 0
        %1136 = vmatpush2.bf16.msra.mxu0 0
        %1137 = vmatprep.subr.bf16.mxu0 0
        %1138 = vmatpush2.bf16.msra.mxu0 0
        %1139 = vmatprep.subr.bf16.mxu0 0
        %1140 = vmatpush2.bf16.msra.mxu0 0
        %1141 = vmatprep.subr.bf16.mxu0 0
        %1142 = vmatpush2.bf16.msra.mxu0 0
        %1143 = vmatprep.subr.bf16.mxu0 0
        %1144 = vmatpush2.bf16.msra.mxu0 0
        %1145 = vmatprep.mubr.bf16.mxu0 0
        %1146 = vmatmul.mubr.bf16.gmra.mxu0 %v881
        %v1147 = vpop.f32.mrf.mxu0
        %v1148 = vadd.f32 %v928, %v1147
        %v1149 = vpop.f32.mrf.mxu0
        %v1150 = vpop.f32.mrf.mxu0
        %v1151 = vadd.f32 %v928, %v1150
        %v1152 = vpop.f32.mrf.mxu0
        %1153 = vmatprep.mubr.bf16.mxu0 0
        %1154 = vmatmul.mubr.bf16.gmra.mxu0 %v882
        %v1155 = vpop.f32.mrf.mxu0
        %v1156 = vadd.f32 %v928, %v1155
        %v1157 = vpop.f32.mrf.mxu0
        %v1158 = vpop.f32.mrf.mxu0
        %v1159 = vadd.f32 %v928, %v1158
        %v1160 = vpop.f32.mrf.mxu0
        %1161 = vdwg.mxu0
        %v1162 = vpack.c.bf16 %v1095, %v1095
        %v1163 = vpack.c.bf16 %v1097, %v1097
        %v1164 = vpack.c.bf16 %v1148, %v1148
        %v1165 = vpack.c.bf16 %v1099, %v1099
        %v1166 = vpack.c.bf16 %v1101, %v1101
        %v1167 = vpack.c.bf16 %v1151, %v1151
        %v1168 = vpack.c.bf16 %v1105, %v1105
        %v1169 = vpack.c.bf16 %v1107, %v1107
        %v1170 = vpack.c.bf16 %v1156, %v1156
        %v1171 = vpack.c.bf16 %v1109, %v1109
        %v1172 = vpack.c.bf16 %v1111, %v1111
        %v1173 = vpack.c.bf16 %v1159, %v1159
        %v1174 = vld [vmem:[%s4] sm:$0xf]
        %v1177 = vunpack.c.l.s4 1966171168
        %v1178 = vunpack.c.0.s8 %v1177
        %v1179 = vlaneseq
        %v1180 = vshrl.u32 %v1179, 7
        %v1181 = vsub.s32 %v1178, %v1180
        %v1182 = vrot.slane %v1174, %v1181
        %v1183 = vcombine.high %v1182, %v1182
        %v1185 = vunpack.c.l.s4 1966171168
        %v1186 = vunpack.c.0.s8 %v1185
        %v1187 = vlaneseq
        %v1188 = vshrl.u32 %v1187, 7
        %v1189 = vsub.s32 %v1186, %v1188
        %v1190 = vrot.slane %v1182, %v1189
        %v1192 = vunpack.c.l.s4 1966171168
        %v1193 = vunpack.c.0.s8 %v1192
        %v1194 = vlaneseq
        %v1195 = vshrl.u32 %v1194, 7
        %v1196 = vsub.s32 %v1193, %v1195
        %v1197 = vrot.slane %v1183, %v1196
        %v1198 = vcombine.high %v1190, %v1190
        %v1199 = vcombine.high %v1197, %v1197
        %v1200 = vld [vmem:[%s633] sm:$0xf]
        %v1201 = vld [vmem:[%s633 + $0x4] sm:$0xf]
        %v1202 = vld [vmem:[%s633 + $0x8] sm:$0xf]
        %v1203 = vld [vmem:[%s633 + $0xc] sm:$0xf]
        %v1204 = vld [vmem:[%s633 + $0x10] sm:$0xf]
        %v1205 = vld [vmem:[%s633 + $0x14] sm:$0xf]
        %v1206 = vld [vmem:[%s633 + $0x18] sm:$0xf]
        %v1207 = vld [vmem:[%s633 + $0x1c] sm:$0xf]
        %v1208 = vld [vmem:[%s633 + $0x20] sm:$0xf]
        %v1209 = vld [vmem:[%s633 + $0x24] sm:$0xf]
        %v1210 = vld [vmem:[%s633 + $0x28] sm:$0xf]
        %v1211 = vld [vmem:[%s633 + $0x2c] sm:$0xf]
        %v1212 = vld [vmem:[%s633 + $0x30] sm:$0xf]
        %v1213 = vld [vmem:[%s633 + $0x34] sm:$0xf]
        %v1214 = vld [vmem:[%s633 + $0x38] sm:$0xf]
        %v1215 = vld [vmem:[%s633 + $0x3c] sm:$0xf]
        %vm1216 = vcmask 261120
        %v1218 = vsel %vm1216, %v1162, 0
        %v1221 = vsel %vm1216, %v1163, 0
        %1223 = vmatprep.subr.bf16.mxu0 0
        %1224 = vmatpush1.bf16.xpose.msra.mxu0 0
        %1225 = vmatprep.subr.bf16.mxu0 0
        %1226 = vmatpush1.bf16.xpose.msra.mxu0 0
        %1227 = vmatprep.subr.bf16.mxu0 0
        %1228 = vmatpush1.bf16.xpose.msra.mxu0 0
        %1229 = vmatprep.subr.bf16.mxu0 0
        %1230 = vmatpush1.bf16.xpose.msra.mxu0 0
        %1231 = vmatprep.subr.bf16.mxu0 0
        %1232 = vmatpush1.bf16.xpose.msra.mxu0 0
        %1233 = vmatprep.subr.bf16.mxu0 0
        %1234 = vmatpush1.bf16.xpose.msra.mxu0 0
        %1235 = vmatprep.subr.bf16.mxu0 0
        %1236 = vmatpush1.bf16.xpose.msra.mxu0 0
        %1237 = vmatprep.subr.bf16.mxu0 0
        %1238 = vmatpush1.bf16.xpose.msra.mxu0 %v1221
        %1239 = vmatprep.subr.bf16.mxu0 0
        %1240 = vmatpush2.bf16.xpose.msra.mxu0 0
        %1241 = vmatprep.subr.bf16.mxu0 0
        %1242 = vmatpush2.bf16.xpose.msra.mxu0 0
        %1243 = vmatprep.subr.bf16.mxu0 0
        %1244 = vmatpush2.bf16.xpose.msra.mxu0 0
        %1245 = vmatprep.subr.bf16.mxu0 0
        %1246 = vmatpush2.bf16.xpose.msra.mxu0 0
        %1247 = vmatprep.subr.bf16.mxu0 0
        %1248 = vmatpush2.bf16.xpose.msra.mxu0 0
        %1249 = vmatprep.subr.bf16.mxu0 0
        %1250 = vmatpush2.bf16.xpose.msra.mxu0 0
        %1251 = vmatprep.subr.bf16.mxu0 0
        %1252 = vmatpush2.bf16.xpose.msra.mxu0 0
        %1253 = vmatprep.subr.bf16.mxu0 0
        %1254 = vmatpush2.bf16.xpose.msra.mxu0 0
        %1255 = vmatprep.mubr.bf16.mxu0 0
        %1256 = vmatmul.mubr.bf16.gmra.mxu0 %v1218
        %v1257 = vpop.f32.mrf.mxu0
        %v1258 = vadd.f32 0.0, %v1257
        %v1259 = vpop.f32.mrf.mxu0
        %v1260 = vpop.f32.mrf.mxu0
        %v1261 = vpop.f32.mrf.mxu0
        %1262 = vdwg.mxu0
        %v1264 = vsel %vm1216, %v1165, 0
        %v1267 = vsel %vm1216, %v1166, 0
        %1269 = vmatprep.subr.bf16.mxu0 0
        %1270 = vmatpush1.bf16.xpose.msra.mxu0 0
        %1271 = vmatprep.subr.bf16.mxu0 0
        %1272 = vmatpush1.bf16.xpose.msra.mxu0 0
        %1273 = vmatprep.subr.bf16.mxu0 0
        %1274 = vmatpush1.bf16.xpose.msra.mxu0 0
        %1275 = vmatprep.subr.bf16.mxu0 0
        %1276 = vmatpush1.bf16.xpose.msra.mxu0 0
        %1277 = vmatprep.subr.bf16.mxu0 0
        %1278 = vmatpush1.bf16.xpose.msra.mxu0 0
        %1279 = vmatprep.subr.bf16.mxu0 0
        %1280 = vmatpush1.bf16.xpose.msra.mxu0 0
        %1281 = vmatprep.subr.bf16.mxu0 0
        %1282 = vmatpush1.bf16.xpose.msra.mxu0 0
        %1283 = vmatprep.subr.bf16.mxu0 0
        %1284 = vmatpush1.bf16.xpose.msra.mxu0 %v1267
        %1285 = vmatprep.subr.bf16.mxu0 0
        %1286 = vmatpush2.bf16.xpose.msra.mxu0 0
        %1287 = vmatprep.subr.bf16.mxu0 0
        %1288 = vmatpush2.bf16.xpose.msra.mxu0 0
        %1289 = vmatprep.subr.bf16.mxu0 0
        %1290 = vmatpush2.bf16.xpose.msra.mxu0 0
        %1291 = vmatprep.subr.bf16.mxu0 0
        %1292 = vmatpush2.bf16.xpose.msra.mxu0 0
        %1293 = vmatprep.subr.bf16.mxu0 0
        %1294 = vmatpush2.bf16.xpose.msra.mxu0 0
        %1295 = vmatprep.subr.bf16.mxu0 0
        %1296 = vmatpush2.bf16.xpose.msra.mxu0 0
        %1297 = vmatprep.subr.bf16.mxu0 0
        %1298 = vmatpush2.bf16.xpose.msra.mxu0 0
        %1299 = vmatprep.subr.bf16.mxu0 0
        %1300 = vmatpush2.bf16.xpose.msra.mxu0 0
        %1301 = vmatprep.mubr.bf16.mxu0 0
        %1302 = vmatmul.mubr.bf16.gmra.mxu0 %v1264
        %v1303 = vpop.f32.mrf.mxu0
        %v1304 = vadd.f32 0.0, %v1303
        %v1305 = vpop.f32.mrf.mxu0
        %v1306 = vpop.f32.mrf.mxu0
        %v1307 = vpop.f32.mrf.mxu0
        %1308 = vdwg.mxu0
        %v1310 = vsel %vm1216, %v1168, 0
        %v1313 = vsel %vm1216, %v1169, 0
        %1315 = vmatprep.subr.bf16.mxu0 0
        %1316 = vmatpush1.bf16.xpose.msra.mxu0 0
        %1317 = vmatprep.subr.bf16.mxu0 0
        %1318 = vmatpush1.bf16.xpose.msra.mxu0 0
        %1319 = vmatprep.subr.bf16.mxu0 0
        %1320 = vmatpush1.bf16.xpose.msra.mxu0 0
        %1321 = vmatprep.subr.bf16.mxu0 0
        %1322 = vmatpush1.bf16.xpose.msra.mxu0 0
        %1323 = vmatprep.subr.bf16.mxu0 0
        %1324 = vmatpush1.bf16.xpose.msra.mxu0 0
        %1325 = vmatprep.subr.bf16.mxu0 0
        %1326 = vmatpush1.bf16.xpose.msra.mxu0 0
        %1327 = vmatprep.subr.bf16.mxu0 0
        %1328 = vmatpush1.bf16.xpose.msra.mxu0 0
        %1329 = vmatprep.subr.bf16.mxu0 0
        %1330 = vmatpush1.bf16.xpose.msra.mxu0 %v1313
        %1331 = vmatprep.subr.bf16.mxu0 0
        %1332 = vmatpush2.bf16.xpose.msra.mxu0 0
        %1333 = vmatprep.subr.bf16.mxu0 0
        %1334 = vmatpush2.bf16.xpose.msra.mxu0 0
        %1335 = vmatprep.subr.bf16.mxu0 0
        %1336 = vmatpush2.bf16.xpose.msra.mxu0 0
        %1337 = vmatprep.subr.bf16.mxu0 0
        %1338 = vmatpush2.bf16.xpose.msra.mxu0 0
        %1339 = vmatprep.subr.bf16.mxu0 0
        %1340 = vmatpush2.bf16.xpose.msra.mxu0 0
        %1341 = vmatprep.subr.bf16.mxu0 0
        %1342 = vmatpush2.bf16.xpose.msra.mxu0 0
        %1343 = vmatprep.subr.bf16.mxu0 0
        %1344 = vmatpush2.bf16.xpose.msra.mxu0 0
        %1345 = vmatprep.subr.bf16.mxu0 0
        %1346 = vmatpush2.bf16.xpose.msra.mxu0 0
        %1347 = vmatprep.mubr.bf16.mxu0 0
        %1348 = vmatmul.mubr.bf16.gmra.mxu0 %v1310
        %v1349 = vpop.f32.mrf.mxu0
        %v1350 = vadd.f32 0.0, %v1349
        %v1351 = vpop.f32.mrf.mxu0
        %v1352 = vpop.f32.mrf.mxu0
        %v1353 = vpop.f32.mrf.mxu0
        %1354 = vdwg.mxu0
        %v1356 = vsel %vm1216, %v1171, 0
        %v1359 = vsel %vm1216, %v1172, 0
        %1361 = vmatprep.subr.bf16.mxu0 0
        %1362 = vmatpush1.bf16.xpose.msra.mxu0 0
        %1363 = vmatprep.subr.bf16.mxu0 0
        %1364 = vmatpush1.bf16.xpose.msra.mxu0 0
        %1365 = vmatprep.subr.bf16.mxu0 0
        %1366 = vmatpush1.bf16.xpose.msra.mxu0 0
        %1367 = vmatprep.subr.bf16.mxu0 0
        %1368 = vmatpush1.bf16.xpose.msra.mxu0 0
        %1369 = vmatprep.subr.bf16.mxu0 0
        %1370 = vmatpush1.bf16.xpose.msra.mxu0 0
        %1371 = vmatprep.subr.bf16.mxu0 0
        %1372 = vmatpush1.bf16.xpose.msra.mxu0 0
        %1373 = vmatprep.subr.bf16.mxu0 0
        %1374 = vmatpush1.bf16.xpose.msra.mxu0 0
        %1375 = vmatprep.subr.bf16.mxu0 0
        %1376 = vmatpush1.bf16.xpose.msra.mxu0 %v1359
        %1377 = vmatprep.subr.bf16.mxu0 0
        %1378 = vmatpush2.bf16.xpose.msra.mxu0 0
        %1379 = vmatprep.subr.bf16.mxu0 0
        %1380 = vmatpush2.bf16.xpose.msra.mxu0 0
        %1381 = vmatprep.subr.bf16.mxu0 0
        %1382 = vmatpush2.bf16.xpose.msra.mxu0 0
        %1383 = vmatprep.subr.bf16.mxu0 0
        %1384 = vmatpush2.bf16.xpose.msra.mxu0 0
        %1385 = vmatprep.subr.bf16.mxu0 0
        %1386 = vmatpush2.bf16.xpose.msra.mxu0 0
        %1387 = vmatprep.subr.bf16.mxu0 0
        %1388 = vmatpush2.bf16.xpose.msra.mxu0 0
        %1389 = vmatprep.subr.bf16.mxu0 0
        %1390 = vmatpush2.bf16.xpose.msra.mxu0 0
        %1391 = vmatprep.subr.bf16.mxu0 0
        %1392 = vmatpush2.bf16.xpose.msra.mxu0 0
        %1393 = vmatprep.mubr.bf16.mxu0 0
        %1394 = vmatmul.mubr.bf16.gmra.mxu0 %v1356
        %v1395 = vpop.f32.mrf.mxu0
        %v1396 = vadd.f32 0.0, %v1395
        %v1397 = vpop.f32.mrf.mxu0
        %v1398 = vpop.f32.mrf.mxu0
        %v1399 = vpop.f32.mrf.mxu0
        %1400 = vdwg.mxu0
        %v1401 = vmul.f32 %v1258, 0.17677669
        %v1402 = vmul.f32 %v1304, 0.17677669
        %v1403 = vmul.f32 %v1350, 0.17677669
        %v1404 = vmul.f32 %v1396, 0.17677669
        %v1405 = vlaneseq
        %v1406 = vshrl.u32 %v1405, 7
        %v1407 = vsub.s32 0, %v1406
        %v1408 = vrot.slane %v1190, %v1407
        %v1409 = vlaneseq
        %v1410 = vshrl.u32 %v1409, 7
        %v1411 = vsub.s32 0, %v1410
        %v1412 = vrot.slane %v1197, %v1411
        %v1413 = vlaneseq
        %v1414 = vshrl.u32 %v1413, 7
        %v1415 = vsub.s32 0, %v1414
        %v1416 = vrot.slane %v1198, %v1415
        %v1417 = vlaneseq
        %v1418 = vshrl.u32 %v1417, 7
        %v1419 = vsub.s32 0, %v1418
        %v1420 = vrot.slane %v1199, %v1419
        %v1425 = vadd.f32 %v1401, %v1408
        %v1426 = vadd.f32 %v1402, %v1412
        %v1427 = vadd.f32 %v1403, %v1416
        %v1428 = vadd.f32 %v1404, %v1420
        %vm1429 = vcmask 64512
        %v1430 = vsel %vm1429, %v1425, -inf
        %1431 = vmax.xlane.f32.xlu0 %v1430
        %v1432 = vpop.xlane.xlu0 %1431
        %v1433 = vsel %vm1429, %v1426, -inf
        %1434 = vmax.xlane.f32.xlu0 %v1433
        %v1435 = vpop.xlane.xlu0 %1434
        %v1436 = vsel %vm1429, %v1427, -inf
        %1437 = vmax.xlane.f32.xlu0 %v1436
        %v1438 = vpop.xlane.xlu0 %1437
        %v1439 = vsel %vm1429, %v1428, -inf
        %1440 = vmax.xlane.f32.xlu0 %v1439
        %v1441 = vpop.xlane.xlu0 %1440
        %v1442 = vsub.f32 %v1425, %v1432
        %v1443 = vsub.f32 %v1426, %v1435
        %v1444 = vsub.f32 %v1427, %v1438
        %v1445 = vsub.f32 %v1428, %v1441
        %v1446 = vmul.f32 %v1442, 1.442695
        %v1447 = vpow.pop %v1446
        %v1448 = vmul.f32 %v1443, 1.442695
        %v1449 = vpow.pop %v1448
        %v1450 = vmul.f32 %v1444, 1.442695
        %v1451 = vpow.pop %v1450
        %v1452 = vmul.f32 %v1445, 1.442695
        %v1453 = vpow.pop %v1452
        %v1454 = vsel %vm1429, %v1447, 0.0
        %1455 = vadd.xlane.f32.xlu0 %v1454
        %v1456 = vpop.xlane.xlu0 %1455
        %v1457 = vsel %vm1429, %v1449, 0.0
        %1458 = vadd.xlane.f32.xlu0 %v1457
        %v1459 = vpop.xlane.xlu0 %1458
        %v1460 = vsel %vm1429, %v1451, 0.0
        %1461 = vadd.xlane.f32.xlu0 %v1460
        %v1462 = vpop.xlane.xlu0 %1461
        %v1463 = vsel %vm1429, %v1453, 0.0
        %1464 = vadd.xlane.f32.xlu0 %v1463
        %v1465 = vpop.xlane.xlu0 %1464
        %v1466 = vrcp.pop %v1456
        %v1467 = vrcp.pop %v1459
        %v1468 = vrcp.pop %v1462
        %v1469 = vrcp.pop %v1465
        %v1470 = vmul.f32 %v1447, %v1466
        %v1471 = vmul.f32 %v1449, %v1467
        %v1472 = vmul.f32 %v1451, %v1468
        %v1473 = vmul.f32 %v1453, %v1469
        %v1474 = vpack.c.bf16 %v1470, %v1470
        %v1475 = vpack.c.bf16 %v1471, %v1471
        %v1476 = vpack.c.bf16 %v1472, %v1472
        %v1477 = vpack.c.bf16 %v1473, %v1473
        %v1479 = vsel %vm1429, %v1474, 0
        %vm1481 = vcmask 1043456
        %v1483 = vsel %vm1481, %v1164, 0
        %1485 = vmatprep.subr.bf16.mxu0 0
        %1486 = vmatpush1.bf16.msra.mxu0 0
        %1487 = vmatprep.subr.bf16.mxu0 0
        %1488 = vmatpush1.bf16.msra.mxu0 0
        %1489 = vmatprep.subr.bf16.mxu0 0
        %1490 = vmatpush1.bf16.msra.mxu0 0
        %1491 = vmatprep.subr.bf16.mxu0 0
        %1492 = vmatpush1.bf16.msra.mxu0 0
        %1493 = vmatprep.subr.bf16.mxu0 0
        %1494 = vmatpush1.bf16.msra.mxu0 0
        %1495 = vmatprep.subr.bf16.mxu0 0
        %1496 = vmatpush1.bf16.msra.mxu0 0
        %1497 = vmatprep.subr.bf16.mxu0 0
        %1498 = vmatpush1.bf16.msra.mxu0 0
        %1499 = vmatprep.subr.bf16.mxu0 0
        %1500 = vmatpush1.bf16.msra.mxu0 %v1483
        %1501 = vmatprep.subr.bf16.mxu0 0
        %1502 = vmatpush2.bf16.msra.mxu0 0
        %1503 = vmatprep.subr.bf16.mxu0 0
        %1504 = vmatpush2.bf16.msra.mxu0 0
        %1505 = vmatprep.subr.bf16.mxu0 0
        %1506 = vmatpush2.bf16.msra.mxu0 0
        %1507 = vmatprep.subr.bf16.mxu0 0
        %1508 = vmatpush2.bf16.msra.mxu0 0
        %1509 = vmatprep.subr.bf16.mxu0 0
        %1510 = vmatpush2.bf16.msra.mxu0 0
        %1511 = vmatprep.subr.bf16.mxu0 0
        %1512 = vmatpush2.bf16.msra.mxu0 0
        %1513 = vmatprep.subr.bf16.mxu0 0
        %1514 = vmatpush2.bf16.msra.mxu0 0
        %1515 = vmatprep.subr.bf16.mxu0 0
        %1516 = vmatpush2.bf16.msra.mxu0 0
        %1517 = vmatprep.mubr.bf16.mxu0 0
        %1518 = vmatmul.mubr.bf16.gmra.mxu0 %v1479
        %v1519 = vpop.f32.mrf.mxu0
        %v1520 = vadd.f32 0.0, %v1519
        %v1521 = vpop.f32.mrf.mxu0
        %v1522 = vpop.f32.mrf.mxu0
        %v1523 = vpop.f32.mrf.mxu0
        %1524 = vdwg.mxu0
        %v1526 = vsel %vm1429, %v1475, 0
        %v1529 = vsel %vm1481, %v1167, 0
        %1531 = vmatprep.subr.bf16.mxu0 0
        %1532 = vmatpush1.bf16.msra.mxu0 0
        %1533 = vmatprep.subr.bf16.mxu0 0
        %1534 = vmatpush1.bf16.msra.mxu0 0
        %1535 = vmatprep.subr.bf16.mxu0 0
        %1536 = vmatpush1.bf16.msra.mxu0 0
        %1537 = vmatprep.subr.bf16.mxu0 0
        %1538 = vmatpush1.bf16.msra.mxu0 0
        %1539 = vmatprep.subr.bf16.mxu0 0
        %1540 = vmatpush1.bf16.msra.mxu0 0
        %1541 = vmatprep.subr.bf16.mxu0 0
        %1542 = vmatpush1.bf16.msra.mxu0 0
        %1543 = vmatprep.subr.bf16.mxu0 0
        %1544 = vmatpush1.bf16.msra.mxu0 0
        %1545 = vmatprep.subr.bf16.mxu0 0
        %1546 = vmatpush1.bf16.msra.mxu0 %v1529
        %1547 = vmatprep.subr.bf16.mxu0 0
        %1548 = vmatpush2.bf16.msra.mxu0 0
        %1549 = vmatprep.subr.bf16.mxu0 0
        %1550 = vmatpush2.bf16.msra.mxu0 0
        %1551 = vmatprep.subr.bf16.mxu0 0
        %1552 = vmatpush2.bf16.msra.mxu0 0
        %1553 = vmatprep.subr.bf16.mxu0 0
        %1554 = vmatpush2.bf16.msra.mxu0 0
        %1555 = vmatprep.subr.bf16.mxu0 0
        %1556 = vmatpush2.bf16.msra.mxu0 0
        %1557 = vmatprep.subr.bf16.mxu0 0
        %1558 = vmatpush2.bf16.msra.mxu0 0
        %1559 = vmatprep.subr.bf16.mxu0 0
        %1560 = vmatpush2.bf16.msra.mxu0 0
        %1561 = vmatprep.subr.bf16.mxu0 0
        %1562 = vmatpush2.bf16.msra.mxu0 0
        %1563 = vmatprep.mubr.bf16.mxu0 0
        %1564 = vmatmul.mubr.bf16.gmra.mxu0 %v1526
        %v1565 = vpop.f32.mrf.mxu0
        %v1566 = vadd.f32 0.0, %v1565
        %v1567 = vpop.f32.mrf.mxu0
        %v1568 = vpop.f32.mrf.mxu0
        %v1569 = vpop.f32.mrf.mxu0
        %1570 = vdwg.mxu0
        %v1572 = vsel %vm1429, %v1476, 0
        %v1575 = vsel %vm1481, %v1170, 0
        %1577 = vmatprep.subr.bf16.mxu0 0
        %1578 = vmatpush1.bf16.msra.mxu0 0
        %1579 = vmatprep.subr.bf16.mxu0 0
        %1580 = vmatpush1.bf16.msra.mxu0 0
        %1581 = vmatprep.subr.bf16.mxu0 0
        %1582 = vmatpush1.bf16.msra.mxu0 0
        %1583 = vmatprep.subr.bf16.mxu0 0
        %1584 = vmatpush1.bf16.msra.mxu0 0
        %1585 = vmatprep.subr.bf16.mxu0 0
        %1586 = vmatpush1.bf16.msra.mxu0 0
        %1587 = vmatprep.subr.bf16.mxu0 0
        %1588 = vmatpush1.bf16.msra.mxu0 0
        %1589 = vmatprep.subr.bf16.mxu0 0
        %1590 = vmatpush1.bf16.msra.mxu0 0
        %1591 = vmatprep.subr.bf16.mxu0 0
        %1592 = vmatpush1.bf16.msra.mxu0 %v1575
        %1593 = vmatprep.subr.bf16.mxu0 0
        %1594 = vmatpush2.bf16.msra.mxu0 0
        %1595 = vmatprep.subr.bf16.mxu0 0
        %1596 = vmatpush2.bf16.msra.mxu0 0
        %1597 = vmatprep.subr.bf16.mxu0 0
        %1598 = vmatpush2.bf16.msra.mxu0 0
        %1599 = vmatprep.subr.bf16.mxu0 0
        %1600 = vmatpush2.bf16.msra.mxu0 0
        %1601 = vmatprep.subr.bf16.mxu0 0
        %1602 = vmatpush2.bf16.msra.mxu0 0
        %1603 = vmatprep.subr.bf16.mxu0 0
        %1604 = vmatpush2.bf16.msra.mxu0 0
        %1605 = vmatprep.subr.bf16.mxu0 0
        %1606 = vmatpush2.bf16.msra.mxu0 0
        %1607 = vmatprep.subr.bf16.mxu0 0
        %1608 = vmatpush2.bf16.msra.mxu0 0
        %1609 = vmatprep.mubr.bf16.mxu0 0
        %1610 = vmatmul.mubr.bf16.gmra.mxu0 %v1572
        %v1611 = vpop.f32.mrf.mxu0
        %v1612 = vadd.f32 0.0, %v1611
        %v1613 = vpop.f32.mrf.mxu0
        %v1614 = vpop.f32.mrf.mxu0
        %v1615 = vpop.f32.mrf.mxu0
        %1616 = vdwg.mxu0
        %v1618 = vsel %vm1429, %v1477, 0
        %v1621 = vsel %vm1481, %v1173, 0
        %1623 = vmatprep.subr.bf16.mxu0 0
        %1624 = vmatpush1.bf16.msra.mxu0 0
        %1625 = vmatprep.subr.bf16.mxu0 0
        %1626 = vmatpush1.bf16.msra.mxu0 0
        %1627 = vmatprep.subr.bf16.mxu0 0
        %1628 = vmatpush1.bf16.msra.mxu0 0
        %1629 = vmatprep.subr.bf16.mxu0 0
        %1630 = vmatpush1.bf16.msra.mxu0 0
        %1631 = vmatprep.subr.bf16.mxu0 0
        %1632 = vmatpush1.bf16.msra.mxu0 0
        %1633 = vmatprep.subr.bf16.mxu0 0
        %1634 = vmatpush1.bf16.msra.mxu0 0
        %1635 = vmatprep.subr.bf16.mxu0 0
        %1636 = vmatpush1.bf16.msra.mxu0 0
        %1637 = vmatprep.subr.bf16.mxu0 0
        %1638 = vmatpush1.bf16.msra.mxu0 %v1621
        %1639 = vmatprep.subr.bf16.mxu0 0
        %1640 = vmatpush2.bf16.msra.mxu0 0
        %1641 = vmatprep.subr.bf16.mxu0 0
        %1642 = vmatpush2.bf16.msra.mxu0 0
        %1643 = vmatprep.subr.bf16.mxu0 0
        %1644 = vmatpush2.bf16.msra.mxu0 0
        %1645 = vmatprep.subr.bf16.mxu0 0
        %1646 = vmatpush2.bf16.msra.mxu0 0
        %1647 = vmatprep.subr.bf16.mxu0 0
        %1648 = vmatpush2.bf16.msra.mxu0 0
        %1649 = vmatprep.subr.bf16.mxu0 0
        %1650 = vmatpush2.bf16.msra.mxu0 0
        %1651 = vmatprep.subr.bf16.mxu0 0
        %1652 = vmatpush2.bf16.msra.mxu0 0
        %1653 = vmatprep.subr.bf16.mxu0 0
        %1654 = vmatpush2.bf16.msra.mxu0 0
        %1655 = vmatprep.mubr.bf16.mxu0 0
        %1656 = vmatmul.mubr.bf16.gmra.mxu0 %v1618
        %v1657 = vpop.f32.mrf.mxu0
        %v1658 = vadd.f32 0.0, %v1657
        %v1659 = vpop.f32.mrf.mxu0
        %v1660 = vpop.f32.mrf.mxu0
        %v1661 = vpop.f32.mrf.mxu0
        %1662 = vdwg.mxu0
        %v1663 = vpack.c.bf16 %v1566, %v1520
        %v1664 = vpack.c.bf16 %v1658, %v1612
        %1666 = vrot.lane.b32.xlu0 %v1162, 96
        %v1667 = vpop.permute.xlu0 %1666
        %1669 = vrot.lane.b32.xlu0 %v1163, 96
        %v1670 = vpop.permute.xlu0 %1669
        %v1672 = vsel %vm1216, %v1667, 0
        %v1675 = vsel %vm1216, %v1670, 0
        %1677 = vmatprep.subr.bf16.mxu0 0
        %1678 = vmatpush1.bf16.xpose.msra.mxu0 0
        %1679 = vmatprep.subr.bf16.mxu0 0
        %1680 = vmatpush1.bf16.xpose.msra.mxu0 0
        %1681 = vmatprep.subr.bf16.mxu0 0
        %1682 = vmatpush1.bf16.xpose.msra.mxu0 0
        %1683 = vmatprep.subr.bf16.mxu0 0
        %1684 = vmatpush1.bf16.xpose.msra.mxu0 0
        %1685 = vmatprep.subr.bf16.mxu0 0
        %1686 = vmatpush1.bf16.xpose.msra.mxu0 0
        %1687 = vmatprep.subr.bf16.mxu0 0
        %1688 = vmatpush1.bf16.xpose.msra.mxu0 0
        %1689 = vmatprep.subr.bf16.mxu0 0
        %1690 = vmatpush1.bf16.xpose.msra.mxu0 0
        %1691 = vmatprep.subr.bf16.mxu0 0
        %1692 = vmatpush1.bf16.xpose.msra.mxu0 %v1675
        %1693 = vmatprep.subr.bf16.mxu0 0
        %1694 = vmatpush2.bf16.xpose.msra.mxu0 0
        %1695 = vmatprep.subr.bf16.mxu0 0
        %1696 = vmatpush2.bf16.xpose.msra.mxu0 0
        %1697 = vmatprep.subr.bf16.mxu0 0
        %1698 = vmatpush2.bf16.xpose.msra.mxu0 0
        %1699 = vmatprep.subr.bf16.mxu0 0
        %1700 = vmatpush2.bf16.xpose.msra.mxu0 0
        %1701 = vmatprep.subr.bf16.mxu0 0
        %1702 = vmatpush2.bf16.xpose.msra.mxu0 0
        %1703 = vmatprep.subr.bf16.mxu0 0
        %1704 = vmatpush2.bf16.xpose.msra.mxu0 0
        %1705 = vmatprep.subr.bf16.mxu0 0
        %1706 = vmatpush2.bf16.xpose.msra.mxu0 0
        %1707 = vmatprep.subr.bf16.mxu0 0
        %1708 = vmatpush2.bf16.xpose.msra.mxu0 0
        %1709 = vmatprep.mubr.bf16.mxu0 0
        %1710 = vmatmul.mubr.bf16.gmra.mxu0 %v1672
        %v1711 = vpop.f32.mrf.mxu0
        %v1712 = vadd.f32 0.0, %v1711
        %v1713 = vpop.f32.mrf.mxu0
        %v1714 = vpop.f32.mrf.mxu0
        %v1715 = vpop.f32.mrf.mxu0
        %1716 = vdwg.mxu0
        %1718 = vrot.lane.b32.xlu0 %v1165, 96
        %v1719 = vpop.permute.xlu0 %1718
        %1721 = vrot.lane.b32.xlu0 %v1166, 96
        %v1722 = vpop.permute.xlu0 %1721
        %v1724 = vsel %vm1216, %v1719, 0
        %v1727 = vsel %vm1216, %v1722, 0
        %1729 = vmatprep.subr.bf16.mxu0 0
        %1730 = vmatpush1.bf16.xpose.msra.mxu0 0
        %1731 = vmatprep.subr.bf16.mxu0 0
        %1732 = vmatpush1.bf16.xpose.msra.mxu0 0
        %1733 = vmatprep.subr.bf16.mxu0 0
        %1734 = vmatpush1.bf16.xpose.msra.mxu0 0
        %1735 = vmatprep.subr.bf16.mxu0 0
        %1736 = vmatpush1.bf16.xpose.msra.mxu0 0
        %1737 = vmatprep.subr.bf16.mxu0 0
        %1738 = vmatpush1.bf16.xpose.msra.mxu0 0
        %1739 = vmatprep.subr.bf16.mxu0 0
        %1740 = vmatpush1.bf16.xpose.msra.mxu0 0
        %1741 = vmatprep.subr.bf16.mxu0 0
        %1742 = vmatpush1.bf16.xpose.msra.mxu0 0
        %1743 = vmatprep.subr.bf16.mxu0 0
        %1744 = vmatpush1.bf16.xpose.msra.mxu0 %v1727
        %1745 = vmatprep.subr.bf16.mxu0 0
        %1746 = vmatpush2.bf16.xpose.msra.mxu0 0
        %1747 = vmatprep.subr.bf16.mxu0 0
        %1748 = vmatpush2.bf16.xpose.msra.mxu0 0
        %1749 = vmatprep.subr.bf16.mxu0 0
        %1750 = vmatpush2.bf16.xpose.msra.mxu0 0
        %1751 = vmatprep.subr.bf16.mxu0 0
        %1752 = vmatpush2.bf16.xpose.msra.mxu0 0
        %1753 = vmatprep.subr.bf16.mxu0 0
        %1754 = vmatpush2.bf16.xpose.msra.mxu0 0
        %1755 = vmatprep.subr.bf16.mxu0 0
        %1756 = vmatpush2.bf16.xpose.msra.mxu0 0
        %1757 = vmatprep.subr.bf16.mxu0 0
        %1758 = vmatpush2.bf16.xpose.msra.mxu0 0
        %1759 = vmatprep.subr.bf16.mxu0 0
        %1760 = vmatpush2.bf16.xpose.msra.mxu0 0
        %1761 = vmatprep.mubr.bf16.mxu0 0
        %1762 = vmatmul.mubr.bf16.gmra.mxu0 %v1724
        %v1763 = vpop.f32.mrf.mxu0
        %v1764 = vadd.f32 0.0, %v1763
        %v1765 = vpop.f32.mrf.mxu0
        %v1766 = vpop.f32.mrf.mxu0
        %v1767 = vpop.f32.mrf.mxu0
        %1768 = vdwg.mxu0
        %1770 = vrot.lane.b32.xlu0 %v1168, 96
        %v1771 = vpop.permute.xlu0 %1770
        %1773 = vrot.lane.b32.xlu0 %v1169, 96
        %v1774 = vpop.permute.xlu0 %1773
        %v1776 = vsel %vm1216, %v1771, 0
        %v1779 = vsel %vm1216, %v1774, 0
        %1781 = vmatprep.subr.bf16.mxu0 0
        %1782 = vmatpush1.bf16.xpose.msra.mxu0 0
        %1783 = vmatprep.subr.bf16.mxu0 0
        %1784 = vmatpush1.bf16.xpose.msra.mxu0 0
        %1785 = vmatprep.subr.bf16.mxu0 0
        %1786 = vmatpush1.bf16.xpose.msra.mxu0 0
        %1787 = vmatprep.subr.bf16.mxu0 0
        %1788 = vmatpush1.bf16.xpose.msra.mxu0 0
        %1789 = vmatprep.subr.bf16.mxu0 0
        %1790 = vmatpush1.bf16.xpose.msra.mxu0 0
        %1791 = vmatprep.subr.bf16.mxu0 0
        %1792 = vmatpush1.bf16.xpose.msra.mxu0 0
        %1793 = vmatprep.subr.bf16.mxu0 0
        %1794 = vmatpush1.bf16.xpose.msra.mxu0 0
        %1795 = vmatprep.subr.bf16.mxu0 0
        %1796 = vmatpush1.bf16.xpose.msra.mxu0 %v1779
        %1797 = vmatprep.subr.bf16.mxu0 0
        %1798 = vmatpush2.bf16.xpose.msra.mxu0 0
        %1799 = vmatprep.subr.bf16.mxu0 0
        %1800 = vmatpush2.bf16.xpose.msra.mxu0 0
        %1801 = vmatprep.subr.bf16.mxu0 0
        %1802 = vmatpush2.bf16.xpose.msra.mxu0 0
        %1803 = vmatprep.subr.bf16.mxu0 0
        %1804 = vmatpush2.bf16.xpose.msra.mxu0 0
        %1805 = vmatprep.subr.bf16.mxu0 0
        %1806 = vmatpush2.bf16.xpose.msra.mxu0 0
        %1807 = vmatprep.subr.bf16.mxu0 0
        %1808 = vmatpush2.bf16.xpose.msra.mxu0 0
        %1809 = vmatprep.subr.bf16.mxu0 0
        %1810 = vmatpush2.bf16.xpose.msra.mxu0 0
        %1811 = vmatprep.subr.bf16.mxu0 0
        %1812 = vmatpush2.bf16.xpose.msra.mxu0 0
        %1813 = vmatprep.mubr.bf16.mxu0 0
        %1814 = vmatmul.mubr.bf16.gmra.mxu0 %v1776
        %v1815 = vpop.f32.mrf.mxu0
        %v1816 = vadd.f32 0.0, %v1815
        %v1817 = vpop.f32.mrf.mxu0
        %v1818 = vpop.f32.mrf.mxu0
        %v1819 = vpop.f32.mrf.mxu0
        %1820 = vdwg.mxu0
        %1822 = vrot.lane.b32.xlu0 %v1171, 96
        %v1823 = vpop.permute.xlu0 %1822
        %1825 = vrot.lane.b32.xlu0 %v1172, 96
        %v1826 = vpop.permute.xlu0 %1825
        %v1828 = vsel %vm1216, %v1823, 0
        %v1831 = vsel %vm1216, %v1826, 0
        %1833 = vmatprep.subr.bf16.mxu0 0
        %1834 = vmatpush1.bf16.xpose.msra.mxu0 0
        %1835 = vmatprep.subr.bf16.mxu0 0
        %1836 = vmatpush1.bf16.xpose.msra.mxu0 0
        %1837 = vmatprep.subr.bf16.mxu0 0
        %1838 = vmatpush1.bf16.xpose.msra.mxu0 0
        %1839 = vmatprep.subr.bf16.mxu0 0
        %1840 = vmatpush1.bf16.xpose.msra.mxu0 0
        %1841 = vmatprep.subr.bf16.mxu0 0
        %1842 = vmatpush1.bf16.xpose.msra.mxu0 0
        %1843 = vmatprep.subr.bf16.mxu0 0
        %1844 = vmatpush1.bf16.xpose.msra.mxu0 0
        %1845 = vmatprep.subr.bf16.mxu0 0
        %1846 = vmatpush1.bf16.xpose.msra.mxu0 0
        %1847 = vmatprep.subr.bf16.mxu0 0
        %1848 = vmatpush1.bf16.xpose.msra.mxu0 %v1831
        %1849 = vmatprep.subr.bf16.mxu0 0
        %1850 = vmatpush2.bf16.xpose.msra.mxu0 0
        %1851 = vmatprep.subr.bf16.mxu0 0
        %1852 = vmatpush2.bf16.xpose.msra.mxu0 0
        %1853 = vmatprep.subr.bf16.mxu0 0
        %1854 = vmatpush2.bf16.xpose.msra.mxu0 0
        %1855 = vmatprep.subr.bf16.mxu0 0
        %1856 = vmatpush2.bf16.xpose.msra.mxu0 0
        %1857 = vmatprep.subr.bf16.mxu0 0
        %1858 = vmatpush2.bf16.xpose.msra.mxu0 0
        %1859 = vmatprep.subr.bf16.mxu0 0
        %1860 = vmatpush2.bf16.xpose.msra.mxu0 0
        %1861 = vmatprep.subr.bf16.mxu0 0
        %1862 = vmatpush2.bf16.xpose.msra.mxu0 0
        %1863 = vmatprep.subr.bf16.mxu0 0
        %1864 = vmatpush2.bf16.xpose.msra.mxu0 0
        %1865 = vmatprep.mubr.bf16.mxu0 0
        %1866 = vmatmul.mubr.bf16.gmra.mxu0 %v1828
        %v1867 = vpop.f32.mrf.mxu0
        %v1868 = vadd.f32 0.0, %v1867
        %v1869 = vpop.f32.mrf.mxu0
        %v1870 = vpop.f32.mrf.mxu0
        %v1871 = vpop.f32.mrf.mxu0
        %1872 = vdwg.mxu0
        %v1873 = vmul.f32 %v1712, 0.17677669
        %v1874 = vmul.f32 %v1764, 0.17677669
        %v1875 = vmul.f32 %v1816, 0.17677669
        %v1876 = vmul.f32 %v1868, 0.17677669
        %v1877 = vadd.f32 %v1873, %v1408
        %v1878 = vadd.f32 %v1874, %v1412
        %v1879 = vadd.f32 %v1875, %v1416
        %v1880 = vadd.f32 %v1876, %v1420
        %v1881 = vsel %vm1429, %v1877, -inf
        %1882 = vmax.xlane.f32.xlu0 %v1881
        %v1883 = vpop.xlane.xlu0 %1882
        %v1884 = vsel %vm1429, %v1878, -inf
        %1885 = vmax.xlane.f32.xlu0 %v1884
        %v1886 = vpop.xlane.xlu0 %1885
        %v1887 = vsel %vm1429, %v1879, -inf
        %1888 = vmax.xlane.f32.xlu0 %v1887
        %v1889 = vpop.xlane.xlu0 %1888
        %v1890 = vsel %vm1429, %v1880, -inf
        %1891 = vmax.xlane.f32.xlu0 %v1890
        %v1892 = vpop.xlane.xlu0 %1891
        %v1893 = vsub.f32 %v1877, %v1883
        %v1894 = vsub.f32 %v1878, %v1886
        %v1895 = vsub.f32 %v1879, %v1889
        %v1896 = vsub.f32 %v1880, %v1892
        %v1897 = vmul.f32 %v1893, 1.442695
        %v1898 = vpow.pop %v1897
        %v1899 = vmul.f32 %v1894, 1.442695
        %v1900 = vpow.pop %v1899
        %v1901 = vmul.f32 %v1895, 1.442695
        %v1902 = vpow.pop %v1901
        %v1903 = vmul.f32 %v1896, 1.442695
        %v1904 = vpow.pop %v1903
        %v1905 = vsel %vm1429, %v1898, 0.0
        %1906 = vadd.xlane.f32.xlu0 %v1905
        %v1907 = vpop.xlane.xlu0 %1906
        %v1908 = vsel %vm1429, %v1900, 0.0
        %1909 = vadd.xlane.f32.xlu0 %v1908
        %v1910 = vpop.xlane.xlu0 %1909
        %v1911 = vsel %vm1429, %v1902, 0.0
        %1912 = vadd.xlane.f32.xlu0 %v1911
        %v1913 = vpop.xlane.xlu0 %1912
        %v1914 = vsel %vm1429, %v1904, 0.0
        %1915 = vadd.xlane.f32.xlu0 %v1914
        %v1916 = vpop.xlane.xlu0 %1915
        %v1917 = vrcp.pop %v1907
        %v1918 = vrcp.pop %v1910
        %v1919 = vrcp.pop %v1913
        %v1920 = vrcp.pop %v1916
        %v1921 = vmul.f32 %v1898, %v1917
        %v1922 = vmul.f32 %v1900, %v1918
        %v1923 = vmul.f32 %v1902, %v1919
        %v1924 = vmul.f32 %v1904, %v1920
        %v1925 = vpack.c.bf16 %v1921, %v1921
        %v1926 = vpack.c.bf16 %v1922, %v1922
        %v1927 = vpack.c.bf16 %v1923, %v1923
        %v1928 = vpack.c.bf16 %v1924, %v1924
        %1930 = vrot.lane.b32.xlu0 %v1164, 96
        %v1931 = vpop.permute.xlu0 %1930
        %v1933 = vsel %vm1429, %v1925, 0
        %v1936 = vsel %vm1481, %v1931, 0
        %1938 = vmatprep.subr.bf16.mxu0 0
        %1939 = vmatpush1.bf16.msra.mxu0 0
        %1940 = vmatprep.subr.bf16.mxu0 0
        %1941 = vmatpush1.bf16.msra.mxu0 0
        %1942 = vmatprep.subr.bf16.mxu0 0
        %1943 = vmatpush1.bf16.msra.mxu0 0
        %1944 = vmatprep.subr.bf16.mxu0 0
        %1945 = vmatpush1.bf16.msra.mxu0 0
        %1946 = vmatprep.subr.bf16.mxu0 0
        %1947 = vmatpush1.bf16.msra.mxu0 0
        %1948 = vmatprep.subr.bf16.mxu0 0
        %1949 = vmatpush1.bf16.msra.mxu0 0
        %1950 = vmatprep.subr.bf16.mxu0 0
        %1951 = vmatpush1.bf16.msra.mxu0 0
        %1952 = vmatprep.subr.bf16.mxu0 0
        %1953 = vmatpush1.bf16.msra.mxu0 %v1936
        %1954 = vmatprep.subr.bf16.mxu0 0
        %1955 = vmatpush2.bf16.msra.mxu0 0
        %1956 = vmatprep.subr.bf16.mxu0 0
        %1957 = vmatpush2.bf16.msra.mxu0 0
        %1958 = vmatprep.subr.bf16.mxu0 0
        %1959 = vmatpush2.bf16.msra.mxu0 0
        %1960 = vmatprep.subr.bf16.mxu0 0
        %1961 = vmatpush2.bf16.msra.mxu0 0
        %1962 = vmatprep.subr.bf16.mxu0 0
        %1963 = vmatpush2.bf16.msra.mxu0 0
        %1964 = vmatprep.subr.bf16.mxu0 0
        %1965 = vmatpush2.bf16.msra.mxu0 0
        %1966 = vmatprep.subr.bf16.mxu0 0
        %1967 = vmatpush2.bf16.msra.mxu0 0
        %1968 = vmatprep.subr.bf16.mxu0 0
        %1969 = vmatpush2.bf16.msra.mxu0 0
        %1970 = vmatprep.mubr.bf16.mxu0 0
        %1971 = vmatmul.mubr.bf16.gmra.mxu0 %v1933
        %v1972 = vpop.f32.mrf.mxu0
        %v1973 = vadd.f32 0.0, %v1972
        %v1974 = vpop.f32.mrf.mxu0
        %v1975 = vpop.f32.mrf.mxu0
        %v1976 = vpop.f32.mrf.mxu0
        %1977 = vdwg.mxu0
        %1979 = vrot.lane.b32.xlu0 %v1167, 96
        %v1980 = vpop.permute.xlu0 %1979
        %v1982 = vsel %vm1429, %v1926, 0
        %v1985 = vsel %vm1481, %v1980, 0
        %1987 = vmatprep.subr.bf16.mxu0 0
        %1988 = vmatpush1.bf16.msra.mxu0 0
        %1989 = vmatprep.subr.bf16.mxu0 0
        %1990 = vmatpush1.bf16.msra.mxu0 0
        %1991 = vmatprep.subr.bf16.mxu0 0
        %1992 = vmatpush1.bf16.msra.mxu0 0
        %1993 = vmatprep.subr.bf16.mxu0 0
        %1994 = vmatpush1.bf16.msra.mxu0 0
        %1995 = vmatprep.subr.bf16.mxu0 0
        %1996 = vmatpush1.bf16.msra.mxu0 0
        %1997 = vmatprep.subr.bf16.mxu0 0
        %1998 = vmatpush1.bf16.msra.mxu0 0
        %1999 = vmatprep.subr.bf16.mxu0 0
        %2000 = vmatpush1.bf16.msra.mxu0 0
        %2001 = vmatprep.subr.bf16.mxu0 0
        %2002 = vmatpush1.bf16.msra.mxu0 %v1985
        %2003 = vmatprep.subr.bf16.mxu0 0
        %2004 = vmatpush2.bf16.msra.mxu0 0
        %2005 = vmatprep.subr.bf16.mxu0 0
        %2006 = vmatpush2.bf16.msra.mxu0 0
        %2007 = vmatprep.subr.bf16.mxu0 0
        %2008 = vmatpush2.bf16.msra.mxu0 0
        %2009 = vmatprep.subr.bf16.mxu0 0
        %2010 = vmatpush2.bf16.msra.mxu0 0
        %2011 = vmatprep.subr.bf16.mxu0 0
        %2012 = vmatpush2.bf16.msra.mxu0 0
        %2013 = vmatprep.subr.bf16.mxu0 0
        %2014 = vmatpush2.bf16.msra.mxu0 0
        %2015 = vmatprep.subr.bf16.mxu0 0
        %2016 = vmatpush2.bf16.msra.mxu0 0
        %2017 = vmatprep.subr.bf16.mxu0 0
        %2018 = vmatpush2.bf16.msra.mxu0 0
        %2019 = vmatprep.mubr.bf16.mxu0 0
        %2020 = vmatmul.mubr.bf16.gmra.mxu0 %v1982
        %v2021 = vpop.f32.mrf.mxu0
        %v2022 = vadd.f32 0.0, %v2021
        %v2023 = vpop.f32.mrf.mxu0
        %v2024 = vpop.f32.mrf.mxu0
        %v2025 = vpop.f32.mrf.mxu0
        %2026 = vdwg.mxu0
        %2028 = vrot.lane.b32.xlu0 %v1170, 96
        %v2029 = vpop.permute.xlu0 %2028
        %v2031 = vsel %vm1429, %v1927, 0
        %v2034 = vsel %vm1481, %v2029, 0
        %2036 = vmatprep.subr.bf16.mxu0 0
        %2037 = vmatpush1.bf16.msra.mxu0 0
        %2038 = vmatprep.subr.bf16.mxu0 0
        %2039 = vmatpush1.bf16.msra.mxu0 0
        %2040 = vmatprep.subr.bf16.mxu0 0
        %2041 = vmatpush1.bf16.msra.mxu0 0
        %2042 = vmatprep.subr.bf16.mxu0 0
        %2043 = vmatpush1.bf16.msra.mxu0 0
        %2044 = vmatprep.subr.bf16.mxu0 0
        %2045 = vmatpush1.bf16.msra.mxu0 0
        %2046 = vmatprep.subr.bf16.mxu0 0
        %2047 = vmatpush1.bf16.msra.mxu0 0
        %2048 = vmatprep.subr.bf16.mxu0 0
        %2049 = vmatpush1.bf16.msra.mxu0 0
        %2050 = vmatprep.subr.bf16.mxu0 0
        %2051 = vmatpush1.bf16.msra.mxu0 %v2034
        %2052 = vmatprep.subr.bf16.mxu0 0
        %2053 = vmatpush2.bf16.msra.mxu0 0
        %2054 = vmatprep.subr.bf16.mxu0 0
        %2055 = vmatpush2.bf16.msra.mxu0 0
        %2056 = vmatprep.subr.bf16.mxu0 0
        %2057 = vmatpush2.bf16.msra.mxu0 0
        %2058 = vmatprep.subr.bf16.mxu0 0
        %2059 = vmatpush2.bf16.msra.mxu0 0
        %2060 = vmatprep.subr.bf16.mxu0 0
        %2061 = vmatpush2.bf16.msra.mxu0 0
        %2062 = vmatprep.subr.bf16.mxu0 0
        %2063 = vmatpush2.bf16.msra.mxu0 0
        %2064 = vmatprep.subr.bf16.mxu0 0
        %2065 = vmatpush2.bf16.msra.mxu0 0
        %2066 = vmatprep.subr.bf16.mxu0 0
        %2067 = vmatpush2.bf16.msra.mxu0 0
        %2068 = vmatprep.mubr.bf16.mxu0 0
        %2069 = vmatmul.mubr.bf16.gmra.mxu0 %v2031
        %v2070 = vpop.f32.mrf.mxu0
        %v2071 = vadd.f32 0.0, %v2070
        %v2072 = vpop.f32.mrf.mxu0
        %v2073 = vpop.f32.mrf.mxu0
        %v2074 = vpop.f32.mrf.mxu0
        %2075 = vdwg.mxu0
        %2077 = vrot.lane.b32.xlu0 %v1173, 96
        %v2078 = vpop.permute.xlu0 %2077
        %v2080 = vsel %vm1429, %v1928, 0
        %v2083 = vsel %vm1481, %v2078, 0
        %2085 = vmatprep.subr.bf16.mxu0 0
        %2086 = vmatpush1.bf16.msra.mxu0 0
        %2087 = vmatprep.subr.bf16.mxu0 0
        %2088 = vmatpush1.bf16.msra.mxu0 0
        %2089 = vmatprep.subr.bf16.mxu0 0
        %2090 = vmatpush1.bf16.msra.mxu0 0
        %2091 = vmatprep.subr.bf16.mxu0 0
        %2092 = vmatpush1.bf16.msra.mxu0 0
        %2093 = vmatprep.subr.bf16.mxu0 0
        %2094 = vmatpush1.bf16.msra.mxu0 0
        %2095 = vmatprep.subr.bf16.mxu0 0
        %2096 = vmatpush1.bf16.msra.mxu0 0
        %2097 = vmatprep.subr.bf16.mxu0 0
        %2098 = vmatpush1.bf16.msra.mxu0 0
        %2099 = vmatprep.subr.bf16.mxu0 0
        %2100 = vmatpush1.bf16.msra.mxu0 %v2083
        %2101 = vmatprep.subr.bf16.mxu0 0
        %2102 = vmatpush2.bf16.msra.mxu0 0
        %2103 = vmatprep.subr.bf16.mxu0 0
        %2104 = vmatpush2.bf16.msra.mxu0 0
        %2105 = vmatprep.subr.bf16.mxu0 0
        %2106 = vmatpush2.bf16.msra.mxu0 0
        %2107 = vmatprep.subr.bf16.mxu0 0
        %2108 = vmatpush2.bf16.msra.mxu0 0
        %2109 = vmatprep.subr.bf16.mxu0 0
        %2110 = vmatpush2.bf16.msra.mxu0 0
        %2111 = vmatprep.subr.bf16.mxu0 0
        %2112 = vmatpush2.bf16.msra.mxu0 0
        %2113 = vmatprep.subr.bf16.mxu0 0
        %2114 = vmatpush2.bf16.msra.mxu0 0
        %2115 = vmatprep.subr.bf16.mxu0 0
        %2116 = vmatpush2.bf16.msra.mxu0 0
        %2117 = vmatprep.mubr.bf16.mxu0 0
        %2118 = vmatmul.mubr.bf16.gmra.mxu0 %v2080
        %v2119 = vpop.f32.mrf.mxu0
        %v2120 = vadd.f32 0.0, %v2119
        %v2121 = vpop.f32.mrf.mxu0
        %v2122 = vpop.f32.mrf.mxu0
        %v2123 = vpop.f32.mrf.mxu0
        %2124 = vdwg.mxu0
        %v2125 = vpack.c.bf16 %v2022, %v1973
        %v2126 = vpack.c.bf16 %v2120, %v2071
        %v2131 = vunpack.c.l.b16 %v1204
        %v2132 = vunpack.c.l.b16 %v1205
        %v2133 = vunpack.c.l.b16 %v1206
        %v2134 = vunpack.c.l.b16 %v1207
        %v2135 = vpack.c.b16 %v2132, %v2131
        %v2136 = vpack.c.b16 %v2134, %v2133
        %v2140 = vsel %vm1216, %v2125, 0
        %v2143 = vsel %vm1216, %v2126, 0
        %2145 = vmatprep.subr.bf16.mxu0 0
        %2146 = vmatpush1.bf16.msra.mxu0 0
        %2147 = vmatprep.subr.bf16.mxu0 0
        %2148 = vmatpush1.bf16.msra.mxu0 0
        %2149 = vmatprep.subr.bf16.mxu0 0
        %2150 = vmatpush1.bf16.msra.mxu0 0
        %2151 = vmatprep.subr.bf16.mxu0 0
        %2152 = vmatpush1.bf16.msra.mxu0 0
        %2153 = vmatprep.subr.bf16.mxu0 0
        %2154 = vmatpush1.bf16.msra.mxu0 0
        %2155 = vmatprep.subr.bf16.mxu0 0
        %2156 = vmatpush1.bf16.msra.mxu0 0
        %2157 = vmatprep.subr.bf16.mxu0 0
        %2158 = vmatpush1.bf16.msra.mxu0 %v2136
        %2159 = vmatprep.subr.bf16.mxu0 0
        %2160 = vmatpush1.bf16.msra.mxu0 %v2135
        %2161 = vmatprep.subr.bf16.mxu0 0
        %2162 = vmatpush2.bf16.msra.mxu0 0
        %2163 = vmatprep.subr.bf16.mxu0 0
        %2164 = vmatpush2.bf16.msra.mxu0 0
        %2165 = vmatprep.subr.bf16.mxu0 0
        %2166 = vmatpush2.bf16.msra.mxu0 0
        %2167 = vmatprep.subr.bf16.mxu0 0
        %2168 = vmatpush2.bf16.msra.mxu0 0
        %2169 = vmatprep.subr.bf16.mxu0 0
        %2170 = vmatpush2.bf16.msra.mxu0 0
        %2171 = vmatprep.subr.bf16.mxu0 0
        %2172 = vmatpush2.bf16.msra.mxu0 0
        %2173 = vmatprep.subr.bf16.mxu0 0
        %2174 = vmatpush2.bf16.msra.mxu0 0
        %2175 = vmatprep.subr.bf16.mxu0 0
        %2176 = vmatpush2.bf16.msra.mxu0 0
        %2177 = vmatprep.mubr.bf16.mxu0 0
        %2178 = vmatmul.mubr.bf16.gmra.mxu0 %v2140
        %v2179 = vpop.f32.mrf.mxu0
        %v2180 = vadd.f32 0.0, %v2179
        %v2181 = vpop.f32.mrf.mxu0
        %v2182 = vpop.f32.mrf.mxu0
        %v2183 = vadd.f32 0.0, %v2182
        %v2184 = vpop.f32.mrf.mxu0
        %2185 = vmatprep.mubr.bf16.mxu0 0
        %2186 = vmatmul.mubr.bf16.gmra.mxu0 %v2143
        %v2187 = vpop.f32.mrf.mxu0
        %v2188 = vadd.f32 0.0, %v2187
        %v2189 = vpop.f32.mrf.mxu0
        %v2190 = vpop.f32.mrf.mxu0
        %v2191 = vadd.f32 0.0, %v2190
        %v2192 = vpop.f32.mrf.mxu0
        %2193 = vdwg.mxu0
        %v2198 = vunpack.c.l.b16 %v1200
        %v2199 = vunpack.c.l.b16 %v1201
        %v2200 = vunpack.c.l.b16 %v1202
        %v2201 = vunpack.c.l.b16 %v1203
        %v2202 = vpack.c.b16 %v2199, %v2198
        %v2203 = vpack.c.b16 %v2201, %v2200
        %v2207 = vsel %vm1216, %v1663, 0
        %v2210 = vsel %vm1216, %v1664, 0
        %2212 = vmatprep.subr.bf16.mxu0 0
        %2213 = vmatpush1.bf16.msra.mxu0 0
        %2214 = vmatprep.subr.bf16.mxu0 0
        %2215 = vmatpush1.bf16.msra.mxu0 0
        %2216 = vmatprep.subr.bf16.mxu0 0
        %2217 = vmatpush1.bf16.msra.mxu0 0
        %2218 = vmatprep.subr.bf16.mxu0 0
        %2219 = vmatpush1.bf16.msra.mxu0 0
        %2220 = vmatprep.subr.bf16.mxu0 0
        %2221 = vmatpush1.bf16.msra.mxu0 0
        %2222 = vmatprep.subr.bf16.mxu0 0
        %2223 = vmatpush1.bf16.msra.mxu0 0
        %2224 = vmatprep.subr.bf16.mxu0 0
        %2225 = vmatpush1.bf16.msra.mxu0 %v2203
        %2226 = vmatprep.subr.bf16.mxu0 0
        %2227 = vmatpush1.bf16.msra.mxu0 %v2202
        %2228 = vmatprep.subr.bf16.mxu0 0
        %2229 = vmatpush2.bf16.msra.mxu0 0
        %2230 = vmatprep.subr.bf16.mxu0 0
        %2231 = vmatpush2.bf16.msra.mxu0 0
        %2232 = vmatprep.subr.bf16.mxu0 0
        %2233 = vmatpush2.bf16.msra.mxu0 0
        %2234 = vmatprep.subr.bf16.mxu0 0
        %2235 = vmatpush2.bf16.msra.mxu0 0
        %2236 = vmatprep.subr.bf16.mxu0 0
        %2237 = vmatpush2.bf16.msra.mxu0 0
        %2238 = vmatprep.subr.bf16.mxu0 0
        %2239 = vmatpush2.bf16.msra.mxu0 0
        %2240 = vmatprep.subr.bf16.mxu0 0
        %2241 = vmatpush2.bf16.msra.mxu0 0
        %2242 = vmatprep.subr.bf16.mxu0 0
        %2243 = vmatpush2.bf16.msra.mxu0 0
        %2244 = vmatprep.mubr.bf16.mxu0 0
        %2245 = vmatmul.mubr.bf16.gmra.mxu0 %v2207
        %v2246 = vpop.f32.mrf.mxu0
        %v2247 = vadd.f32 %v2180, %v2246
        %v2248 = vpop.f32.mrf.mxu0
        %v2249 = vpop.f32.mrf.mxu0
        %v2250 = vadd.f32 %v2183, %v2249
        %v2251 = vpop.f32.mrf.mxu0
        %2252 = vmatprep.mubr.bf16.mxu0 0
        %2253 = vmatmul.mubr.bf16.gmra.mxu0 %v2210
        %v2254 = vpop.f32.mrf.mxu0
        %v2255 = vadd.f32 %v2188, %v2254
        %v2256 = vpop.f32.mrf.mxu0
        %v2257 = vpop.f32.mrf.mxu0
        %v2258 = vadd.f32 %v2191, %v2257
        %v2259 = vpop.f32.mrf.mxu0
        %2260 = vdwg.mxu0
        %2261 = vrot.lane.b32.xlu0 %v1162, 64
        %v2262 = vpop.permute.xlu0 %2261
        %2263 = vrot.lane.b32.xlu0 %v1163, 64
        %v2264 = vpop.permute.xlu0 %2263
        %v2266 = vsel %vm1216, %v2262, 0
        %v2269 = vsel %vm1216, %v2264, 0
        %2271 = vmatprep.subr.bf16.mxu0 0
        %2272 = vmatpush1.bf16.xpose.msra.mxu0 0
        %2273 = vmatprep.subr.bf16.mxu0 0
        %2274 = vmatpush1.bf16.xpose.msra.mxu0 0
        %2275 = vmatprep.subr.bf16.mxu0 0
        %2276 = vmatpush1.bf16.xpose.msra.mxu0 0
        %2277 = vmatprep.subr.bf16.mxu0 0
        %2278 = vmatpush1.bf16.xpose.msra.mxu0 0
        %2279 = vmatprep.subr.bf16.mxu0 0
        %2280 = vmatpush1.bf16.xpose.msra.mxu0 0
        %2281 = vmatprep.subr.bf16.mxu0 0
        %2282 = vmatpush1.bf16.xpose.msra.mxu0 0
        %2283 = vmatprep.subr.bf16.mxu0 0
        %2284 = vmatpush1.bf16.xpose.msra.mxu0 0
        %2285 = vmatprep.subr.bf16.mxu0 0
        %2286 = vmatpush1.bf16.xpose.msra.mxu0 %v2269
        %2287 = vmatprep.subr.bf16.mxu0 0
        %2288 = vmatpush2.bf16.xpose.msra.mxu0 0
        %2289 = vmatprep.subr.bf16.mxu0 0
        %2290 = vmatpush2.bf16.xpose.msra.mxu0 0
        %2291 = vmatprep.subr.bf16.mxu0 0
        %2292 = vmatpush2.bf16.xpose.msra.mxu0 0
        %2293 = vmatprep.subr.bf16.mxu0 0
        %2294 = vmatpush2.bf16.xpose.msra.mxu0 0
        %2295 = vmatprep.subr.bf16.mxu0 0
        %2296 = vmatpush2.bf16.xpose.msra.mxu0 0
        %2297 = vmatprep.subr.bf16.mxu0 0
        %2298 = vmatpush2.bf16.xpose.msra.mxu0 0
        %2299 = vmatprep.subr.bf16.mxu0 0
        %2300 = vmatpush2.bf16.xpose.msra.mxu0 0
        %2301 = vmatprep.subr.bf16.mxu0 0
        %2302 = vmatpush2.bf16.xpose.msra.mxu0 0
        %2303 = vmatprep.mubr.bf16.mxu0 0
        %2304 = vmatmul.mubr.bf16.gmra.mxu0 %v2266
        %v2305 = vpop.f32.mrf.mxu0
        %v2306 = vadd.f32 0.0, %v2305
        %v2307 = vpop.f32.mrf.mxu0
        %v2308 = vpop.f32.mrf.mxu0
        %v2309 = vpop.f32.mrf.mxu0
        %2310 = vdwg.mxu0
        %2311 = vrot.lane.b32.xlu0 %v1165, 64
        %v2312 = vpop.permute.xlu0 %2311
        %2313 = vrot.lane.b32.xlu0 %v1166, 64
        %v2314 = vpop.permute.xlu0 %2313
        %v2316 = vsel %vm1216, %v2312, 0
        %v2319 = vsel %vm1216, %v2314, 0
        %2321 = vmatprep.subr.bf16.mxu0 0
        %2322 = vmatpush1.bf16.xpose.msra.mxu0 0
        %2323 = vmatprep.subr.bf16.mxu0 0
        %2324 = vmatpush1.bf16.xpose.msra.mxu0 0
        %2325 = vmatprep.subr.bf16.mxu0 0
        %2326 = vmatpush1.bf16.xpose.msra.mxu0 0
        %2327 = vmatprep.subr.bf16.mxu0 0
        %2328 = vmatpush1.bf16.xpose.msra.mxu0 0
        %2329 = vmatprep.subr.bf16.mxu0 0
        %2330 = vmatpush1.bf16.xpose.msra.mxu0 0
        %2331 = vmatprep.subr.bf16.mxu0 0
        %2332 = vmatpush1.bf16.xpose.msra.mxu0 0
        %2333 = vmatprep.subr.bf16.mxu0 0
        %2334 = vmatpush1.bf16.xpose.msra.mxu0 0
        %2335 = vmatprep.subr.bf16.mxu0 0
        %2336 = vmatpush1.bf16.xpose.msra.mxu0 %v2319
        %2337 = vmatprep.subr.bf16.mxu0 0
        %2338 = vmatpush2.bf16.xpose.msra.mxu0 0
        %2339 = vmatprep.subr.bf16.mxu0 0
        %2340 = vmatpush2.bf16.xpose.msra.mxu0 0
        %2341 = vmatprep.subr.bf16.mxu0 0
        %2342 = vmatpush2.bf16.xpose.msra.mxu0 0
        %2343 = vmatprep.subr.bf16.mxu0 0
        %2344 = vmatpush2.bf16.xpose.msra.mxu0 0
        %2345 = vmatprep.subr.bf16.mxu0 0
        %2346 = vmatpush2.bf16.xpose.msra.mxu0 0
        %2347 = vmatprep.subr.bf16.mxu0 0
        %2348 = vmatpush2.bf16.xpose.msra.mxu0 0
        %2349 = vmatprep.subr.bf16.mxu0 0
        %2350 = vmatpush2.bf16.xpose.msra.mxu0 0
        %2351 = vmatprep.subr.bf16.mxu0 0
        %2352 = vmatpush2.bf16.xpose.msra.mxu0 0
        %2353 = vmatprep.mubr.bf16.mxu0 0
        %2354 = vmatmul.mubr.bf16.gmra.mxu0 %v2316
        %v2355 = vpop.f32.mrf.mxu0
        %v2356 = vadd.f32 0.0, %v2355
        %v2357 = vpop.f32.mrf.mxu0
        %v2358 = vpop.f32.mrf.mxu0
        %v2359 = vpop.f32.mrf.mxu0
        %2360 = vdwg.mxu0
        %2361 = vrot.lane.b32.xlu0 %v1168, 64
        %v2362 = vpop.permute.xlu0 %2361
        %2363 = vrot.lane.b32.xlu0 %v1169, 64
        %v2364 = vpop.permute.xlu0 %2363
        %v2366 = vsel %vm1216, %v2362, 0
        %v2369 = vsel %vm1216, %v2364, 0
        %2371 = vmatprep.subr.bf16.mxu0 0
        %2372 = vmatpush1.bf16.xpose.msra.mxu0 0
        %2373 = vmatprep.subr.bf16.mxu0 0
        %2374 = vmatpush1.bf16.xpose.msra.mxu0 0
        %2375 = vmatprep.subr.bf16.mxu0 0
        %2376 = vmatpush1.bf16.xpose.msra.mxu0 0
        %2377 = vmatprep.subr.bf16.mxu0 0
        %2378 = vmatpush1.bf16.xpose.msra.mxu0 0
        %2379 = vmatprep.subr.bf16.mxu0 0
        %2380 = vmatpush1.bf16.xpose.msra.mxu0 0
        %2381 = vmatprep.subr.bf16.mxu0 0
        %2382 = vmatpush1.bf16.xpose.msra.mxu0 0
        %2383 = vmatprep.subr.bf16.mxu0 0
        %2384 = vmatpush1.bf16.xpose.msra.mxu0 0
        %2385 = vmatprep.subr.bf16.mxu0 0
        %2386 = vmatpush1.bf16.xpose.msra.mxu0 %v2369
        %2387 = vmatprep.subr.bf16.mxu0 0
        %2388 = vmatpush2.bf16.xpose.msra.mxu0 0
        %2389 = vmatprep.subr.bf16.mxu0 0
        %2390 = vmatpush2.bf16.xpose.msra.mxu0 0
        %2391 = vmatprep.subr.bf16.mxu0 0
        %2392 = vmatpush2.bf16.xpose.msra.mxu0 0
        %2393 = vmatprep.subr.bf16.mxu0 0
        %2394 = vmatpush2.bf16.xpose.msra.mxu0 0
        %2395 = vmatprep.subr.bf16.mxu0 0
        %2396 = vmatpush2.bf16.xpose.msra.mxu0 0
        %2397 = vmatprep.subr.bf16.mxu0 0
        %2398 = vmatpush2.bf16.xpose.msra.mxu0 0
        %2399 = vmatprep.subr.bf16.mxu0 0
        %2400 = vmatpush2.bf16.xpose.msra.mxu0 0
        %2401 = vmatprep.subr.bf16.mxu0 0
        %2402 = vmatpush2.bf16.xpose.msra.mxu0 0
        %2403 = vmatprep.mubr.bf16.mxu0 0
        %2404 = vmatmul.mubr.bf16.gmra.mxu0 %v2366
        %v2405 = vpop.f32.mrf.mxu0
        %v2406 = vadd.f32 0.0, %v2405
        %v2407 = vpop.f32.mrf.mxu0
        %v2408 = vpop.f32.mrf.mxu0
        %v2409 = vpop.f32.mrf.mxu0
        %2410 = vdwg.mxu0
        %2411 = vrot.lane.b32.xlu0 %v1171, 64
        %v2412 = vpop.permute.xlu0 %2411
        %2413 = vrot.lane.b32.xlu0 %v1172, 64
        %v2414 = vpop.permute.xlu0 %2413
        %v2416 = vsel %vm1216, %v2412, 0
        %v2419 = vsel %vm1216, %v2414, 0
        %2421 = vmatprep.subr.bf16.mxu0 0
        %2422 = vmatpush1.bf16.xpose.msra.mxu0 0
        %2423 = vmatprep.subr.bf16.mxu0 0
        %2424 = vmatpush1.bf16.xpose.msra.mxu0 0
        %2425 = vmatprep.subr.bf16.mxu0 0
        %2426 = vmatpush1.bf16.xpose.msra.mxu0 0
        %2427 = vmatprep.subr.bf16.mxu0 0
        %2428 = vmatpush1.bf16.xpose.msra.mxu0 0
        %2429 = vmatprep.subr.bf16.mxu0 0
        %2430 = vmatpush1.bf16.xpose.msra.mxu0 0
        %2431 = vmatprep.subr.bf16.mxu0 0
        %2432 = vmatpush1.bf16.xpose.msra.mxu0 0
        %2433 = vmatprep.subr.bf16.mxu0 0
        %2434 = vmatpush1.bf16.xpose.msra.mxu0 0
        %2435 = vmatprep.subr.bf16.mxu0 0
        %2436 = vmatpush1.bf16.xpose.msra.mxu0 %v2419
        %2437 = vmatprep.subr.bf16.mxu0 0
        %2438 = vmatpush2.bf16.xpose.msra.mxu0 0
        %2439 = vmatprep.subr.bf16.mxu0 0
        %2440 = vmatpush2.bf16.xpose.msra.mxu0 0
        %2441 = vmatprep.subr.bf16.mxu0 0
        %2442 = vmatpush2.bf16.xpose.msra.mxu0 0
        %2443 = vmatprep.subr.bf16.mxu0 0
        %2444 = vmatpush2.bf16.xpose.msra.mxu0 0
        %2445 = vmatprep.subr.bf16.mxu0 0
        %2446 = vmatpush2.bf16.xpose.msra.mxu0 0
        %2447 = vmatprep.subr.bf16.mxu0 0
        %2448 = vmatpush2.bf16.xpose.msra.mxu0 0
        %2449 = vmatprep.subr.bf16.mxu0 0
        %2450 = vmatpush2.bf16.xpose.msra.mxu0 0
        %2451 = vmatprep.subr.bf16.mxu0 0
        %2452 = vmatpush2.bf16.xpose.msra.mxu0 0
        %2453 = vmatprep.mubr.bf16.mxu0 0
        %2454 = vmatmul.mubr.bf16.gmra.mxu0 %v2416
        %v2455 = vpop.f32.mrf.mxu0
        %v2456 = vadd.f32 0.0, %v2455
        %v2457 = vpop.f32.mrf.mxu0
        %v2458 = vpop.f32.mrf.mxu0
        %v2459 = vpop.f32.mrf.mxu0
        %2460 = vdwg.mxu0
        %v2461 = vmul.f32 %v2306, 0.17677669
        %v2462 = vmul.f32 %v2356, 0.17677669
        %v2463 = vmul.f32 %v2406, 0.17677669
        %v2464 = vmul.f32 %v2456, 0.17677669
        %v2465 = vadd.f32 %v2461, %v1408
        %v2466 = vadd.f32 %v2462, %v1412
        %v2467 = vadd.f32 %v2463, %v1416
        %v2468 = vadd.f32 %v2464, %v1420
        %v2469 = vsel %vm1429, %v2465, -inf
        %2470 = vmax.xlane.f32.xlu0 %v2469
        %v2471 = vpop.xlane.xlu0 %2470
        %v2472 = vsel %vm1429, %v2466, -inf
        %2473 = vmax.xlane.f32.xlu0 %v2472
        %v2474 = vpop.xlane.xlu0 %2473
        %v2475 = vsel %vm1429, %v2467, -inf
        %2476 = vmax.xlane.f32.xlu0 %v2475
        %v2477 = vpop.xlane.xlu0 %2476
        %v2478 = vsel %vm1429, %v2468, -inf
        %2479 = vmax.xlane.f32.xlu0 %v2478
        %v2480 = vpop.xlane.xlu0 %2479
        %v2481 = vsub.f32 %v2465, %v2471
        %v2482 = vsub.f32 %v2466, %v2474
        %v2483 = vsub.f32 %v2467, %v2477
        %v2484 = vsub.f32 %v2468, %v2480
        %v2485 = vmul.f32 %v2481, 1.442695
        %v2486 = vpow.pop %v2485
        %v2487 = vmul.f32 %v2482, 1.442695
        %v2488 = vpow.pop %v2487
        %v2489 = vmul.f32 %v2483, 1.442695
        %v2490 = vpow.pop %v2489
        %v2491 = vmul.f32 %v2484, 1.442695
        %v2492 = vpow.pop %v2491
        %v2493 = vsel %vm1429, %v2486, 0.0
        %2494 = vadd.xlane.f32.xlu0 %v2493
        %v2495 = vpop.xlane.xlu0 %2494
        %v2496 = vsel %vm1429, %v2488, 0.0
        %2497 = vadd.xlane.f32.xlu0 %v2496
        %v2498 = vpop.xlane.xlu0 %2497
        %v2499 = vsel %vm1429, %v2490, 0.0
        %2500 = vadd.xlane.f32.xlu0 %v2499
        %v2501 = vpop.xlane.xlu0 %2500
        %v2502 = vsel %vm1429, %v2492, 0.0
        %2503 = vadd.xlane.f32.xlu0 %v2502
        %v2504 = vpop.xlane.xlu0 %2503
        %v2505 = vrcp.pop %v2495
        %v2506 = vrcp.pop %v2498
        %v2507 = vrcp.pop %v2501
        %v2508 = vrcp.pop %v2504
        %v2509 = vmul.f32 %v2486, %v2505
        %v2510 = vmul.f32 %v2488, %v2506
        %v2511 = vmul.f32 %v2490, %v2507
        %v2512 = vmul.f32 %v2492, %v2508
        %v2513 = vpack.c.bf16 %v2509, %v2509
        %v2514 = vpack.c.bf16 %v2510, %v2510
        %v2515 = vpack.c.bf16 %v2511, %v2511
        %v2516 = vpack.c.bf16 %v2512, %v2512
        %2517 = vrot.lane.b32.xlu0 %v1164, 64
        %v2518 = vpop.permute.xlu0 %2517
        %v2520 = vsel %vm1429, %v2513, 0
        %v2523 = vsel %vm1481, %v2518, 0
        %2525 = vmatprep.subr.bf16.mxu0 0
        %2526 = vmatpush1.bf16.msra.mxu0 0
        %2527 = vmatprep.subr.bf16.mxu0 0
        %2528 = vmatpush1.bf16.msra.mxu0 0
        %2529 = vmatprep.subr.bf16.mxu0 0
        %2530 = vmatpush1.bf16.msra.mxu0 0
        %2531 = vmatprep.subr.bf16.mxu0 0
        %2532 = vmatpush1.bf16.msra.mxu0 0
        %2533 = vmatprep.subr.bf16.mxu0 0
        %2534 = vmatpush1.bf16.msra.mxu0 0
        %2535 = vmatprep.subr.bf16.mxu0 0
        %2536 = vmatpush1.bf16.msra.mxu0 0
        %2537 = vmatprep.subr.bf16.mxu0 0
        %2538 = vmatpush1.bf16.msra.mxu0 0
        %2539 = vmatprep.subr.bf16.mxu0 0
        %2540 = vmatpush1.bf16.msra.mxu0 %v2523
        %2541 = vmatprep.subr.bf16.mxu0 0
        %2542 = vmatpush2.bf16.msra.mxu0 0
        %2543 = vmatprep.subr.bf16.mxu0 0
        %2544 = vmatpush2.bf16.msra.mxu0 0
        %2545 = vmatprep.subr.bf16.mxu0 0
        %2546 = vmatpush2.bf16.msra.mxu0 0
        %2547 = vmatprep.subr.bf16.mxu0 0
        %2548 = vmatpush2.bf16.msra.mxu0 0
        %2549 = vmatprep.subr.bf16.mxu0 0
        %2550 = vmatpush2.bf16.msra.mxu0 0
        %2551 = vmatprep.subr.bf16.mxu0 0
        %2552 = vmatpush2.bf16.msra.mxu0 0
        %2553 = vmatprep.subr.bf16.mxu0 0
        %2554 = vmatpush2.bf16.msra.mxu0 0
        %2555 = vmatprep.subr.bf16.mxu0 0
        %2556 = vmatpush2.bf16.msra.mxu0 0
        %2557 = vmatprep.mubr.bf16.mxu0 0
        %2558 = vmatmul.mubr.bf16.gmra.mxu0 %v2520
        %v2559 = vpop.f32.mrf.mxu0
        %v2560 = vadd.f32 0.0, %v2559
        %v2561 = vpop.f32.mrf.mxu0
        %v2562 = vpop.f32.mrf.mxu0
        %v2563 = vpop.f32.mrf.mxu0
        %2564 = vdwg.mxu0
        %2565 = vrot.lane.b32.xlu0 %v1167, 64
        %v2566 = vpop.permute.xlu0 %2565
        %v2568 = vsel %vm1429, %v2514, 0
        %v2571 = vsel %vm1481, %v2566, 0
        %2573 = vmatprep.subr.bf16.mxu0 0
        %2574 = vmatpush1.bf16.msra.mxu0 0
        %2575 = vmatprep.subr.bf16.mxu0 0
        %2576 = vmatpush1.bf16.msra.mxu0 0
        %2577 = vmatprep.subr.bf16.mxu0 0
        %2578 = vmatpush1.bf16.msra.mxu0 0
        %2579 = vmatprep.subr.bf16.mxu0 0
        %2580 = vmatpush1.bf16.msra.mxu0 0
        %2581 = vmatprep.subr.bf16.mxu0 0
        %2582 = vmatpush1.bf16.msra.mxu0 0
        %2583 = vmatprep.subr.bf16.mxu0 0
        %2584 = vmatpush1.bf16.msra.mxu0 0
        %2585 = vmatprep.subr.bf16.mxu0 0
        %2586 = vmatpush1.bf16.msra.mxu0 0
        %2587 = vmatprep.subr.bf16.mxu0 0
        %2588 = vmatpush1.bf16.msra.mxu0 %v2571
        %2589 = vmatprep.subr.bf16.mxu0 0
        %2590 = vmatpush2.bf16.msra.mxu0 0
        %2591 = vmatprep.subr.bf16.mxu0 0
        %2592 = vmatpush2.bf16.msra.mxu0 0
        %2593 = vmatprep.subr.bf16.mxu0 0
        %2594 = vmatpush2.bf16.msra.mxu0 0
        %2595 = vmatprep.subr.bf16.mxu0 0
        %2596 = vmatpush2.bf16.msra.mxu0 0
        %2597 = vmatprep.subr.bf16.mxu0 0
        %2598 = vmatpush2.bf16.msra.mxu0 0
        %2599 = vmatprep.subr.bf16.mxu0 0
        %2600 = vmatpush2.bf16.msra.mxu0 0
        %2601 = vmatprep.subr.bf16.mxu0 0
        %2602 = vmatpush2.bf16.msra.mxu0 0
        %2603 = vmatprep.subr.bf16.mxu0 0
        %2604 = vmatpush2.bf16.msra.mxu0 0
        %2605 = vmatprep.mubr.bf16.mxu0 0
        %2606 = vmatmul.mubr.bf16.gmra.mxu0 %v2568
        %v2607 = vpop.f32.mrf.mxu0
        %v2608 = vadd.f32 0.0, %v2607
        %v2609 = vpop.f32.mrf.mxu0
        %v2610 = vpop.f32.mrf.mxu0
        %v2611 = vpop.f32.mrf.mxu0
        %2612 = vdwg.mxu0
        %2613 = vrot.lane.b32.xlu0 %v1170, 64
        %v2614 = vpop.permute.xlu0 %2613
        %v2616 = vsel %vm1429, %v2515, 0
        %v2619 = vsel %vm1481, %v2614, 0
        %2621 = vmatprep.subr.bf16.mxu0 0
        %2622 = vmatpush1.bf16.msra.mxu0 0
        %2623 = vmatprep.subr.bf16.mxu0 0
        %2624 = vmatpush1.bf16.msra.mxu0 0
        %2625 = vmatprep.subr.bf16.mxu0 0
        %2626 = vmatpush1.bf16.msra.mxu0 0
        %2627 = vmatprep.subr.bf16.mxu0 0
        %2628 = vmatpush1.bf16.msra.mxu0 0
        %2629 = vmatprep.subr.bf16.mxu0 0
        %2630 = vmatpush1.bf16.msra.mxu0 0
        %2631 = vmatprep.subr.bf16.mxu0 0
        %2632 = vmatpush1.bf16.msra.mxu0 0
        %2633 = vmatprep.subr.bf16.mxu0 0
        %2634 = vmatpush1.bf16.msra.mxu0 0
        %2635 = vmatprep.subr.bf16.mxu0 0
        %2636 = vmatpush1.bf16.msra.mxu0 %v2619
        %2637 = vmatprep.subr.bf16.mxu0 0
        %2638 = vmatpush2.bf16.msra.mxu0 0
        %2639 = vmatprep.subr.bf16.mxu0 0
        %2640 = vmatpush2.bf16.msra.mxu0 0
        %2641 = vmatprep.subr.bf16.mxu0 0
        %2642 = vmatpush2.bf16.msra.mxu0 0
        %2643 = vmatprep.subr.bf16.mxu0 0
        %2644 = vmatpush2.bf16.msra.mxu0 0
        %2645 = vmatprep.subr.bf16.mxu0 0
        %2646 = vmatpush2.bf16.msra.mxu0 0
        %2647 = vmatprep.subr.bf16.mxu0 0
        %2648 = vmatpush2.bf16.msra.mxu0 0
        %2649 = vmatprep.subr.bf16.mxu0 0
        %2650 = vmatpush2.bf16.msra.mxu0 0
        %2651 = vmatprep.subr.bf16.mxu0 0
        %2652 = vmatpush2.bf16.msra.mxu0 0
        %2653 = vmatprep.mubr.bf16.mxu0 0
        %2654 = vmatmul.mubr.bf16.gmra.mxu0 %v2616
        %v2655 = vpop.f32.mrf.mxu0
        %v2656 = vadd.f32 0.0, %v2655
        %v2657 = vpop.f32.mrf.mxu0
        %v2658 = vpop.f32.mrf.mxu0
        %v2659 = vpop.f32.mrf.mxu0
        %2660 = vdwg.mxu0
        %2661 = vrot.lane.b32.xlu0 %v1173, 64
        %v2662 = vpop.permute.xlu0 %2661
        %v2664 = vsel %vm1429, %v2516, 0
        %v2667 = vsel %vm1481, %v2662, 0
        %2669 = vmatprep.subr.bf16.mxu0 0
        %2670 = vmatpush1.bf16.msra.mxu0 0
        %2671 = vmatprep.subr.bf16.mxu0 0
        %2672 = vmatpush1.bf16.msra.mxu0 0
        %2673 = vmatprep.subr.bf16.mxu0 0
        %2674 = vmatpush1.bf16.msra.mxu0 0
        %2675 = vmatprep.subr.bf16.mxu0 0
        %2676 = vmatpush1.bf16.msra.mxu0 0
        %2677 = vmatprep.subr.bf16.mxu0 0
        %2678 = vmatpush1.bf16.msra.mxu0 0
        %2679 = vmatprep.subr.bf16.mxu0 0
        %2680 = vmatpush1.bf16.msra.mxu0 0
        %2681 = vmatprep.subr.bf16.mxu0 0
        %2682 = vmatpush1.bf16.msra.mxu0 0
        %2683 = vmatprep.subr.bf16.mxu0 0
        %2684 = vmatpush1.bf16.msra.mxu0 %v2667
        %2685 = vmatprep.subr.bf16.mxu0 0
        %2686 = vmatpush2.bf16.msra.mxu0 0
        %2687 = vmatprep.subr.bf16.mxu0 0
        %2688 = vmatpush2.bf16.msra.mxu0 0
        %2689 = vmatprep.subr.bf16.mxu0 0
        %2690 = vmatpush2.bf16.msra.mxu0 0
        %2691 = vmatprep.subr.bf16.mxu0 0
        %2692 = vmatpush2.bf16.msra.mxu0 0
        %2693 = vmatprep.subr.bf16.mxu0 0
        %2694 = vmatpush2.bf16.msra.mxu0 0
        %2695 = vmatprep.subr.bf16.mxu0 0
        %2696 = vmatpush2.bf16.msra.mxu0 0
        %2697 = vmatprep.subr.bf16.mxu0 0
        %2698 = vmatpush2.bf16.msra.mxu0 0
        %2699 = vmatprep.subr.bf16.mxu0 0
        %2700 = vmatpush2.bf16.msra.mxu0 0
        %2701 = vmatprep.mubr.bf16.mxu0 0
        %2702 = vmatmul.mubr.bf16.gmra.mxu0 %v2664
        %v2703 = vpop.f32.mrf.mxu0
        %v2704 = vadd.f32 0.0, %v2703
        %v2705 = vpop.f32.mrf.mxu0
        %v2706 = vpop.f32.mrf.mxu0
        %v2707 = vpop.f32.mrf.mxu0
        %2708 = vdwg.mxu0
        %v2709 = vpack.c.bf16 %v2608, %v2560
        %v2710 = vpack.c.bf16 %v2704, %v2656
        %v2715 = vunpack.c.l.b16 %v1208
        %v2716 = vunpack.c.l.b16 %v1209
        %v2717 = vunpack.c.l.b16 %v1210
        %v2718 = vunpack.c.l.b16 %v1211
        %v2719 = vpack.c.b16 %v2716, %v2715
        %v2720 = vpack.c.b16 %v2718, %v2717
        %v2724 = vsel %vm1216, %v2709, 0
        %v2727 = vsel %vm1216, %v2710, 0
        %2729 = vmatprep.subr.bf16.mxu0 0
        %2730 = vmatpush1.bf16.msra.mxu0 0
        %2731 = vmatprep.subr.bf16.mxu0 0
        %2732 = vmatpush1.bf16.msra.mxu0 0
        %2733 = vmatprep.subr.bf16.mxu0 0
        %2734 = vmatpush1.bf16.msra.mxu0 0
        %2735 = vmatprep.subr.bf16.mxu0 0
        %2736 = vmatpush1.bf16.msra.mxu0 0
        %2737 = vmatprep.subr.bf16.mxu0 0
        %2738 = vmatpush1.bf16.msra.mxu0 0
        %2739 = vmatprep.subr.bf16.mxu0 0
        %2740 = vmatpush1.bf16.msra.mxu0 0
        %2741 = vmatprep.subr.bf16.mxu0 0
        %2742 = vmatpush1.bf16.msra.mxu0 %v2720
        %2743 = vmatprep.subr.bf16.mxu0 0
        %2744 = vmatpush1.bf16.msra.mxu0 %v2719
        %2745 = vmatprep.subr.bf16.mxu0 0
        %2746 = vmatpush2.bf16.msra.mxu0 0
        %2747 = vmatprep.subr.bf16.mxu0 0
        %2748 = vmatpush2.bf16.msra.mxu0 0
        %2749 = vmatprep.subr.bf16.mxu0 0
        %2750 = vmatpush2.bf16.msra.mxu0 0
        %2751 = vmatprep.subr.bf16.mxu0 0
        %2752 = vmatpush2.bf16.msra.mxu0 0
        %2753 = vmatprep.subr.bf16.mxu0 0
        %2754 = vmatpush2.bf16.msra.mxu0 0
        %2755 = vmatprep.subr.bf16.mxu0 0
        %2756 = vmatpush2.bf16.msra.mxu0 0
        %2757 = vmatprep.subr.bf16.mxu0 0
        %2758 = vmatpush2.bf16.msra.mxu0 0
        %2759 = vmatprep.subr.bf16.mxu0 0
        %2760 = vmatpush2.bf16.msra.mxu0 0
        %2761 = vmatprep.mubr.bf16.mxu0 0
        %2762 = vmatmul.mubr.bf16.gmra.mxu0 %v2724
        %v2763 = vpop.f32.mrf.mxu0
        %v2764 = vadd.f32 0.0, %v2763
        %v2765 = vpop.f32.mrf.mxu0
        %v2766 = vpop.f32.mrf.mxu0
        %v2767 = vadd.f32 0.0, %v2766
        %v2768 = vpop.f32.mrf.mxu0
        %2769 = vmatprep.mubr.bf16.mxu0 0
        %2770 = vmatmul.mubr.bf16.gmra.mxu0 %v2727
        %v2771 = vpop.f32.mrf.mxu0
        %v2772 = vadd.f32 0.0, %v2771
        %v2773 = vpop.f32.mrf.mxu0
        %v2774 = vpop.f32.mrf.mxu0
        %v2775 = vadd.f32 0.0, %v2774
        %v2776 = vpop.f32.mrf.mxu0
        %2777 = vdwg.mxu0
        %v2778 = vadd.f32 %v2247, %v2764
        %v2779 = vadd.f32 %v2250, %v2767
        %v2780 = vadd.f32 %v2255, %v2772
        %v2781 = vadd.f32 %v2258, %v2775
        %2782 = vrot.lane.b32.xlu0 %v1162, 32
        %v2783 = vpop.permute.xlu0 %2782
        %2784 = vrot.lane.b32.xlu0 %v1163, 32
        %v2785 = vpop.permute.xlu0 %2784
        %v2787 = vsel %vm1216, %v2783, 0
        %v2790 = vsel %vm1216, %v2785, 0
        %2792 = vmatprep.subr.bf16.mxu0 0
        %2793 = vmatpush1.bf16.xpose.msra.mxu0 0
        %2794 = vmatprep.subr.bf16.mxu0 0
        %2795 = vmatpush1.bf16.xpose.msra.mxu0 0
        %2796 = vmatprep.subr.bf16.mxu0 0
        %2797 = vmatpush1.bf16.xpose.msra.mxu0 0
        %2798 = vmatprep.subr.bf16.mxu0 0
        %2799 = vmatpush1.bf16.xpose.msra.mxu0 0
        %2800 = vmatprep.subr.bf16.mxu0 0
        %2801 = vmatpush1.bf16.xpose.msra.mxu0 0
        %2802 = vmatprep.subr.bf16.mxu0 0
        %2803 = vmatpush1.bf16.xpose.msra.mxu0 0
        %2804 = vmatprep.subr.bf16.mxu0 0
        %2805 = vmatpush1.bf16.xpose.msra.mxu0 0
        %2806 = vmatprep.subr.bf16.mxu0 0
        %2807 = vmatpush1.bf16.xpose.msra.mxu0 %v2790
        %2808 = vmatprep.subr.bf16.mxu0 0
        %2809 = vmatpush2.bf16.xpose.msra.mxu0 0
        %2810 = vmatprep.subr.bf16.mxu0 0
        %2811 = vmatpush2.bf16.xpose.msra.mxu0 0
        %2812 = vmatprep.subr.bf16.mxu0 0
        %2813 = vmatpush2.bf16.xpose.msra.mxu0 0
        %2814 = vmatprep.subr.bf16.mxu0 0
        %2815 = vmatpush2.bf16.xpose.msra.mxu0 0
        %2816 = vmatprep.subr.bf16.mxu0 0
        %2817 = vmatpush2.bf16.xpose.msra.mxu0 0
        %2818 = vmatprep.subr.bf16.mxu0 0
        %2819 = vmatpush2.bf16.xpose.msra.mxu0 0
        %2820 = vmatprep.subr.bf16.mxu0 0
        %2821 = vmatpush2.bf16.xpose.msra.mxu0 0
        %2822 = vmatprep.subr.bf16.mxu0 0
        %2823 = vmatpush2.bf16.xpose.msra.mxu0 0
        %2824 = vmatprep.mubr.bf16.mxu0 0
        %2825 = vmatmul.mubr.bf16.gmra.mxu0 %v2787
        %v2826 = vpop.f32.mrf.mxu0
        %v2827 = vadd.f32 0.0, %v2826
        %v2828 = vpop.f32.mrf.mxu0
        %v2829 = vpop.f32.mrf.mxu0
        %v2830 = vpop.f32.mrf.mxu0
        %2831 = vdwg.mxu0
        %2832 = vrot.lane.b32.xlu0 %v1165, 32
        %v2833 = vpop.permute.xlu0 %2832
        %2834 = vrot.lane.b32.xlu0 %v1166, 32
        %v2835 = vpop.permute.xlu0 %2834
        %v2837 = vsel %vm1216, %v2833, 0
        %v2840 = vsel %vm1216, %v2835, 0
        %2842 = vmatprep.subr.bf16.mxu0 0
        %2843 = vmatpush1.bf16.xpose.msra.mxu0 0
        %2844 = vmatprep.subr.bf16.mxu0 0
        %2845 = vmatpush1.bf16.xpose.msra.mxu0 0
        %2846 = vmatprep.subr.bf16.mxu0 0
        %2847 = vmatpush1.bf16.xpose.msra.mxu0 0
        %2848 = vmatprep.subr.bf16.mxu0 0
        %2849 = vmatpush1.bf16.xpose.msra.mxu0 0
        %2850 = vmatprep.subr.bf16.mxu0 0
        %2851 = vmatpush1.bf16.xpose.msra.mxu0 0
        %2852 = vmatprep.subr.bf16.mxu0 0
        %2853 = vmatpush1.bf16.xpose.msra.mxu0 0
        %2854 = vmatprep.subr.bf16.mxu0 0
        %2855 = vmatpush1.bf16.xpose.msra.mxu0 0
        %2856 = vmatprep.subr.bf16.mxu0 0
        %2857 = vmatpush1.bf16.xpose.msra.mxu0 %v2840
        %2858 = vmatprep.subr.bf16.mxu0 0
        %2859 = vmatpush2.bf16.xpose.msra.mxu0 0
        %2860 = vmatprep.subr.bf16.mxu0 0
        %2861 = vmatpush2.bf16.xpose.msra.mxu0 0
        %2862 = vmatprep.subr.bf16.mxu0 0
        %2863 = vmatpush2.bf16.xpose.msra.mxu0 0
        %2864 = vmatprep.subr.bf16.mxu0 0
        %2865 = vmatpush2.bf16.xpose.msra.mxu0 0
        %2866 = vmatprep.subr.bf16.mxu0 0
        %2867 = vmatpush2.bf16.xpose.msra.mxu0 0
        %2868 = vmatprep.subr.bf16.mxu0 0
        %2869 = vmatpush2.bf16.xpose.msra.mxu0 0
        %2870 = vmatprep.subr.bf16.mxu0 0
        %2871 = vmatpush2.bf16.xpose.msra.mxu0 0
        %2872 = vmatprep.subr.bf16.mxu0 0
        %2873 = vmatpush2.bf16.xpose.msra.mxu0 0
        %2874 = vmatprep.mubr.bf16.mxu0 0
        %2875 = vmatmul.mubr.bf16.gmra.mxu0 %v2837
        %v2876 = vpop.f32.mrf.mxu0
        %v2877 = vadd.f32 0.0, %v2876
        %v2878 = vpop.f32.mrf.mxu0
        %v2879 = vpop.f32.mrf.mxu0
        %v2880 = vpop.f32.mrf.mxu0
        %2881 = vdwg.mxu0
        %2882 = vrot.lane.b32.xlu0 %v1168, 32
        %v2883 = vpop.permute.xlu0 %2882
        %2884 = vrot.lane.b32.xlu0 %v1169, 32
        %v2885 = vpop.permute.xlu0 %2884
        %v2887 = vsel %vm1216, %v2883, 0
        %v2890 = vsel %vm1216, %v2885, 0
        %2892 = vmatprep.subr.bf16.mxu0 0
        %2893 = vmatpush1.bf16.xpose.msra.mxu0 0
        %2894 = vmatprep.subr.bf16.mxu0 0
        %2895 = vmatpush1.bf16.xpose.msra.mxu0 0
        %2896 = vmatprep.subr.bf16.mxu0 0
        %2897 = vmatpush1.bf16.xpose.msra.mxu0 0
        %2898 = vmatprep.subr.bf16.mxu0 0
        %2899 = vmatpush1.bf16.xpose.msra.mxu0 0
        %2900 = vmatprep.subr.bf16.mxu0 0
        %2901 = vmatpush1.bf16.xpose.msra.mxu0 0
        %2902 = vmatprep.subr.bf16.mxu0 0
        %2903 = vmatpush1.bf16.xpose.msra.mxu0 0
        %2904 = vmatprep.subr.bf16.mxu0 0
        %2905 = vmatpush1.bf16.xpose.msra.mxu0 0
        %2906 = vmatprep.subr.bf16.mxu0 0
        %2907 = vmatpush1.bf16.xpose.msra.mxu0 %v2890
        %2908 = vmatprep.subr.bf16.mxu0 0
        %2909 = vmatpush2.bf16.xpose.msra.mxu0 0
        %2910 = vmatprep.subr.bf16.mxu0 0
        %2911 = vmatpush2.bf16.xpose.msra.mxu0 0
        %2912 = vmatprep.subr.bf16.mxu0 0
        %2913 = vmatpush2.bf16.xpose.msra.mxu0 0
        %2914 = vmatprep.subr.bf16.mxu0 0
        %2915 = vmatpush2.bf16.xpose.msra.mxu0 0
        %2916 = vmatprep.subr.bf16.mxu0 0
        %2917 = vmatpush2.bf16.xpose.msra.mxu0 0
        %2918 = vmatprep.subr.bf16.mxu0 0
        %2919 = vmatpush2.bf16.xpose.msra.mxu0 0
        %2920 = vmatprep.subr.bf16.mxu0 0
        %2921 = vmatpush2.bf16.xpose.msra.mxu0 0
        %2922 = vmatprep.subr.bf16.mxu0 0
        %2923 = vmatpush2.bf16.xpose.msra.mxu0 0
        %2924 = vmatprep.mubr.bf16.mxu0 0
        %2925 = vmatmul.mubr.bf16.gmra.mxu0 %v2887
        %v2926 = vpop.f32.mrf.mxu0
        %v2927 = vadd.f32 0.0, %v2926
        %v2928 = vpop.f32.mrf.mxu0
        %v2929 = vpop.f32.mrf.mxu0
        %v2930 = vpop.f32.mrf.mxu0
        %2931 = vdwg.mxu0
        %2932 = vrot.lane.b32.xlu0 %v1171, 32
        %v2933 = vpop.permute.xlu0 %2932
        %2934 = vrot.lane.b32.xlu0 %v1172, 32
        %v2935 = vpop.permute.xlu0 %2934
        %v2937 = vsel %vm1216, %v2933, 0
        %v2940 = vsel %vm1216, %v2935, 0
        %2942 = vmatprep.subr.bf16.mxu0 0
        %2943 = vmatpush1.bf16.xpose.msra.mxu0 0
        %2944 = vmatprep.subr.bf16.mxu0 0
        %2945 = vmatpush1.bf16.xpose.msra.mxu0 0
        %2946 = vmatprep.subr.bf16.mxu0 0
        %2947 = vmatpush1.bf16.xpose.msra.mxu0 0
        %2948 = vmatprep.subr.bf16.mxu0 0
        %2949 = vmatpush1.bf16.xpose.msra.mxu0 0
        %2950 = vmatprep.subr.bf16.mxu0 0
        %2951 = vmatpush1.bf16.xpose.msra.mxu0 0
        %2952 = vmatprep.subr.bf16.mxu0 0
        %2953 = vmatpush1.bf16.xpose.msra.mxu0 0
        %2954 = vmatprep.subr.bf16.mxu0 0
        %2955 = vmatpush1.bf16.xpose.msra.mxu0 0
        %2956 = vmatprep.subr.bf16.mxu0 0
        %2957 = vmatpush1.bf16.xpose.msra.mxu0 %v2940
        %2958 = vmatprep.subr.bf16.mxu0 0
        %2959 = vmatpush2.bf16.xpose.msra.mxu0 0
        %2960 = vmatprep.subr.bf16.mxu0 0
        %2961 = vmatpush2.bf16.xpose.msra.mxu0 0
        %2962 = vmatprep.subr.bf16.mxu0 0
        %2963 = vmatpush2.bf16.xpose.msra.mxu0 0
        %2964 = vmatprep.subr.bf16.mxu0 0
        %2965 = vmatpush2.bf16.xpose.msra.mxu0 0
        %2966 = vmatprep.subr.bf16.mxu0 0
        %2967 = vmatpush2.bf16.xpose.msra.mxu0 0
        %2968 = vmatprep.subr.bf16.mxu0 0
        %2969 = vmatpush2.bf16.xpose.msra.mxu0 0
        %2970 = vmatprep.subr.bf16.mxu0 0
        %2971 = vmatpush2.bf16.xpose.msra.mxu0 0
        %2972 = vmatprep.subr.bf16.mxu0 0
        %2973 = vmatpush2.bf16.xpose.msra.mxu0 0
        %2974 = vmatprep.mubr.bf16.mxu0 0
        %2975 = vmatmul.mubr.bf16.gmra.mxu0 %v2937
        %v2976 = vpop.f32.mrf.mxu0
        %v2977 = vadd.f32 0.0, %v2976
        %v2978 = vpop.f32.mrf.mxu0
        %v2979 = vpop.f32.mrf.mxu0
        %v2980 = vpop.f32.mrf.mxu0
        %2981 = vdwg.mxu0
        %v2982 = vmul.f32 %v2827, 0.17677669
        %v2983 = vmul.f32 %v2877, 0.17677669
        %v2984 = vmul.f32 %v2927, 0.17677669
        %v2985 = vmul.f32 %v2977, 0.17677669
        %v2986 = vadd.f32 %v2982, %v1408
        %v2987 = vadd.f32 %v2983, %v1412
        %v2988 = vadd.f32 %v2984, %v1416
        %v2989 = vadd.f32 %v2985, %v1420
        %v2990 = vsel %vm1429, %v2986, -inf
        %2991 = vmax.xlane.f32.xlu0 %v2990
        %v2992 = vpop.xlane.xlu0 %2991
        %v2993 = vsel %vm1429, %v2987, -inf
        %2994 = vmax.xlane.f32.xlu0 %v2993
        %v2995 = vpop.xlane.xlu0 %2994
        %v2996 = vsel %vm1429, %v2988, -inf
        %2997 = vmax.xlane.f32.xlu0 %v2996
        %v2998 = vpop.xlane.xlu0 %2997
        %v2999 = vsel %vm1429, %v2989, -inf
        %3000 = vmax.xlane.f32.xlu0 %v2999
        %v3001 = vpop.xlane.xlu0 %3000
        %v3002 = vsub.f32 %v2986, %v2992
        %v3003 = vsub.f32 %v2987, %v2995
        %v3004 = vsub.f32 %v2988, %v2998
        %v3005 = vsub.f32 %v2989, %v3001
        %v3006 = vmul.f32 %v3002, 1.442695
        %v3007 = vpow.pop %v3006
        %v3008 = vmul.f32 %v3003, 1.442695
        %v3009 = vpow.pop %v3008
        %v3010 = vmul.f32 %v3004, 1.442695
        %v3011 = vpow.pop %v3010
        %v3012 = vmul.f32 %v3005, 1.442695
        %v3013 = vpow.pop %v3012
        %v3014 = vsel %vm1429, %v3007, 0.0
        %3015 = vadd.xlane.f32.xlu0 %v3014
        %v3016 = vpop.xlane.xlu0 %3015
        %v3017 = vsel %vm1429, %v3009, 0.0
        %3018 = vadd.xlane.f32.xlu0 %v3017
        %v3019 = vpop.xlane.xlu0 %3018
        %v3020 = vsel %vm1429, %v3011, 0.0
        %3021 = vadd.xlane.f32.xlu0 %v3020
        %v3022 = vpop.xlane.xlu0 %3021
        %v3023 = vsel %vm1429, %v3013, 0.0
        %3024 = vadd.xlane.f32.xlu0 %v3023
        %v3025 = vpop.xlane.xlu0 %3024
        %v3026 = vrcp.pop %v3016
        %v3027 = vrcp.pop %v3019
        %v3028 = vrcp.pop %v3022
        %v3029 = vrcp.pop %v3025
        %v3030 = vmul.f32 %v3007, %v3026
        %v3031 = vmul.f32 %v3009, %v3027
        %v3032 = vmul.f32 %v3011, %v3028
        %v3033 = vmul.f32 %v3013, %v3029
        %v3034 = vpack.c.bf16 %v3030, %v3030
        %v3035 = vpack.c.bf16 %v3031, %v3031
        %v3036 = vpack.c.bf16 %v3032, %v3032
        %v3037 = vpack.c.bf16 %v3033, %v3033
        %3038 = vrot.lane.b32.xlu0 %v1164, 32
        %v3039 = vpop.permute.xlu0 %3038
        %v3041 = vsel %vm1429, %v3034, 0
        %v3044 = vsel %vm1481, %v3039, 0
        %3046 = vmatprep.subr.bf16.mxu0 0
        %3047 = vmatpush1.bf16.msra.mxu0 0
        %3048 = vmatprep.subr.bf16.mxu0 0
        %3049 = vmatpush1.bf16.msra.mxu0 0
        %3050 = vmatprep.subr.bf16.mxu0 0
        %3051 = vmatpush1.bf16.msra.mxu0 0
        %3052 = vmatprep.subr.bf16.mxu0 0
        %3053 = vmatpush1.bf16.msra.mxu0 0
        %3054 = vmatprep.subr.bf16.mxu0 0
        %3055 = vmatpush1.bf16.msra.mxu0 0
        %3056 = vmatprep.subr.bf16.mxu0 0
        %3057 = vmatpush1.bf16.msra.mxu0 0
        %3058 = vmatprep.subr.bf16.mxu0 0
        %3059 = vmatpush1.bf16.msra.mxu0 0
        %3060 = vmatprep.subr.bf16.mxu0 0
        %3061 = vmatpush1.bf16.msra.mxu0 %v3044
        %3062 = vmatprep.subr.bf16.mxu0 0
        %3063 = vmatpush2.bf16.msra.mxu0 0
        %3064 = vmatprep.subr.bf16.mxu0 0
        %3065 = vmatpush2.bf16.msra.mxu0 0
        %3066 = vmatprep.subr.bf16.mxu0 0
        %3067 = vmatpush2.bf16.msra.mxu0 0
        %3068 = vmatprep.subr.bf16.mxu0 0
        %3069 = vmatpush2.bf16.msra.mxu0 0
        %3070 = vmatprep.subr.bf16.mxu0 0
        %3071 = vmatpush2.bf16.msra.mxu0 0
        %3072 = vmatprep.subr.bf16.mxu0 0
        %3073 = vmatpush2.bf16.msra.mxu0 0
        %3074 = vmatprep.subr.bf16.mxu0 0
        %3075 = vmatpush2.bf16.msra.mxu0 0
        %3076 = vmatprep.subr.bf16.mxu0 0
        %3077 = vmatpush2.bf16.msra.mxu0 0
        %3078 = vmatprep.mubr.bf16.mxu0 0
        %3079 = vmatmul.mubr.bf16.gmra.mxu0 %v3041
        %v3080 = vpop.f32.mrf.mxu0
        %v3081 = vadd.f32 0.0, %v3080
        %v3082 = vpop.f32.mrf.mxu0
        %v3083 = vpop.f32.mrf.mxu0
        %v3084 = vpop.f32.mrf.mxu0
        %3085 = vdwg.mxu0
        %3086 = vrot.lane.b32.xlu0 %v1167, 32
        %v3087 = vpop.permute.xlu0 %3086
        %v3089 = vsel %vm1429, %v3035, 0
        %v3092 = vsel %vm1481, %v3087, 0
        %3094 = vmatprep.subr.bf16.mxu0 0
        %3095 = vmatpush1.bf16.msra.mxu0 0
        %3096 = vmatprep.subr.bf16.mxu0 0
        %3097 = vmatpush1.bf16.msra.mxu0 0
        %3098 = vmatprep.subr.bf16.mxu0 0
        %3099 = vmatpush1.bf16.msra.mxu0 0
        %3100 = vmatprep.subr.bf16.mxu0 0
        %3101 = vmatpush1.bf16.msra.mxu0 0
        %3102 = vmatprep.subr.bf16.mxu0 0
        %3103 = vmatpush1.bf16.msra.mxu0 0
        %3104 = vmatprep.subr.bf16.mxu0 0
        %3105 = vmatpush1.bf16.msra.mxu0 0
        %3106 = vmatprep.subr.bf16.mxu0 0
        %3107 = vmatpush1.bf16.msra.mxu0 0
        %3108 = vmatprep.subr.bf16.mxu0 0
        %3109 = vmatpush1.bf16.msra.mxu0 %v3092
        %3110 = vmatprep.subr.bf16.mxu0 0
        %3111 = vmatpush2.bf16.msra.mxu0 0
        %3112 = vmatprep.subr.bf16.mxu0 0
        %3113 = vmatpush2.bf16.msra.mxu0 0
        %3114 = vmatprep.subr.bf16.mxu0 0
        %3115 = vmatpush2.bf16.msra.mxu0 0
        %3116 = vmatprep.subr.bf16.mxu0 0
        %3117 = vmatpush2.bf16.msra.mxu0 0
        %3118 = vmatprep.subr.bf16.mxu0 0
        %3119 = vmatpush2.bf16.msra.mxu0 0
        %3120 = vmatprep.subr.bf16.mxu0 0
        %3121 = vmatpush2.bf16.msra.mxu0 0
        %3122 = vmatprep.subr.bf16.mxu0 0
        %3123 = vmatpush2.bf16.msra.mxu0 0
        %3124 = vmatprep.subr.bf16.mxu0 0
        %3125 = vmatpush2.bf16.msra.mxu0 0
        %3126 = vmatprep.mubr.bf16.mxu0 0
        %3127 = vmatmul.mubr.bf16.gmra.mxu0 %v3089
        %v3128 = vpop.f32.mrf.mxu0
        %v3129 = vadd.f32 0.0, %v3128
        %v3130 = vpop.f32.mrf.mxu0
        %v3131 = vpop.f32.mrf.mxu0
        %v3132 = vpop.f32.mrf.mxu0
        %3133 = vdwg.mxu0
        %3134 = vrot.lane.b32.xlu0 %v1170, 32
        %v3135 = vpop.permute.xlu0 %3134
        %v3137 = vsel %vm1429, %v3036, 0
        %v3140 = vsel %vm1481, %v3135, 0
        %3142 = vmatprep.subr.bf16.mxu0 0
        %3143 = vmatpush1.bf16.msra.mxu0 0
        %3144 = vmatprep.subr.bf16.mxu0 0
        %3145 = vmatpush1.bf16.msra.mxu0 0
        %3146 = vmatprep.subr.bf16.mxu0 0
        %3147 = vmatpush1.bf16.msra.mxu0 0
        %3148 = vmatprep.subr.bf16.mxu0 0
        %3149 = vmatpush1.bf16.msra.mxu0 0
        %3150 = vmatprep.subr.bf16.mxu0 0
        %3151 = vmatpush1.bf16.msra.mxu0 0
        %3152 = vmatprep.subr.bf16.mxu0 0
        %3153 = vmatpush1.bf16.msra.mxu0 0
        %3154 = vmatprep.subr.bf16.mxu0 0
        %3155 = vmatpush1.bf16.msra.mxu0 0
        %3156 = vmatprep.subr.bf16.mxu0 0
        %3157 = vmatpush1.bf16.msra.mxu0 %v3140
        %3158 = vmatprep.subr.bf16.mxu0 0
        %3159 = vmatpush2.bf16.msra.mxu0 0
        %3160 = vmatprep.subr.bf16.mxu0 0
        %3161 = vmatpush2.bf16.msra.mxu0 0
        %3162 = vmatprep.subr.bf16.mxu0 0
        %3163 = vmatpush2.bf16.msra.mxu0 0
        %3164 = vmatprep.subr.bf16.mxu0 0
        %3165 = vmatpush2.bf16.msra.mxu0 0
        %3166 = vmatprep.subr.bf16.mxu0 0
        %3167 = vmatpush2.bf16.msra.mxu0 0
        %3168 = vmatprep.subr.bf16.mxu0 0
        %3169 = vmatpush2.bf16.msra.mxu0 0
        %3170 = vmatprep.subr.bf16.mxu0 0
        %3171 = vmatpush2.bf16.msra.mxu0 0
        %3172 = vmatprep.subr.bf16.mxu0 0
        %3173 = vmatpush2.bf16.msra.mxu0 0
        %3174 = vmatprep.mubr.bf16.mxu0 0
        %3175 = vmatmul.mubr.bf16.gmra.mxu0 %v3137
        %v3176 = vpop.f32.mrf.mxu0
        %v3177 = vadd.f32 0.0, %v3176
        %v3178 = vpop.f32.mrf.mxu0
        %v3179 = vpop.f32.mrf.mxu0
        %v3180 = vpop.f32.mrf.mxu0
        %3181 = vdwg.mxu0
        %3182 = vrot.lane.b32.xlu0 %v1173, 32
        %v3183 = vpop.permute.xlu0 %3182
        %v3185 = vsel %vm1429, %v3037, 0
        %v3188 = vsel %vm1481, %v3183, 0
        %3190 = vmatprep.subr.bf16.mxu0 0
        %3191 = vmatpush1.bf16.msra.mxu0 0
        %3192 = vmatprep.subr.bf16.mxu0 0
        %3193 = vmatpush1.bf16.msra.mxu0 0
        %3194 = vmatprep.subr.bf16.mxu0 0
        %3195 = vmatpush1.bf16.msra.mxu0 0
        %3196 = vmatprep.subr.bf16.mxu0 0
        %3197 = vmatpush1.bf16.msra.mxu0 0
        %3198 = vmatprep.subr.bf16.mxu0 0
        %3199 = vmatpush1.bf16.msra.mxu0 0
        %3200 = vmatprep.subr.bf16.mxu0 0
        %3201 = vmatpush1.bf16.msra.mxu0 0
        %3202 = vmatprep.subr.bf16.mxu0 0
        %3203 = vmatpush1.bf16.msra.mxu0 0
        %3204 = vmatprep.subr.bf16.mxu0 0
        %3205 = vmatpush1.bf16.msra.mxu0 %v3188
        %3206 = vmatprep.subr.bf16.mxu0 0
        %3207 = vmatpush2.bf16.msra.mxu0 0
        %3208 = vmatprep.subr.bf16.mxu0 0
        %3209 = vmatpush2.bf16.msra.mxu0 0
        %3210 = vmatprep.subr.bf16.mxu0 0
        %3211 = vmatpush2.bf16.msra.mxu0 0
        %3212 = vmatprep.subr.bf16.mxu0 0
        %3213 = vmatpush2.bf16.msra.mxu0 0
        %3214 = vmatprep.subr.bf16.mxu0 0
        %3215 = vmatpush2.bf16.msra.mxu0 0
        %3216 = vmatprep.subr.bf16.mxu0 0
        %3217 = vmatpush2.bf16.msra.mxu0 0
        %3218 = vmatprep.subr.bf16.mxu0 0
        %3219 = vmatpush2.bf16.msra.mxu0 0
        %3220 = vmatprep.subr.bf16.mxu0 0
        %3221 = vmatpush2.bf16.msra.mxu0 0
        %3222 = vmatprep.mubr.bf16.mxu0 0
        %3223 = vmatmul.mubr.bf16.gmra.mxu0 %v3185
        %v3224 = vpop.f32.mrf.mxu0
        %v3225 = vadd.f32 0.0, %v3224
        %v3226 = vpop.f32.mrf.mxu0
        %v3227 = vpop.f32.mrf.mxu0
        %v3228 = vpop.f32.mrf.mxu0
        %3229 = vdwg.mxu0
        %v3230 = vpack.c.bf16 %v3129, %v3081
        %v3231 = vpack.c.bf16 %v3225, %v3177
        %v3236 = vunpack.c.l.b16 %v1212
        %v3237 = vunpack.c.l.b16 %v1213
        %v3238 = vunpack.c.l.b16 %v1214
        %v3239 = vunpack.c.l.b16 %v1215
        %v3240 = vpack.c.b16 %v3237, %v3236
        %v3241 = vpack.c.b16 %v3239, %v3238
        %v3245 = vsel %vm1216, %v3230, 0
        %v3248 = vsel %vm1216, %v3231, 0
        %3250 = vmatprep.subr.bf16.mxu0 0
        %3251 = vmatpush1.bf16.msra.mxu0 0
        %3252 = vmatprep.subr.bf16.mxu0 0
        %3253 = vmatpush1.bf16.msra.mxu0 0
        %3254 = vmatprep.subr.bf16.mxu0 0
        %3255 = vmatpush1.bf16.msra.mxu0 0
        %3256 = vmatprep.subr.bf16.mxu0 0
        %3257 = vmatpush1.bf16.msra.mxu0 0
        %3258 = vmatprep.subr.bf16.mxu0 0
        %3259 = vmatpush1.bf16.msra.mxu0 0
        %3260 = vmatprep.subr.bf16.mxu0 0
        %3261 = vmatpush1.bf16.msra.mxu0 0
        %3262 = vmatprep.subr.bf16.mxu0 0
        %3263 = vmatpush1.bf16.msra.mxu0 %v3241
        %3264 = vmatprep.subr.bf16.mxu0 0
        %3265 = vmatpush1.bf16.msra.mxu0 %v3240
        %3266 = vmatprep.subr.bf16.mxu0 0
        %3267 = vmatpush2.bf16.msra.mxu0 0
        %3268 = vmatprep.subr.bf16.mxu0 0
        %3269 = vmatpush2.bf16.msra.mxu0 0
        %3270 = vmatprep.subr.bf16.mxu0 0
        %3271 = vmatpush2.bf16.msra.mxu0 0
        %3272 = vmatprep.subr.bf16.mxu0 0
        %3273 = vmatpush2.bf16.msra.mxu0 0
        %3274 = vmatprep.subr.bf16.mxu0 0
        %3275 = vmatpush2.bf16.msra.mxu0 0
        %3276 = vmatprep.subr.bf16.mxu0 0
        %3277 = vmatpush2.bf16.msra.mxu0 0
        %3278 = vmatprep.subr.bf16.mxu0 0
        %3279 = vmatpush2.bf16.msra.mxu0 0
        %3280 = vmatprep.subr.bf16.mxu0 0
        %3281 = vmatpush2.bf16.msra.mxu0 0
        %3282 = vmatprep.mubr.bf16.mxu0 0
        %3283 = vmatmul.mubr.bf16.gmra.mxu0 %v3245
        %v3284 = vpop.f32.mrf.mxu0
        %v3285 = vadd.f32 0.0, %v3284
        %v3286 = vpop.f32.mrf.mxu0
        %v3287 = vpop.f32.mrf.mxu0
        %v3288 = vadd.f32 0.0, %v3287
        %v3289 = vpop.f32.mrf.mxu0
        %3290 = vmatprep.mubr.bf16.mxu0 0
        %3291 = vmatmul.mubr.bf16.gmra.mxu0 %v3248
        %v3292 = vpop.f32.mrf.mxu0
        %v3293 = vadd.f32 0.0, %v3292
        %v3294 = vpop.f32.mrf.mxu0
        %v3295 = vpop.f32.mrf.mxu0
        %v3296 = vadd.f32 0.0, %v3295
        %v3297 = vpop.f32.mrf.mxu0
        %3298 = vdwg.mxu0
        %v3299 = vadd.f32 %v2778, %v3285
        %v3300 = vadd.f32 %v2779, %v3288
        %v3301 = vadd.f32 %v2780, %v3293
        %v3302 = vadd.f32 %v2781, %v3296
        %v3303 = vld [vmem:[%s749] sm:$0x1]
        %v3305 = vlaneseq
        %v3306 = vshrl.u32 %v3305, 7
        %v3307 = vsub.s32 0, %v3306
        %v3308 = vrot.slane %v3303, %v3307
        %v3310 = vadd.f32 %v3299, %v3308
        %v3311 = vadd.f32 %v3300, %v3308
        %v3312 = vadd.f32 %v3301, %v3308
        %v3313 = vadd.f32 %v3302, %v3308
        %v3314 = vadd.f32 %v877, %v3310
        %v3315 = vadd.f32 %v878, %v3311
        %v3316 = vadd.f32 %v879, %v3312
        %v3317 = vadd.f32 %v880, %v3313
        %v3318 = vld [vmem:[%s752] sm:$0x1]
        %v3319 = vld [vmem:[%s755] sm:$0x1]
        %3320 = vadd.xlane.f32.xlu0 %v3314
        %v3321 = vpop.xlane.xlu0 %3320
        %3322 = vadd.xlane.f32.xlu0 %v3315
        %v3323 = vpop.xlane.xlu0 %3322
        %3324 = vadd.xlane.f32.xlu0 %v3316
        %v3325 = vpop.xlane.xlu0 %3324
        %3326 = vadd.xlane.f32.xlu0 %v3317
        %v3327 = vpop.xlane.xlu0 %3326
        %v3328 = vrcp.pop 128.0
        %v3329 = vmul.f32 %v3321, %v3328
        %v3330 = vmul.f32 %v3323, %v3328
        %v3331 = vmul.f32 %v3325, %v3328
        %v3332 = vmul.f32 %v3327, %v3328
        %v3333 = vmul.f32 %v3314, %v3314
        %v3334 = vmul.f32 %v3315, %v3315
        %v3335 = vmul.f32 %v3316, %v3316
        %v3336 = vmul.f32 %v3317, %v3317
        %3337 = vadd.xlane.f32.xlu0 %v3333
        %v3338 = vpop.xlane.xlu0 %3337
        %3339 = vadd.xlane.f32.xlu0 %v3334
        %v3340 = vpop.xlane.xlu0 %3339
        %3341 = vadd.xlane.f32.xlu0 %v3335
        %v3342 = vpop.xlane.xlu0 %3341
        %3343 = vadd.xlane.f32.xlu0 %v3336
        %v3344 = vpop.xlane.xlu0 %3343
        %v3345 = vmul.f32 %v3338, %v3328
        %v3346 = vmul.f32 %v3340, %v3328
        %v3347 = vmul.f32 %v3342, %v3328
        %v3348 = vmul.f32 %v3344, %v3328
        %v3349 = vmul.f32 %v3329, %v3329
        %v3350 = vmul.f32 %v3330, %v3330
        %v3351 = vmul.f32 %v3331, %v3331
        %v3352 = vmul.f32 %v3332, %v3332
        %v3353 = vsub.f32 %v3345, %v3349
        %v3354 = vsub.f32 %v3346, %v3350
        %v3355 = vsub.f32 %v3347, %v3351
        %v3356 = vsub.f32 %v3348, %v3352
        %v3357 = vsub.f32 %v3314, %v3329
        %v3358 = vsub.f32 %v3315, %v3330
        %v3359 = vsub.f32 %v3316, %v3331
        %v3360 = vsub.f32 %v3317, %v3332
        %v3361 = vadd.f32 %v3353, 1e-12
        %v3362 = vadd.f32 %v3354, 1e-12
        %v3363 = vadd.f32 %v3355, 1e-12
        %v3364 = vadd.f32 %v3356, 1e-12
        %v3365 = vrsqrt.pop %v3361
        %v3366 = vrsqrt.pop %v3362
        %v3367 = vrsqrt.pop %v3363
        %v3368 = vrsqrt.pop %v3364
        %v3369 = vmul.f32 %v3357, %v3365
        %v3370 = vmul.f32 %v3358, %v3366
        %v3371 = vmul.f32 %v3359, %v3367
        %v3372 = vmul.f32 %v3360, %v3368
        %v3374 = vlaneseq
        %v3375 = vshrl.u32 %v3374, 7
        %v3376 = vsub.s32 0, %v3375
        %v3377 = vrot.slane %v3318, %v3376
        %v3379 = vmul.f32 %v3369, %v3377
        %v3380 = vmul.f32 %v3370, %v3377
        %v3381 = vmul.f32 %v3371, %v3377
        %v3382 = vmul.f32 %v3372, %v3377
        %v3384 = vlaneseq
        %v3385 = vshrl.u32 %v3384, 7
        %v3386 = vsub.s32 0, %v3385
        %v3387 = vrot.slane %v3319, %v3386
        %v3389 = vadd.f32 %v3379, %v3387
        %v3390 = vadd.f32 %v3380, %v3387
        %v3391 = vadd.f32 %v3381, %v3387
        %v3392 = vadd.f32 %v3382, %v3387
        %v3393 = vpack.c.bf16 %v3390, %v3389
        %v3394 = vpack.c.bf16 %v3392, %v3391
        %v3395 = vld [vmem:[%s642] sm:$0xff]
        %v3396 = vld [vmem:[%s642 + $0x8] sm:$0xff]
        %v3397 = vld [vmem:[%s642 + $0x10] sm:$0xff]
        %v3398 = vld [vmem:[%s642 + $0x18] sm:$0xff]
        %v3399 = vld [vmem:[%s642 + $0x20] sm:$0xff]
        %v3400 = vld [vmem:[%s642 + $0x28] sm:$0xff]
        %v3401 = vld [vmem:[%s642 + $0x30] sm:$0xff]
        %v3402 = vld [vmem:[%s642 + $0x38] sm:$0xff]
        %v3403 = vld [vmem:[%s642 + $0x40] sm:$0xff]
        %v3404 = vld [vmem:[%s642 + $0x48] sm:$0xff]
        %v3405 = vld [vmem:[%s642 + $0x50] sm:$0xff]
        %v3406 = vld [vmem:[%s642 + $0x58] sm:$0xff]
        %v3407 = vld [vmem:[%s642 + $0x60] sm:$0xff]
        %v3408 = vld [vmem:[%s642 + $0x68] sm:$0xff]
        %v3409 = vld [vmem:[%s642 + $0x70] sm:$0xff]
        %v3410 = vld [vmem:[%s642 + $0x78] sm:$0xff]
        %v3411 = vld [vmem:[%s642 + $0x80] sm:$0xff]
        %v3412 = vld [vmem:[%s642 + $0x88] sm:$0xff]
        %v3413 = vld [vmem:[%s642 + $0x90] sm:$0xff]
        %v3414 = vld [vmem:[%s642 + $0x98] sm:$0xff]
        %v3415 = vld [vmem:[%s642 + $0xa0] sm:$0xff]
        %v3416 = vld [vmem:[%s642 + $0xa8] sm:$0xff]
        %v3417 = vld [vmem:[%s642 + $0xb0] sm:$0xff]
        %v3418 = vld [vmem:[%s642 + $0xb8] sm:$0xff]
        %v3419 = vld [vmem:[%s642 + $0xc0] sm:$0xff]
        %v3420 = vld [vmem:[%s642 + $0xc8] sm:$0xff]
        %v3421 = vld [vmem:[%s642 + $0xd0] sm:$0xff]
        %v3422 = vld [vmem:[%s642 + $0xd8] sm:$0xff]
        %v3423 = vld [vmem:[%s642 + $0xe0] sm:$0xff]
        %v3424 = vld [vmem:[%s642 + $0xe8] sm:$0xff]
        %v3425 = vld [vmem:[%s642 + $0xf0] sm:$0xff]
        %v3426 = vld [vmem:[%s642 + $0xf8] sm:$0xff]
        %v3427 = vld [vmem:[%s759] sm:$0xf]
        %v3429 = vlaneseq
        %v3430 = vshrl.u32 %v3429, 7
        %v3431 = vsub.s32 0, %v3430
        %v3432 = vrot.slane %v3427, %v3431
        %v3433 = vlaneseq
        %v3434 = vshrl.u32 %v3433, 7
        %v3435 = vsub.s32 1, %v3434
        %v3436 = vrot.slane %v3427, %v3435
        %v3437 = vlaneseq
        %v3438 = vshrl.u32 %v3437, 7
        %v3439 = vsub.s32 2, %v3438
        %v3440 = vrot.slane %v3427, %v3439
        %v3441 = vlaneseq
        %v3442 = vshrl.u32 %v3441, 7
        %v3443 = vsub.s32 3, %v3442
        %v3444 = vrot.slane %v3427, %v3443
        %v3481 = vunpack.c.l.b16 %v3395
        %v3482 = vunpack.c.h.b16 %v3395
        %v3483 = vunpack.c.l.b16 %v3396
        %v3484 = vunpack.c.h.b16 %v3396
        %v3485 = vunpack.c.l.b16 %v3397
        %v3486 = vunpack.c.h.b16 %v3397
        %v3487 = vunpack.c.l.b16 %v3398
        %v3488 = vunpack.c.h.b16 %v3398
        %v3489 = vunpack.c.l.b16 %v3399
        %v3490 = vunpack.c.h.b16 %v3399
        %v3491 = vunpack.c.l.b16 %v3400
        %v3492 = vunpack.c.h.b16 %v3400
        %v3493 = vunpack.c.l.b16 %v3401
        %v3494 = vunpack.c.h.b16 %v3401
        %v3495 = vunpack.c.l.b16 %v3402
        %v3496 = vunpack.c.h.b16 %v3402
        %v3497 = vunpack.c.l.b16 %v3403
        %v3498 = vunpack.c.h.b16 %v3403
        %v3499 = vunpack.c.l.b16 %v3404
        %v3500 = vunpack.c.h.b16 %v3404
        %v3501 = vunpack.c.l.b16 %v3405
        %v3502 = vunpack.c.h.b16 %v3405
        %v3503 = vunpack.c.l.b16 %v3406
        %v3504 = vunpack.c.h.b16 %v3406
        %v3505 = vunpack.c.l.b16 %v3407
        %v3506 = vunpack.c.h.b16 %v3407
        %v3507 = vunpack.c.l.b16 %v3408
        %v3508 = vunpack.c.h.b16 %v3408
        %v3509 = vunpack.c.l.b16 %v3409
        %v3510 = vunpack.c.h.b16 %v3409
        %v3511 = vunpack.c.l.b16 %v3410
        %v3512 = vunpack.c.h.b16 %v3410
        %v3513 = vunpack.c.l.b16 %v3411
        %v3514 = vunpack.c.h.b16 %v3411
        %v3515 = vunpack.c.l.b16 %v3412
        %v3516 = vunpack.c.h.b16 %v3412
        %v3517 = vunpack.c.l.b16 %v3413
        %v3518 = vunpack.c.h.b16 %v3413
        %v3519 = vunpack.c.l.b16 %v3414
        %v3520 = vunpack.c.h.b16 %v3414
        %v3521 = vunpack.c.l.b16 %v3415
        %v3522 = vunpack.c.h.b16 %v3415
        %v3523 = vunpack.c.l.b16 %v3416
        %v3524 = vunpack.c.h.b16 %v3416
        %v3525 = vunpack.c.l.b16 %v3417
        %v3526 = vunpack.c.h.b16 %v3417
        %v3527 = vunpack.c.l.b16 %v3418
        %v3528 = vunpack.c.h.b16 %v3418
        %v3529 = vunpack.c.l.b16 %v3419
        %v3530 = vunpack.c.h.b16 %v3419
        %v3531 = vunpack.c.l.b16 %v3420
        %v3532 = vunpack.c.h.b16 %v3420
        %v3533 = vunpack.c.l.b16 %v3421
        %v3534 = vunpack.c.h.b16 %v3421
        %v3535 = vunpack.c.l.b16 %v3422
        %v3536 = vunpack.c.h.b16 %v3422
        %v3537 = vunpack.c.l.b16 %v3423
        %v3538 = vunpack.c.h.b16 %v3423
        %v3539 = vunpack.c.l.b16 %v3424
        %v3540 = vunpack.c.h.b16 %v3424
        %v3541 = vunpack.c.l.b16 %v3425
        %v3542 = vunpack.c.h.b16 %v3425
        %v3543 = vunpack.c.l.b16 %v3426
        %v3544 = vunpack.c.h.b16 %v3426
        %v3545 = vpack.c.b16 %v3485, %v3481
        %v3546 = vpack.c.b16 %v3486, %v3482
        %v3547 = vpack.c.b16 %v3487, %v3483
        %v3548 = vpack.c.b16 %v3488, %v3484
        %v3549 = vpack.c.b16 %v3493, %v3489
        %v3550 = vpack.c.b16 %v3494, %v3490
        %v3551 = vpack.c.b16 %v3495, %v3491
        %v3552 = vpack.c.b16 %v3496, %v3492
        %v3553 = vpack.c.b16 %v3501, %v3497
        %v3554 = vpack.c.b16 %v3502, %v3498
        %v3555 = vpack.c.b16 %v3503, %v3499
        %v3556 = vpack.c.b16 %v3504, %v3500
        %v3557 = vpack.c.b16 %v3509, %v3505
        %v3558 = vpack.c.b16 %v3510, %v3506
        %v3559 = vpack.c.b16 %v3511, %v3507
        %v3560 = vpack.c.b16 %v3512, %v3508
        %v3561 = vpack.c.b16 %v3517, %v3513
        %v3562 = vpack.c.b16 %v3518, %v3514
        %v3563 = vpack.c.b16 %v3519, %v3515
        %v3564 = vpack.c.b16 %v3520, %v3516
        %v3565 = vpack.c.b16 %v3525, %v3521
        %v3566 = vpack.c.b16 %v3526, %v3522
        %v3567 = vpack.c.b16 %v3527, %v3523
        %v3568 = vpack.c.b16 %v3528, %v3524
        %v3569 = vpack.c.b16 %v3533, %v3529
        %v3570 = vpack.c.b16 %v3534, %v3530
        %v3571 = vpack.c.b16 %v3535, %v3531
        %v3572 = vpack.c.b16 %v3536, %v3532
        %v3573 = vpack.c.b16 %v3541, %v3537
        %v3574 = vpack.c.b16 %v3542, %v3538
        %v3575 = vpack.c.b16 %v3543, %v3539
        %v3576 = vpack.c.b16 %v3544, %v3540
        %3609 = vmatprep.subr.bf16.mxu0 %v3574
        %3610 = vmatpush1.bf16.msra.mxu0 %v3573
        %3611 = vmatprep.subr.bf16.mxu0 %v3570
        %3612 = vmatpush1.bf16.msra.mxu0 %v3569
        %3613 = vmatprep.subr.bf16.mxu0 %v3566
        %3614 = vmatpush1.bf16.msra.mxu0 %v3565
        %3615 = vmatprep.subr.bf16.mxu0 %v3562
        %3616 = vmatpush1.bf16.msra.mxu0 %v3561
        %3617 = vmatprep.subr.bf16.mxu0 %v3558
        %3618 = vmatpush1.bf16.msra.mxu0 %v3557
        %3619 = vmatprep.subr.bf16.mxu0 %v3554
        %3620 = vmatpush1.bf16.msra.mxu0 %v3553
        %3621 = vmatprep.subr.bf16.mxu0 %v3550
        %3622 = vmatpush1.bf16.msra.mxu0 %v3549
        %3623 = vmatprep.subr.bf16.mxu0 %v3546
        %3624 = vmatpush1.bf16.msra.mxu0 %v3545
        %3625 = vmatprep.subr.bf16.mxu0 0
        %3626 = vmatpush2.bf16.msra.mxu0 0
        %3627 = vmatprep.subr.bf16.mxu0 0
        %3628 = vmatpush2.bf16.msra.mxu0 0
        %3629 = vmatprep.subr.bf16.mxu0 0
        %3630 = vmatpush2.bf16.msra.mxu0 0
        %3631 = vmatprep.subr.bf16.mxu0 0
        %3632 = vmatpush2.bf16.msra.mxu0 0
        %3633 = vmatprep.subr.bf16.mxu0 0
        %3634 = vmatpush2.bf16.msra.mxu0 0
        %3635 = vmatprep.subr.bf16.mxu0 0
        %3636 = vmatpush2.bf16.msra.mxu0 0
        %3637 = vmatprep.subr.bf16.mxu0 0
        %3638 = vmatpush2.bf16.msra.mxu0 0
        %3639 = vmatprep.subr.bf16.mxu0 0
        %3640 = vmatpush2.bf16.msra.mxu0 0
        %3641 = vmatprep.mubr.bf16.mxu0 0
        %3642 = vmatmul.mubr.bf16.gmra.mxu0 %v3393
        %v3643 = vpop.f32.mrf.mxu0
        %v3644 = vadd.f32 %v3432, %v3643
        %v3645 = vpop.f32.mrf.mxu0
        %v3646 = vadd.f32 %v3436, %v3645
        %v3647 = vpop.f32.mrf.mxu0
        %v3648 = vadd.f32 %v3432, %v3647
        %v3649 = vpop.f32.mrf.mxu0
        %v3650 = vadd.f32 %v3436, %v3649
        %3651 = vmatprep.mubr.bf16.mxu0 0
        %3652 = vmatmul.mubr.bf16.gmra.mxu0 %v3394
        %v3653 = vpop.f32.mrf.mxu0
        %v3654 = vadd.f32 %v3432, %v3653
        %v3655 = vpop.f32.mrf.mxu0
        %v3656 = vadd.f32 %v3436, %v3655
        %v3657 = vpop.f32.mrf.mxu0
        %v3658 = vadd.f32 %v3432, %v3657
        %v3659 = vpop.f32.mrf.mxu0
        %v3660 = vadd.f32 %v3436, %v3659
        %3661 = vdwg.mxu0
        %3662 = vmatprep.subr.bf16.mxu0 %v3576
        %3663 = vmatpush1.bf16.msra.mxu0 %v3575
        %3664 = vmatprep.subr.bf16.mxu0 %v3572
        %3665 = vmatpush1.bf16.msra.mxu0 %v3571
        %3666 = vmatprep.subr.bf16.mxu0 %v3568
        %3667 = vmatpush1.bf16.msra.mxu0 %v3567
        %3668 = vmatprep.subr.bf16.mxu0 %v3564
        %3669 = vmatpush1.bf16.msra.mxu0 %v3563
        %3670 = vmatprep.subr.bf16.mxu0 %v3560
        %3671 = vmatpush1.bf16.msra.mxu0 %v3559
        %3672 = vmatprep.subr.bf16.mxu0 %v3556
        %3673 = vmatpush1.bf16.msra.mxu0 %v3555
        %3674 = vmatprep.subr.bf16.mxu0 %v3552
        %3675 = vmatpush1.bf16.msra.mxu0 %v3551
        %3676 = vmatprep.subr.bf16.mxu0 %v3548
        %3677 = vmatpush1.bf16.msra.mxu0 %v3547
        %3678 = vmatprep.subr.bf16.mxu0 0
        %3679 = vmatpush2.bf16.msra.mxu0 0
        %3680 = vmatprep.subr.bf16.mxu0 0
        %3681 = vmatpush2.bf16.msra.mxu0 0
        %3682 = vmatprep.subr.bf16.mxu0 0
        %3683 = vmatpush2.bf16.msra.mxu0 0
        %3684 = vmatprep.subr.bf16.mxu0 0
        %3685 = vmatpush2.bf16.msra.mxu0 0
        %3686 = vmatprep.subr.bf16.mxu0 0
        %3687 = vmatpush2.bf16.msra.mxu0 0
        %3688 = vmatprep.subr.bf16.mxu0 0
        %3689 = vmatpush2.bf16.msra.mxu0 0
        %3690 = vmatprep.subr.bf16.mxu0 0
        %3691 = vmatpush2.bf16.msra.mxu0 0
        %3692 = vmatprep.subr.bf16.mxu0 0
        %3693 = vmatpush2.bf16.msra.mxu0 0
        %3694 = vmatprep.mubr.bf16.mxu0 0
        %3695 = vmatmul.mubr.bf16.gmra.mxu0 %v3393
        %v3696 = vpop.f32.mrf.mxu0
        %v3697 = vadd.f32 %v3440, %v3696
        %v3698 = vpop.f32.mrf.mxu0
        %v3699 = vadd.f32 %v3444, %v3698
        %v3700 = vpop.f32.mrf.mxu0
        %v3701 = vadd.f32 %v3440, %v3700
        %v3702 = vpop.f32.mrf.mxu0
        %v3703 = vadd.f32 %v3444, %v3702
        %3704 = vmatprep.mubr.bf16.mxu0 0
        %3705 = vmatmul.mubr.bf16.gmra.mxu0 %v3394
        %v3706 = vpop.f32.mrf.mxu0
        %v3707 = vadd.f32 %v3440, %v3706
        %v3708 = vpop.f32.mrf.mxu0
        %v3709 = vadd.f32 %v3444, %v3708
        %v3710 = vpop.f32.mrf.mxu0
        %v3711 = vadd.f32 %v3440, %v3710
        %v3712 = vpop.f32.mrf.mxu0
        %v3713 = vadd.f32 %v3444, %v3712
        %3714 = vdwg.mxu0
        %v3715 = vmul.f32 %v3644, %v3644
        %v3716 = vmul.f32 %v3646, %v3646
        %v3717 = vmul.f32 %v3697, %v3697
        %v3718 = vmul.f32 %v3699, %v3699
        %v3719 = vmul.f32 %v3648, %v3648
        %v3720 = vmul.f32 %v3650, %v3650
        %v3721 = vmul.f32 %v3701, %v3701
        %v3722 = vmul.f32 %v3703, %v3703
        %v3723 = vmul.f32 %v3654, %v3654
        %v3724 = vmul.f32 %v3656, %v3656
        %v3725 = vmul.f32 %v3707, %v3707
        %v3726 = vmul.f32 %v3709, %v3709
        %v3727 = vmul.f32 %v3658, %v3658
        %v3728 = vmul.f32 %v3660, %v3660
        %v3729 = vmul.f32 %v3711, %v3711
        %v3730 = vmul.f32 %v3713, %v3713
        %v3731 = vmul.f32 %v3644, %v3715
        %v3732 = vmul.f32 %v3646, %v3716
        %v3733 = vmul.f32 %v3697, %v3717
        %v3734 = vmul.f32 %v3699, %v3718
        %v3735 = vmul.f32 %v3648, %v3719
        %v3736 = vmul.f32 %v3650, %v3720
        %v3737 = vmul.f32 %v3701, %v3721
        %v3738 = vmul.f32 %v3703, %v3722
        %v3739 = vmul.f32 %v3654, %v3723
        %v3740 = vmul.f32 %v3656, %v3724
        %v3741 = vmul.f32 %v3707, %v3725
        %v3742 = vmul.f32 %v3709, %v3726
        %v3743 = vmul.f32 %v3658, %v3727
        %v3744 = vmul.f32 %v3660, %v3728
        %v3745 = vmul.f32 %v3711, %v3729
        %v3746 = vmul.f32 %v3713, %v3730
        %v3747 = vmul.f32 %v3731, 0.044715
        %v3748 = vmul.f32 %v3732, 0.044715
        %v3749 = vmul.f32 %v3733, 0.044715
        %v3750 = vmul.f32 %v3734, 0.044715
        %v3751 = vmul.f32 %v3735, 0.044715
        %v3752 = vmul.f32 %v3736, 0.044715
        %v3753 = vmul.f32 %v3737, 0.044715
        %v3754 = vmul.f32 %v3738, 0.044715
        %v3755 = vmul.f32 %v3739, 0.044715
        %v3756 = vmul.f32 %v3740, 0.044715
        %v3757 = vmul.f32 %v3741, 0.044715
        %v3758 = vmul.f32 %v3742, 0.044715
        %v3759 = vmul.f32 %v3743, 0.044715
        %v3760 = vmul.f32 %v3744, 0.044715
        %v3761 = vmul.f32 %v3745, 0.044715
        %v3762 = vmul.f32 %v3746, 0.044715
        %v3763 = vadd.f32 %v3644, %v3747
        %v3764 = vadd.f32 %v3646, %v3748
        %v3765 = vadd.f32 %v3697, %v3749
        %v3766 = vadd.f32 %v3699, %v3750
        %v3767 = vadd.f32 %v3648, %v3751
        %v3768 = vadd.f32 %v3650, %v3752
        %v3769 = vadd.f32 %v3701, %v3753
        %v3770 = vadd.f32 %v3703, %v3754
        %v3771 = vadd.f32 %v3654, %v3755
        %v3772 = vadd.f32 %v3656, %v3756
        %v3773 = vadd.f32 %v3707, %v3757
        %v3774 = vadd.f32 %v3709, %v3758
        %v3775 = vadd.f32 %v3658, %v3759
        %v3776 = vadd.f32 %v3660, %v3760
        %v3777 = vadd.f32 %v3711, %v3761
        %v3778 = vadd.f32 %v3713, %v3762
        %v3779 = vmul.f32 %v3763, 0.7978846
        %v3780 = vmul.f32 %v3764, 0.7978846
        %v3781 = vmul.f32 %v3765, 0.7978846
        %v3782 = vmul.f32 %v3766, 0.7978846
        %v3783 = vmul.f32 %v3767, 0.7978846
        %v3784 = vmul.f32 %v3768, 0.7978846
        %v3785 = vmul.f32 %v3769, 0.7978846
        %v3786 = vmul.f32 %v3770, 0.7978846
        %v3787 = vmul.f32 %v3771, 0.7978846
        %v3788 = vmul.f32 %v3772, 0.7978846
        %v3789 = vmul.f32 %v3773, 0.7978846
        %v3790 = vmul.f32 %v3774, 0.7978846
        %v3791 = vmul.f32 %v3775, 0.7978846
        %v3792 = vmul.f32 %v3776, 0.7978846
        %v3793 = vmul.f32 %v3777, 0.7978846
        %v3794 = vmul.f32 %v3778, 0.7978846
        %v3795 = vtanh.pop %v3779
        %v3796 = vtanh.pop %v3780
        %v3797 = vtanh.pop %v3781
        %v3798 = vtanh.pop %v3782
        %v3799 = vtanh.pop %v3783
        %v3800 = vtanh.pop %v3784
        %v3801 = vtanh.pop %v3785
        %v3802 = vtanh.pop %v3786
        %v3803 = vtanh.pop %v3787
        %v3804 = vtanh.pop %v3788
        %v3805 = vtanh.pop %v3789
        %v3806 = vtanh.pop %v3790
        %v3807 = vtanh.pop %v3791
        %v3808 = vtanh.pop %v3792
        %v3809 = vtanh.pop %v3793
        %v3810 = vtanh.pop %v3794
        %v3811 = vadd.f32 %v3795, 1.0
        %v3812 = vadd.f32 %v3796, 1.0
        %v3813 = vadd.f32 %v3797, 1.0
        %v3814 = vadd.f32 %v3798, 1.0
        %v3815 = vadd.f32 %v3799, 1.0
        %v3816 = vadd.f32 %v3800, 1.0
        %v3817 = vadd.f32 %v3801, 1.0
        %v3818 = vadd.f32 %v3802, 1.0
        %v3819 = vadd.f32 %v3803, 1.0
        %v3820 = vadd.f32 %v3804, 1.0
        %v3821 = vadd.f32 %v3805, 1.0
        %v3822 = vadd.f32 %v3806, 1.0
        %v3823 = vadd.f32 %v3807, 1.0
        %v3824 = vadd.f32 %v3808, 1.0
        %v3825 = vadd.f32 %v3809, 1.0
        %v3826 = vadd.f32 %v3810, 1.0
        %v3827 = vmul.f32 %v3811, 0.5
        %v3828 = vmul.f32 %v3812, 0.5
        %v3829 = vmul.f32 %v3813, 0.5
        %v3830 = vmul.f32 %v3814, 0.5
        %v3831 = vmul.f32 %v3815, 0.5
        %v3832 = vmul.f32 %v3816, 0.5
        %v3833 = vmul.f32 %v3817, 0.5
        %v3834 = vmul.f32 %v3818, 0.5
        %v3835 = vmul.f32 %v3819, 0.5
        %v3836 = vmul.f32 %v3820, 0.5
        %v3837 = vmul.f32 %v3821, 0.5
        %v3838 = vmul.f32 %v3822, 0.5
        %v3839 = vmul.f32 %v3823, 0.5
        %v3840 = vmul.f32 %v3824, 0.5
        %v3841 = vmul.f32 %v3825, 0.5
        %v3842 = vmul.f32 %v3826, 0.5
        %v3843 = vmul.f32 %v3644, %v3827
        %v3844 = vmul.f32 %v3646, %v3828
        %v3845 = vmul.f32 %v3697, %v3829
        %v3846 = vmul.f32 %v3699, %v3830
        %v3847 = vmul.f32 %v3648, %v3831
        %v3848 = vmul.f32 %v3650, %v3832
        %v3849 = vmul.f32 %v3701, %v3833
        %v3850 = vmul.f32 %v3703, %v3834
        %v3851 = vmul.f32 %v3654, %v3835
        %v3852 = vmul.f32 %v3656, %v3836
        %v3853 = vmul.f32 %v3707, %v3837
        %v3854 = vmul.f32 %v3709, %v3838
        %v3855 = vmul.f32 %v3658, %v3839
        %v3856 = vmul.f32 %v3660, %v3840
        %v3857 = vmul.f32 %v3711, %v3841
        %v3858 = vmul.f32 %v3713, %v3842
        %v3859 = vpack.c.bf16 %v3847, %v3843
        %v3860 = vpack.c.bf16 %v3848, %v3844
        %v3861 = vpack.c.bf16 %v3849, %v3845
        %v3862 = vpack.c.bf16 %v3850, %v3846
        %v3863 = vpack.c.bf16 %v3855, %v3851
        %v3864 = vpack.c.bf16 %v3856, %v3852
        %v3865 = vpack.c.bf16 %v3857, %v3853
        %v3866 = vpack.c.bf16 %v3858, %v3854
        %v3867 = vld [vmem:[%s651] sm:$0xf]
        %v3868 = vld [vmem:[%s651 + $0x4] sm:$0xf]
        %v3869 = vld [vmem:[%s651 + $0x8] sm:$0xf]
        %v3870 = vld [vmem:[%s651 + $0xc] sm:$0xf]
        %v3871 = vld [vmem:[%s651 + $0x10] sm:$0xf]
        %v3872 = vld [vmem:[%s651 + $0x14] sm:$0xf]
        %v3873 = vld [vmem:[%s651 + $0x18] sm:$0xf]
        %v3874 = vld [vmem:[%s651 + $0x1c] sm:$0xf]
        %v3875 = vld [vmem:[%s651 + $0x20] sm:$0xf]
        %v3876 = vld [vmem:[%s651 + $0x24] sm:$0xf]
        %v3877 = vld [vmem:[%s651 + $0x28] sm:$0xf]
        %v3878 = vld [vmem:[%s651 + $0x2c] sm:$0xf]
        %v3879 = vld [vmem:[%s651 + $0x30] sm:$0xf]
        %v3880 = vld [vmem:[%s651 + $0x34] sm:$0xf]
        %v3881 = vld [vmem:[%s651 + $0x38] sm:$0xf]
        %v3882 = vld [vmem:[%s651 + $0x3c] sm:$0xf]
        %v3883 = vld [vmem:[%s651 + $0x40] sm:$0xf]
        %v3884 = vld [vmem:[%s651 + $0x44] sm:$0xf]
        %v3885 = vld [vmem:[%s651 + $0x48] sm:$0xf]
        %v3886 = vld [vmem:[%s651 + $0x4c] sm:$0xf]
        %v3887 = vld [vmem:[%s651 + $0x50] sm:$0xf]
        %v3888 = vld [vmem:[%s651 + $0x54] sm:$0xf]
        %v3889 = vld [vmem:[%s651 + $0x58] sm:$0xf]
        %v3890 = vld [vmem:[%s651 + $0x5c] sm:$0xf]
        %v3891 = vld [vmem:[%s651 + $0x60] sm:$0xf]
        %v3892 = vld [vmem:[%s651 + $0x64] sm:$0xf]
        %v3893 = vld [vmem:[%s651 + $0x68] sm:$0xf]
        %v3894 = vld [vmem:[%s651 + $0x6c] sm:$0xf]
        %v3895 = vld [vmem:[%s651 + $0x70] sm:$0xf]
        %v3896 = vld [vmem:[%s651 + $0x74] sm:$0xf]
        %v3897 = vld [vmem:[%s651 + $0x78] sm:$0xf]
        %v3898 = vld [vmem:[%s651 + $0x7c] sm:$0xf]
        %v3899 = vld [vmem:[%s651 + $0x80] sm:$0xf]
        %v3900 = vld [vmem:[%s651 + $0x84] sm:$0xf]
        %v3901 = vld [vmem:[%s651 + $0x88] sm:$0xf]
        %v3902 = vld [vmem:[%s651 + $0x8c] sm:$0xf]
        %v3903 = vld [vmem:[%s651 + $0x90] sm:$0xf]
        %v3904 = vld [vmem:[%s651 + $0x94] sm:$0xf]
        %v3905 = vld [vmem:[%s651 + $0x98] sm:$0xf]
        %v3906 = vld [vmem:[%s651 + $0x9c] sm:$0xf]
        %v3907 = vld [vmem:[%s651 + $0xa0] sm:$0xf]
        %v3908 = vld [vmem:[%s651 + $0xa4] sm:$0xf]
        %v3909 = vld [vmem:[%s651 + $0xa8] sm:$0xf]
        %v3910 = vld [vmem:[%s651 + $0xac] sm:$0xf]
        %v3911 = vld [vmem:[%s651 + $0xb0] sm:$0xf]
        %v3912 = vld [vmem:[%s651 + $0xb4] sm:$0xf]
        %v3913 = vld [vmem:[%s651 + $0xb8] sm:$0xf]
        %v3914 = vld [vmem:[%s651 + $0xbc] sm:$0xf]
        %v3915 = vld [vmem:[%s651 + $0xc0] sm:$0xf]
        %v3916 = vld [vmem:[%s651 + $0xc4] sm:$0xf]
        %v3917 = vld [vmem:[%s651 + $0xc8] sm:$0xf]
        %v3918 = vld [vmem:[%s651 + $0xcc] sm:$0xf]
        %v3919 = vld [vmem:[%s651 + $0xd0] sm:$0xf]
        %v3920 = vld [vmem:[%s651 + $0xd4] sm:$0xf]
        %v3921 = vld [vmem:[%s651 + $0xd8] sm:$0xf]
        %v3922 = vld [vmem:[%s651 + $0xdc] sm:$0xf]
        %v3923 = vld [vmem:[%s651 + $0xe0] sm:$0xf]
        %v3924 = vld [vmem:[%s651 + $0xe4] sm:$0xf]
        %v3925 = vld [vmem:[%s651 + $0xe8] sm:$0xf]
        %v3926 = vld [vmem:[%s651 + $0xec] sm:$0xf]
        %v3927 = vld [vmem:[%s651 + $0xf0] sm:$0xf]
        %v3928 = vld [vmem:[%s651 + $0xf4] sm:$0xf]
        %v3929 = vld [vmem:[%s651 + $0xf8] sm:$0xf]
        %v3930 = vld [vmem:[%s651 + $0xfc] sm:$0xf]
        %v3931 = vld [vmem:[%s762] sm:$0x1]
        %v3933 = vlaneseq
        %v3934 = vshrl.u32 %v3933, 7
        %v3935 = vsub.s32 0, %v3934
        %v3936 = vrot.slane %v3931, %v3935
        %v4002 = vunpack.c.l.b16 %v3867
        %v4003 = vunpack.c.l.b16 %v3868
        %v4004 = vunpack.c.l.b16 %v3869
        %v4005 = vunpack.c.l.b16 %v3870
        %v4006 = vunpack.c.l.b16 %v3871
        %v4007 = vunpack.c.l.b16 %v3872
        %v4008 = vunpack.c.l.b16 %v3873
        %v4009 = vunpack.c.l.b16 %v3874
        %v4010 = vunpack.c.l.b16 %v3875
        %v4011 = vunpack.c.l.b16 %v3876
        %v4012 = vunpack.c.l.b16 %v3877
        %v4013 = vunpack.c.l.b16 %v3878
        %v4014 = vunpack.c.l.b16 %v3879
        %v4015 = vunpack.c.l.b16 %v3880
        %v4016 = vunpack.c.l.b16 %v3881
        %v4017 = vunpack.c.l.b16 %v3882
        %v4018 = vunpack.c.l.b16 %v3883
        %v4019 = vunpack.c.l.b16 %v3884
        %v4020 = vunpack.c.l.b16 %v3885
        %v4021 = vunpack.c.l.b16 %v3886
        %v4022 = vunpack.c.l.b16 %v3887
        %v4023 = vunpack.c.l.b16 %v3888
        %v4024 = vunpack.c.l.b16 %v3889
        %v4025 = vunpack.c.l.b16 %v3890
        %v4026 = vunpack.c.l.b16 %v3891
        %v4027 = vunpack.c.l.b16 %v3892
        %v4028 = vunpack.c.l.b16 %v3893
        %v4029 = vunpack.c.l.b16 %v3894
        %v4030 = vunpack.c.l.b16 %v3895
        %v4031 = vunpack.c.l.b16 %v3896
        %v4032 = vunpack.c.l.b16 %v3897
        %v4033 = vunpack.c.l.b16 %v3898
        %v4034 = vunpack.c.l.b16 %v3899
        %v4035 = vunpack.c.l.b16 %v3900
        %v4036 = vunpack.c.l.b16 %v3901
        %v4037 = vunpack.c.l.b16 %v3902
        %v4038 = vunpack.c.l.b16 %v3903
        %v4039 = vunpack.c.l.b16 %v3904
        %v4040 = vunpack.c.l.b16 %v3905
        %v4041 = vunpack.c.l.b16 %v3906
        %v4042 = vunpack.c.l.b16 %v3907
        %v4043 = vunpack.c.l.b16 %v3908
        %v4044 = vunpack.c.l.b16 %v3909
        %v4045 = vunpack.c.l.b16 %v3910
        %v4046 = vunpack.c.l.b16 %v3911
        %v4047 = vunpack.c.l.b16 %v3912
        %v4048 = vunpack.c.l.b16 %v3913
        %v4049 = vunpack.c.l.b16 %v3914
        %v4050 = vunpack.c.l.b16 %v3915
        %v4051 = vunpack.c.l.b16 %v3916
        %v4052 = vunpack.c.l.b16 %v3917
        %v4053 = vunpack.c.l.b16 %v3918
        %v4054 = vunpack.c.l.b16 %v3919
        %v4055 = vunpack.c.l.b16 %v3920
        %v4056 = vunpack.c.l.b16 %v3921
        %v4057 = vunpack.c.l.b16 %v3922
        %v4058 = vunpack.c.l.b16 %v3923
        %v4059 = vunpack.c.l.b16 %v3924
        %v4060 = vunpack.c.l.b16 %v3925
        %v4061 = vunpack.c.l.b16 %v3926
        %v4062 = vunpack.c.l.b16 %v3927
        %v4063 = vunpack.c.l.b16 %v3928
        %v4064 = vunpack.c.l.b16 %v3929
        %v4065 = vunpack.c.l.b16 %v3930
        %v4066 = vpack.c.b16 %v4003, %v4002
        %v4067 = vpack.c.b16 %v4005, %v4004
        %v4068 = vpack.c.b16 %v4007, %v4006
        %v4069 = vpack.c.b16 %v4009, %v4008
        %v4070 = vpack.c.b16 %v4011, %v4010
        %v4071 = vpack.c.b16 %v4013, %v4012
        %v4072 = vpack.c.b16 %v4015, %v4014
        %v4073 = vpack.c.b16 %v4017, %v4016
        %v4074 = vpack.c.b16 %v4019, %v4018
        %v4075 = vpack.c.b16 %v4021, %v4020
        %v4076 = vpack.c.b16 %v4023, %v4022
        %v4077 = vpack.c.b16 %v4025, %v4024
        %v4078 = vpack.c.b16 %v4027, %v4026
        %v4079 = vpack.c.b16 %v4029, %v4028
        %v4080 = vpack.c.b16 %v4031, %v4030
        %v4081 = vpack.c.b16 %v4033, %v4032
        %v4082 = vpack.c.b16 %v4035, %v4034
        %v4083 = vpack.c.b16 %v4037, %v4036
        %v4084 = vpack.c.b16 %v4039, %v4038
        %v4085 = vpack.c.b16 %v4041, %v4040
        %v4086 = vpack.c.b16 %v4043, %v4042
        %v4087 = vpack.c.b16 %v4045, %v4044
        %v4088 = vpack.c.b16 %v4047, %v4046
        %v4089 = vpack.c.b16 %v4049, %v4048
        %v4090 = vpack.c.b16 %v4051, %v4050
        %v4091 = vpack.c.b16 %v4053, %v4052
        %v4092 = vpack.c.b16 %v4055, %v4054
        %v4093 = vpack.c.b16 %v4057, %v4056
        %v4094 = vpack.c.b16 %v4059, %v4058
        %v4095 = vpack.c.b16 %v4061, %v4060
        %v4096 = vpack.c.b16 %v4063, %v4062
        %v4097 = vpack.c.b16 %v4065, %v4064
        %4130 = vmatprep.subr.bf16.mxu0 0
        %4131 = vmatpush1.bf16.msra.mxu0 %v4073
        %4132 = vmatprep.subr.bf16.mxu0 0
        %4133 = vmatpush1.bf16.msra.mxu0 %v4072
        %4134 = vmatprep.subr.bf16.mxu0 0
        %4135 = vmatpush1.bf16.msra.mxu0 %v4071
        %4136 = vmatprep.subr.bf16.mxu0 0
        %4137 = vmatpush1.bf16.msra.mxu0 %v4070
        %4138 = vmatprep.subr.bf16.mxu0 0
        %4139 = vmatpush1.bf16.msra.mxu0 %v4069
        %4140 = vmatprep.subr.bf16.mxu0 0
        %4141 = vmatpush1.bf16.msra.mxu0 %v4068
        %4142 = vmatprep.subr.bf16.mxu0 0
        %4143 = vmatpush1.bf16.msra.mxu0 %v4067
        %4144 = vmatprep.subr.bf16.mxu0 0
        %4145 = vmatpush1.bf16.msra.mxu0 %v4066
        %4146 = vmatprep.subr.bf16.mxu0 0
        %4147 = vmatpush2.bf16.msra.mxu0 %v4081
        %4148 = vmatprep.subr.bf16.mxu0 0
        %4149 = vmatpush2.bf16.msra.mxu0 %v4080
        %4150 = vmatprep.subr.bf16.mxu0 0
        %4151 = vmatpush2.bf16.msra.mxu0 %v4079
        %4152 = vmatprep.subr.bf16.mxu0 0
        %4153 = vmatpush2.bf16.msra.mxu0 %v4078
        %4154 = vmatprep.subr.bf16.mxu0 0
        %4155 = vmatpush2.bf16.msra.mxu0 %v4077
        %4156 = vmatprep.subr.bf16.mxu0 0
        %4157 = vmatpush2.bf16.msra.mxu0 %v4076
        %4158 = vmatprep.subr.bf16.mxu0 0
        %4159 = vmatpush2.bf16.msra.mxu0 %v4075
        %4160 = vmatprep.subr.bf16.mxu0 0
        %4161 = vmatpush2.bf16.msra.mxu0 %v4074
        %4162 = vmatprep.mubr.bf16.mxu0 %v3860
        %4163 = vmatmul.mubr.bf16.gmra.mxu0 %v3859
        %v4164 = vpop.f32.mrf.mxu0
        %v4165 = vadd.f32 %v3936, %v4164
        %v4166 = vpop.f32.mrf.mxu0
        %v4167 = vpop.f32.mrf.mxu0
        %v4168 = vadd.f32 %v3936, %v4167
        %v4169 = vpop.f32.mrf.mxu0
        %4170 = vmatprep.mubr.bf16.mxu0 %v3864
        %4171 = vmatmul.mubr.bf16.gmra.mxu0 %v3863
        %v4172 = vpop.f32.mrf.mxu0
        %v4173 = vadd.f32 %v3936, %v4172
        %v4174 = vpop.f32.mrf.mxu0
        %v4175 = vpop.f32.mrf.mxu0
        %v4176 = vadd.f32 %v3936, %v4175
        %v4177 = vpop.f32.mrf.mxu0
        %4178 = vdwg.mxu0
        %4179 = vmatprep.subr.bf16.mxu0 0
        %4180 = vmatpush1.bf16.msra.mxu0 %v4089
        %4181 = vmatprep.subr.bf16.mxu0 0
        %4182 = vmatpush1.bf16.msra.mxu0 %v4088
        %4183 = vmatprep.subr.bf16.mxu0 0
        %4184 = vmatpush1.bf16.msra.mxu0 %v4087
        %4185 = vmatprep.subr.bf16.mxu0 0
        %4186 = vmatpush1.bf16.msra.mxu0 %v4086
        %4187 = vmatprep.subr.bf16.mxu0 0
        %4188 = vmatpush1.bf16.msra.mxu0 %v4085
        %4189 = vmatprep.subr.bf16.mxu0 0
        %4190 = vmatpush1.bf16.msra.mxu0 %v4084
        %4191 = vmatprep.subr.bf16.mxu0 0
        %4192 = vmatpush1.bf16.msra.mxu0 %v4083
        %4193 = vmatprep.subr.bf16.mxu0 0
        %4194 = vmatpush1.bf16.msra.mxu0 %v4082
        %4195 = vmatprep.subr.bf16.mxu0 0
        %4196 = vmatpush2.bf16.msra.mxu0 %v4097
        %4197 = vmatprep.subr.bf16.mxu0 0
        %4198 = vmatpush2.bf16.msra.mxu0 %v4096
        %4199 = vmatprep.subr.bf16.mxu0 0
        %4200 = vmatpush2.bf16.msra.mxu0 %v4095
        %4201 = vmatprep.subr.bf16.mxu0 0
        %4202 = vmatpush2.bf16.msra.mxu0 %v4094
        %4203 = vmatprep.subr.bf16.mxu0 0
        %4204 = vmatpush2.bf16.msra.mxu0 %v4093
        %4205 = vmatprep.subr.bf16.mxu0 0
        %4206 = vmatpush2.bf16.msra.mxu0 %v4092
        %4207 = vmatprep.subr.bf16.mxu0 0
        %4208 = vmatpush2.bf16.msra.mxu0 %v4091
        %4209 = vmatprep.subr.bf16.mxu0 0
        %4210 = vmatpush2.bf16.msra.mxu0 %v4090
        %4211 = vmatprep.mubr.bf16.mxu0 %v3862
        %4212 = vmatmul.mubr.bf16.gmra.mxu0 %v3861
        %v4213 = vpop.f32.mrf.mxu0
        %v4214 = vadd.f32 %v4165, %v4213
        %v4215 = vpop.f32.mrf.mxu0
        %v4216 = vpop.f32.mrf.mxu0
        %v4217 = vadd.f32 %v4168, %v4216
        %v4218 = vpop.f32.mrf.mxu0
        %4219 = vmatprep.mubr.bf16.mxu0 %v3866
        %4220 = vmatmul.mubr.bf16.gmra.mxu0 %v3865
        %v4221 = vpop.f32.mrf.mxu0
        %v4222 = vadd.f32 %v4173, %v4221
        %v4223 = vpop.f32.mrf.mxu0
        %v4224 = vpop.f32.mrf.mxu0
        %v4225 = vadd.f32 %v4176, %v4224
        %v4226 = vpop.f32.mrf.mxu0
        %4227 = vdwg.mxu0
        %v4228 = vadd.f32 %v3389, %v4214
        %v4229 = vadd.f32 %v3390, %v4217
        %v4230 = vadd.f32 %v3391, %v4222
        %v4231 = vadd.f32 %v3392, %v4225
        %v4232 = vld [vmem:[%s765] sm:$0x1]
        %v4233 = vld [vmem:[%s768] sm:$0x1]
        %4234 = vadd.xlane.f32.xlu0 %v4228
        %v4235 = vpop.xlane.xlu0 %4234
        %4236 = vadd.xlane.f32.xlu0 %v4229
        %v4237 = vpop.xlane.xlu0 %4236
        %4238 = vadd.xlane.f32.xlu0 %v4230
        %v4239 = vpop.xlane.xlu0 %4238
        %4240 = vadd.xlane.f32.xlu0 %v4231
        %v4241 = vpop.xlane.xlu0 %4240
        %v4242 = vmul.f32 %v4235, %v3328
        %v4243 = vmul.f32 %v4237, %v3328
        %v4244 = vmul.f32 %v4239, %v3328
        %v4245 = vmul.f32 %v4241, %v3328
        %v4246 = vmul.f32 %v4228, %v4228
        %v4247 = vmul.f32 %v4229, %v4229
        %v4248 = vmul.f32 %v4230, %v4230
        %v4249 = vmul.f32 %v4231, %v4231
        %4250 = vadd.xlane.f32.xlu0 %v4246
        %v4251 = vpop.xlane.xlu0 %4250
        %4252 = vadd.xlane.f32.xlu0 %v4247
        %v4253 = vpop.xlane.xlu0 %4252
        %4254 = vadd.xlane.f32.xlu0 %v4248
        %v4255 = vpop.xlane.xlu0 %4254
        %4256 = vadd.xlane.f32.xlu0 %v4249
        %v4257 = vpop.xlane.xlu0 %4256
        %v4258 = vmul.f32 %v4251, %v3328
        %v4259 = vmul.f32 %v4253, %v3328
        %v4260 = vmul.f32 %v4255, %v3328
        %v4261 = vmul.f32 %v4257, %v3328
        %v4262 = vmul.f32 %v4242, %v4242
        %v4263 = vmul.f32 %v4243, %v4243
        %v4264 = vmul.f32 %v4244, %v4244
        %v4265 = vmul.f32 %v4245, %v4245
        %v4266 = vsub.f32 %v4258, %v4262
        %v4267 = vsub.f32 %v4259, %v4263
        %v4268 = vsub.f32 %v4260, %v4264
        %v4269 = vsub.f32 %v4261, %v4265
        %v4270 = vsub.f32 %v4228, %v4242
        %v4271 = vsub.f32 %v4229, %v4243
        %v4272 = vsub.f32 %v4230, %v4244
        %v4273 = vsub.f32 %v4231, %v4245
        %v4274 = vadd.f32 %v4266, 1e-12
        %v4275 = vadd.f32 %v4267, 1e-12
        %v4276 = vadd.f32 %v4268, 1e-12
        %v4277 = vadd.f32 %v4269, 1e-12
        %v4278 = vrsqrt.pop %v4274
        %v4279 = vrsqrt.pop %v4275
        %v4280 = vrsqrt.pop %v4276
        %v4281 = vrsqrt.pop %v4277
        %v4282 = vmul.f32 %v4270, %v4278
        %v4283 = vmul.f32 %v4271, %v4279
        %v4284 = vmul.f32 %v4272, %v4280
        %v4285 = vmul.f32 %v4273, %v4281
        %v4287 = vlaneseq
        %v4288 = vshrl.u32 %v4287, 7
        %v4289 = vsub.s32 0, %v4288
        %v4290 = vrot.slane %v4232, %v4289
        %v4292 = vmul.f32 %v4282, %v4290
        %v4293 = vmul.f32 %v4283, %v4290
        %v4294 = vmul.f32 %v4284, %v4290
        %v4295 = vmul.f32 %v4285, %v4290
        %v4297 = vlaneseq
        %v4298 = vshrl.u32 %v4297, 7
        %v4299 = vsub.s32 0, %v4298
        %v4300 = vrot.slane %v4233, %v4299
        %v4302 = vadd.f32 %v4292, %v4300
        %v4303 = vadd.f32 %v4293, %v4300
        %v4304 = vadd.f32 %v4294, %v4300
        %v4305 = vadd.f32 %v4295, %v4300
        %4306 = vst [vmem:[#allocation2] sm:$0xff] %v4302
        %4307 = vst [vmem:[#allocation2 + $0x8] sm:$0xff] %v4303
        %4308 = vst [vmem:[#allocation2 + $0x10] sm:$0xff] %v4304
        %4309 = vst [vmem:[#allocation2 + $0x18] sm:$0xff] %v4305
        %s4310 = sadd.s32 %s34, 1
        %v4315 = vrot.slane %v4303, 7
        %vm4316 = vcmask 1041409
        %v4317 = vsel %vm4316, %v4315, %v4302
        %v4318 = vrot.slane %v4304, 6
        %vm4319 = vcmask 1042434
        %v4320 = vsel %vm4319, %v4318, %v4317
        %v4321 = vrot.slane %v4305, 5
        %vm4322 = vcmask 1043459
        %v4323 = vsel %vm4322, %v4321, %v4320
        %s4325 = smul.u32 %s4310, 4
        %s4326 = scalar_lea.vmem %s17, %s4325
        %4327 = vst [vmem:[%s4326] sm:$0xf] %v4323
        // Predicated region
        $region105: #{forward.1} parent=87 // pred_check
          %p4328 = pneg %p464
        $region106: #{forward.1} parent=87 // pred_check_branch
          %4330 = sbr.rel (%p4328) target = $region108
        $region107: #{forward.1} parent=87 // pred_region
          _
        $region108: #{forward.1} parent=87 // pred_fallthru
          _
        // Predicated region
        $region109: #{forward.1} parent=87 // pred_check
          %p4331 = pneg %p464
        $region110: #{forward.1} parent=87 // pred_check_branch
          %4333 = sbr.rel (%p4331) target = $region112
        $region111: #{forward.1} parent=87 // pred_region
          _
        $region112: #{forward.1} parent=87 // pred_fallthru
          _
      $region88: #{forward.1} parent=5 // pred_fallthru
        _
      %p4334 = scmp.le.s32.totalorder 2, %s29
      // Predicated region
      $region113: #{forward.1} parent=5 // pred_check
        %p4335 = pneg %p4334
      $region114: #{forward.1} parent=5 // pred_check_branch
        %4337 = sbr.rel (%p4335) target = $region116
      $region115: #{forward.1} parent=5 // pred_region
        %s4338 = ssub.s32 %s29, 2
      $region116: #{forward.1} parent=5 // pred_fallthru
        _
    $region6: #{forward.1} parent=1 // loop_footer
      %s33 = sadd.s32 1, %s29
    $region7: #{forward.1} parent=1 // loop_footer_branch
      %28 = sbr.rel target = $region3
    $region8: #{forward.1} parent=1 // loop_exit
      _
    %4339 = vsyncpa [#allocation4], 1
    %s4340 = scalar_lea.sflag [#allocation4], 1
    %4341 = vsyncpa %s4340, 1
    %4342 = vsyncpa [#allocation6], 1
    %s4343 = scalar_lea.sflag [#allocation6], 1
    %4344 = vsyncpa %s4343, 1

</llo_original>
